<compile_context>
chip_gen: v7x
topology: tpu7x:2x2x1
jax: 0.10.0
libtpu: 0.0.40
codegen_flags: <defaults>
</compile_context>

<pallas_src>
import jax
import jax.numpy as jnp
from jax import lax
from jax.experimental import pallas as pl
from jax.experimental.pallas import tpu as pltpu


# ---------------------------------------------------------------------------
# Fused conv + bias + ReLU + 2x2 max-pool kernel.
#
# The wrapper builds an im2col patch tensor P of shape (N, 4, M, K) where
#   q = 2*dh + dw            position inside each 2x2 pool window,
#   m = pi*Qo + pj           pooled output position (row-major),
#   k = (kh*KW + kw)*C + ci  folded conv contraction index,
# so that  conv(x)[n, 2*pi+dh, 2*pj+dw, co] = P[n, q, m, :] @ Wmat[:, co].
# The kernel does 4 large matmuls (one per q), takes their elementwise max
# (== 2x2 max-pool; bias/ReLU commute with the max), adds bias, applies ReLU.
# ---------------------------------------------------------------------------
def _conv_pool_kernel(p_ref, w_ref, b_ref, o_ref):
    # p_ref: (4, M, K); w_ref: (K, Cout); b_ref: (1, Cout); o_ref: (M, Cout)
    w = w_ref[...]
    acc = jnp.dot(p_ref[0], w, preferred_element_type=jnp.float32)
    for q in range(1, 4):
        acc = jnp.maximum(
            acc, jnp.dot(p_ref[q], w, preferred_element_type=jnp.float32))
    o_ref[...] = jnp.maximum(acc + b_ref[...], 0.0)


def conv_bias_relu_pool(patches, w_mat, bias):
    N, _, M, K = patches.shape
    Cout = w_mat.shape[1]
    return pl.pallas_call(
        _conv_pool_kernel,
        out_shape=jax.ShapeDtypeStruct((N, M, Cout), jnp.float32),
        grid=(N,),
        in_specs=[
            pl.BlockSpec((None, 4, M, K), lambda n: (n, 0, 0, 0)),
            pl.BlockSpec((K, Cout), lambda n: (0, 0)),
            pl.BlockSpec((1, Cout), lambda n: (0, 0)),
        ],
        out_specs=pl.BlockSpec((None, M, Cout), lambda n: (n, 0, 0)),
        compiler_params=pltpu.CompilerParams(
            dimension_semantics=("parallel",)),
    )(patches, w_mat, bias)


# ---------------------------------------------------------------------------
# Final Linear (with bias): one whole-operand matmul in VMEM (weights are
# pre-transposed/pre-permuted once, so no per-call layout work).
# ---------------------------------------------------------------------------
def _fc_kernel(x_ref, w_ref, b_ref, o_ref):
    o_ref[...] = (jnp.dot(x_ref[...], w_ref[...],
                          preferred_element_type=jnp.float32) + b_ref[...])


def fc(x, w_t, b):
    N = x.shape[0]
    F = w_t.shape[1]
    return pl.pallas_call(
        _fc_kernel,
        out_shape=jax.ShapeDtypeStruct((N, F), jnp.float32),
    )(x, w_t, b)


# ---------------------------------------------------------------------------
# Wrapper-side glue (cheap; operates only on the tiny pre-conv tensors):
# im2col with the 2x2-pool window factored out as a leading axis of 4.
# ---------------------------------------------------------------------------
def im2col_pool4(x_nhwc, KH, KW, pad):
    """x_nhwc: (N, H, W, C) -> patches (N, 4, (H//2)*(W//2), KH*KW*C)."""
    N, H, W, C = x_nhwc.shape
    Po, Qo = H // 2, W // 2
    xp = jnp.pad(x_nhwc, ((0, 0), (pad, pad), (pad, pad), (0, 0)))
    taps = [xp[:, kh:kh + H, kw:kw + W, :]
            for kh in range(KH) for kw in range(KW)]
    t = jnp.concatenate(taps, axis=-1)              # (N, H, W, KH*KW*C)
    t = t.reshape(N, Po, 2, Qo, 2, KH * KW * C)
    t = t.transpose(0, 2, 4, 1, 3, 5)               # (N, dh, dw, pi, pj, k)
    return t.reshape(N, 4, Po * Qo, KH * KW * C)


# ---------------------------------------------------------------------------
# One-time parameter preparation (hoisted out of the per-call forward).
# ---------------------------------------------------------------------------
def prepare_params(torch_params):
    w1, b1, w2, b2, wo, bo = torch_params
    # Conv weights (Cout, Cin, KH, KW) -> (KH*KW*Cin, Cout), matching im2col k.
    w1m = jnp.transpose(w1, (2, 3, 1, 0)).reshape(7 * 7 * 1, 32)
    w2m = jnp.transpose(w2, (2, 3, 1, 0)).reshape(3 * 3 * 32, 64)
    # FC weight: permute columns from NCHW flatten order (c,h,w) to the NHWC
    # flatten order (h,w,c) produced by the conv kernels, and pre-transpose.
    wfc = jnp.transpose(wo.reshape(62, 64, 7, 7), (2, 3, 1, 0)).reshape(3136, 62)
    return (w1m, b1.reshape(1, 32), w2m, b2.reshape(1, 64),
            wfc, bo.reshape(1, 62))


# ---------------------------------------------------------------------------
# Full forward pass.
# ---------------------------------------------------------------------------
def cnn_femnist_forward(x, prepared):
    w1m, b1, w2m, b2, wfc, bfc = prepared
    x = x.reshape(-1, 1, 28, 28)                  # same as the torch forward
    N = x.shape[0]
    x = jnp.transpose(x, (0, 2, 3, 1))            # NCHW -> NHWC: (N,28,28,1)
    p1 = im2col_pool4(x, 7, 7, 3)                 # (N, 4, 196, 49)
    y1 = conv_bias_relu_pool(p1, w1m, b1)         # (N, 196, 32) == (N,14,14,32)
    p2 = im2col_pool4(y1.reshape(N, 14, 14, 32), 3, 3, 1)   # (N, 4, 49, 288)
    y2 = conv_bias_relu_pool(p2, w2m, b2)         # (N, 49, 64) == (N,7,7,64)
    flat = y2.reshape(N, 7 * 7 * 64)              # (h,w,c) order -> matches wfc
    return fc(flat, wfc, bfc)                     # (N, 62)


# Pure-JAX reference (verification only).
def reference_forward(x, torch_params):
    w1, b1, w2, b2, wo, bo = torch_params
    hp = lax.Precision.HIGHEST
    x = x.reshape(-1, 1, 28, 28)

    def conv(z, w, b, pad):
        y = lax.conv_general_dilated(
            z, w, (1, 1), ((pad, pad), (pad, pad)),
            dimension_numbers=("NCHW", "OIHW", "NCHW"), precision=hp)
        return y + b.reshape(1, -1, 1, 1)

    def pool(z):
        return lax.reduce_window(
            z, jnp.array(-jnp.inf, z.dtype), lax.max,
            (1, 1, 2, 2), (1, 1, 2, 2), "VALID")

    y = pool(jnp.maximum(conv(x, w1, b1, 3), 0.0))
    y = pool(jnp.maximum(conv(y, w2, b2, 1), 0.0))
    y = y.reshape(y.shape[0], -1)
    return jnp.dot(y, wo.T, precision=hp) + bo


if __name__ == "__main__":
    key = jax.random.PRNGKey(0)
    ks = jax.random.split(key, 7)

    def init(k, shape, fan_in):
        return jax.random.normal(k, shape, jnp.float32) * (1.0 / fan_in ** 0.5)

    torch_params = (
        init(ks[0], (32, 1, 7, 7), 7 * 7 * 1),       # conv1.weight
        init(ks[1], (32,), 7 * 7 * 1),               # conv1.bias
        init(ks[2], (64, 32, 3, 3), 3 * 3 * 32),     # conv2.weight
        init(ks[3], (64,), 3 * 3 * 32),              # conv2.bias
        init(ks[4], (62, 64 * 7 * 7), 64 * 7 * 7),   # out.weight
        init(ks[5], (62,), 64 * 7 * 7),              # out.bias
    )
    x = jax.random.normal(ks[6], (2, 1, 28, 28), jnp.float32)

    prepared = prepare_params(torch_params)          # one-time layout work
    fwd = jax.jit(cnn_femnist_forward)
    out = jax.block_until_ready(fwd(x, prepared))
    assert out.shape == (2, 62), out.shape

    ref = reference_forward(x, torch_params)
    err = float(jnp.max(jnp.abs(out - ref)))
    assert err < 2e-3, f"max abs diff vs reference too large: {err}"
    print("KERNEL_OK")
</pallas_src>

<mosaic_0001>
module attributes {stable_mosaic.version = 11 : i64} {
  func.func @_conv_pool_kernel(%arg0: i32, %arg1: memref<1x4x196x49xf32, #tpu.memory_space<vmem>>, %arg2: memref<49x32xf32, #tpu.memory_space<vmem>>, %arg3: memref<1x32xf32, #tpu.memory_space<vmem>>, %arg4: memref<1x196x32xf32, #tpu.memory_space<vmem>>) attributes {dimension_semantics = [#tpu.dimension_semantics<parallel>], iteration_bounds = array<i64: 2>, scalar_prefetch = 0 : i64, scratch_operands = 0 : i64, tpu.core_type = #tpu.core_type<tc>, window_params = [{transform_indices = @transform_0, window_bounds = array<i64: 1, 4, 196, 49>}, {pipeline_mode = #tpu.pipeline_mode<synchronous>, transform_indices = @transform_1, window_bounds = array<i64: 49, 32>}, {pipeline_mode = #tpu.pipeline_mode<synchronous>, transform_indices = @transform_2, window_bounds = array<i64: 1, 32>}, {transform_indices = @transform_3, window_bounds = array<i64: 1, 196, 32>}]} {
    %c0 = arith.constant 0 : index
    %c0_0 = arith.constant 0 : index
    %0 = vector.load %arg2[%c0, %c0_0] : memref<49x32xf32, #tpu.memory_space<vmem>>, vector<49x32xf32>
    %c0_1 = arith.constant 0 : index
    %c0_2 = arith.constant 0 : index
    %c0_3 = arith.constant 0 : index
    %c0_4 = arith.constant 0 : index
    %1 = vector.load %arg1[%c0_1, %c0_2, %c0_3, %c0_4] : memref<1x4x196x49xf32, #tpu.memory_space<vmem>>, vector<1x1x196x49xf32>
    %2 = vector.shape_cast %1 : vector<1x1x196x49xf32> to vector<196x49xf32>
    %cst = arith.constant dense<0.000000e+00> : vector<196x32xf32>
    %3 = tpu.matmul %2, %0, %cst {dimension_numbers = #tpu.dot_dimension_numbers<[1], [0], [0], [1], [0, 0, 1, 1], [], []>} : vector<196x49xf32>, vector<49x32xf32>, vector<196x32xf32> -> vector<196x32xf32>
    %c0_5 = arith.constant 0 : index
    %c1 = arith.constant 1 : index
    %c0_6 = arith.constant 0 : index
    %c0_7 = arith.constant 0 : index
    %4 = vector.load %arg1[%c0_5, %c1, %c0_6, %c0_7] : memref<1x4x196x49xf32, #tpu.memory_space<vmem>>, vector<1x1x196x49xf32>
    %5 = vector.shape_cast %4 : vector<1x1x196x49xf32> to vector<196x49xf32>
    %cst_8 = arith.constant dense<0.000000e+00> : vector<196x32xf32>
    %6 = tpu.matmul %5, %0, %cst_8 {dimension_numbers = #tpu.dot_dimension_numbers<[1], [0], [0], [1], [0, 0, 1, 1], [], []>} : vector<196x49xf32>, vector<49x32xf32>, vector<196x32xf32> -> vector<196x32xf32>
    %7 = arith.maximumf %3, %6 : vector<196x32xf32>
    %c0_9 = arith.constant 0 : index
    %c2 = arith.constant 2 : index
    %c0_10 = arith.constant 0 : index
    %c0_11 = arith.constant 0 : index
    %8 = vector.load %arg1[%c0_9, %c2, %c0_10, %c0_11] : memref<1x4x196x49xf32, #tpu.memory_space<vmem>>, vector<1x1x196x49xf32>
    %9 = vector.shape_cast %8 : vector<1x1x196x49xf32> to vector<196x49xf32>
    %cst_12 = arith.constant dense<0.000000e+00> : vector<196x32xf32>
    %10 = tpu.matmul %9, %0, %cst_12 {dimension_numbers = #tpu.dot_dimension_numbers<[1], [0], [0], [1], [0, 0, 1, 1], [], []>} : vector<196x49xf32>, vector<49x32xf32>, vector<196x32xf32> -> vector<196x32xf32>
    %11 = arith.maximumf %7, %10 : vector<196x32xf32>
    %c0_13 = arith.constant 0 : index
    %c3 = arith.constant 3 : index
    %c0_14 = arith.constant 0 : index
    %c0_15 = arith.constant 0 : index
    %12 = vector.load %arg1[%c0_13, %c3, %c0_14, %c0_15] : memref<1x4x196x49xf32, #tpu.memory_space<vmem>>, vector<1x1x196x49xf32>
    %13 = vector.shape_cast %12 : vector<1x1x196x49xf32> to vector<196x49xf32>
    %cst_16 = arith.constant dense<0.000000e+00> : vector<196x32xf32>
    %14 = tpu.matmul %13, %0, %cst_16 {dimension_numbers = #tpu.dot_dimension_numbers<[1], [0], [0], [1], [0, 0, 1, 1], [], []>} : vector<196x49xf32>, vector<49x32xf32>, vector<196x32xf32> -> vector<196x32xf32>
    %15 = arith.maximumf %11, %14 : vector<196x32xf32>
    %c0_17 = arith.constant 0 : index
    %c0_18 = arith.constant 0 : index
    %16 = vector.load %arg3[%c0_17, %c0_18] : memref<1x32xf32, #tpu.memory_space<vmem>>, vector<1x32xf32>
    %17 = vector.broadcast %16 : vector<1x32xf32> to vector<196x32xf32>
    %18 = arith.addf %15, %17 : vector<196x32xf32>
    %cst_19 = arith.constant 0.000000e+00 : f32
    %19 = vector.broadcast %cst_19 : f32 to vector<196x32xf32>
    %20 = arith.maximumf %18, %19 : vector<196x32xf32>
    %c0_20 = arith.constant 0 : index
    %c0_21 = arith.constant 0 : index
    %c0_22 = arith.constant 0 : index
    %21 = vector.load %arg4[%c0_20, %c0_21, %c0_22] : memref<1x196x32xf32, #tpu.memory_space<vmem>>, vector<1x196x32xf32>
    %22 = vector.shape_cast %21 : vector<1x196x32xf32> to vector<196x32xf32>
    %23 = vector.shape_cast %20 : vector<196x32xf32> to vector<1x196x32xf32>
    tpu.vector_store %arg4[%c0_20, %c0_21, %c0_22], %23 {strides = array<i32>} : memref<1x196x32xf32, #tpu.memory_space<vmem>>, vector<1x196x32xf32>,
    return
  }
  func.func @transform_0(%arg0: i32) -> (i32, i32, i32, i32) {
    %c0_i32 = arith.constant 0 : i32
    %c0_i32_0 = arith.constant 0 : i32
    %c0_i32_1 = arith.constant 0 : i32
    %c0_i32_2 = arith.constant 0 : i32
    return %arg0, %c0_i32, %c0_i32_0, %c0_i32_1 : i32, i32, i32, i32
  }
  func.func @transform_1(%arg0: i32) -> (i32, i32) {
    %c0_i32 = arith.constant 0 : i32
    %c0_i32_0 = arith.constant 0 : i32
    %c0_i32_1 = arith.constant 0 : i32
    return %c0_i32, %c0_i32_0 : i32, i32
  }
  func.func @transform_2(%arg0: i32) -> (i32, i32) {
    %c0_i32 = arith.constant 0 : i32
    %c0_i32_0 = arith.constant 0 : i32
    %c0_i32_1 = arith.constant 0 : i32
    return %c0_i32, %c0_i32_0 : i32, i32
  }
  func.func @transform_3(%arg0: i32) -> (i32, i32, i32) {
    %c0_i32 = arith.constant 0 : i32
    %c0_i32_0 = arith.constant 0 : i32
    %c0_i32_1 = arith.constant 0 : i32
    return %arg0, %c0_i32, %c0_i32_0 : i32, i32, i32
  }
}

module attributes {stable_mosaic.version = 11 : i64} {
  func.func @_conv_pool_kernel(%arg0: i32, %arg1: memref<1x4x49x288xf32, #tpu.memory_space<vmem>>, %arg2: memref<288x64xf32, #tpu.memory_space<vmem>>, %arg3: memref<1x64xf32, #tpu.memory_space<vmem>>, %arg4: memref<1x49x64xf32, #tpu.memory_space<vmem>>) attributes {dimension_semantics = [#tpu.dimension_semantics<parallel>], iteration_bounds = array<i64: 2>, scalar_prefetch = 0 : i64, scratch_operands = 0 : i64, tpu.core_type = #tpu.core_type<tc>, window_params = [{transform_indices = @transform_0, window_bounds = array<i64: 1, 4, 49, 288>}, {pipeline_mode = #tpu.pipeline_mode<synchronous>, transform_indices = @transform_1, window_bounds = array<i64: 288, 64>}, {pipeline_mode = #tpu.pipeline_mode<synchronous>, transform_indices = @transform_2, window_bounds = array<i64: 1, 64>}, {transform_indices = @transform_3, window_bounds = array<i64: 1, 49, 64>}]} {
    %c0 = arith.constant 0 : index
    %c0_0 = arith.constant 0 : index
    %0 = vector.load %arg2[%c0, %c0_0] : memref<288x64xf32, #tpu.memory_space<vmem>>, vector<288x64xf32>
    %c0_1 = arith.constant 0 : index
    %c0_2 = arith.constant 0 : index
    %c0_3 = arith.constant 0 : index
    %c0_4 = arith.constant 0 : index
    %1 = vector.load %arg1[%c0_1, %c0_2, %c0_3, %c0_4] : memref<1x4x49x288xf32, #tpu.memory_space<vmem>>, vector<1x1x49x288xf32>
    %2 = vector.shape_cast %1 : vector<1x1x49x288xf32> to vector<49x288xf32>
    %cst = arith.constant dense<0.000000e+00> : vector<49x64xf32>
    %3 = tpu.matmul %2, %0, %cst {dimension_numbers = #tpu.dot_dimension_numbers<[1], [0], [0], [1], [0, 0, 1, 1], [], []>} : vector<49x288xf32>, vector<288x64xf32>, vector<49x64xf32> -> vector<49x64xf32>
    %c0_5 = arith.constant 0 : index
    %c1 = arith.constant 1 : index
    %c0_6 = arith.constant 0 : index
    %c0_7 = arith.constant 0 : index
    %4 = vector.load %arg1[%c0_5, %c1, %c0_6, %c0_7] : memref<1x4x49x288xf32, #tpu.memory_space<vmem>>, vector<1x1x49x288xf32>
    %5 = vector.shape_cast %4 : vector<1x1x49x288xf32> to vector<49x288xf32>
    %cst_8 = arith.constant dense<0.000000e+00> : vector<49x64xf32>
    %6 = tpu.matmul %5, %0, %cst_8 {dimension_numbers = #tpu.dot_dimension_numbers<[1], [0], [0], [1], [0, 0, 1, 1], [], []>} : vector<49x288xf32>, vector<288x64xf32>, vector<49x64xf32> -> vector<49x64xf32>
    %7 = arith.maximumf %3, %6 : vector<49x64xf32>
    %c0_9 = arith.constant 0 : index
    %c2 = arith.constant 2 : index
    %c0_10 = arith.constant 0 : index
    %c0_11 = arith.constant 0 : index
    %8 = vector.load %arg1[%c0_9, %c2, %c0_10, %c0_11] : memref<1x4x49x288xf32, #tpu.memory_space<vmem>>, vector<1x1x49x288xf32>
    %9 = vector.shape_cast %8 : vector<1x1x49x288xf32> to vector<49x288xf32>
    %cst_12 = arith.constant dense<0.000000e+00> : vector<49x64xf32>
    %10 = tpu.matmul %9, %0, %cst_12 {dimension_numbers = #tpu.dot_dimension_numbers<[1], [0], [0], [1], [0, 0, 1, 1], [], []>} : vector<49x288xf32>, vector<288x64xf32>, vector<49x64xf32> -> vector<49x64xf32>
    %11 = arith.maximumf %7, %10 : vector<49x64xf32>
    %c0_13 = arith.constant 0 : index
    %c3 = arith.constant 3 : index
    %c0_14 = arith.constant 0 : index
    %c0_15 = arith.constant 0 : index
    %12 = vector.load %arg1[%c0_13, %c3, %c0_14, %c0_15] : memref<1x4x49x288xf32, #tpu.memory_space<vmem>>, vector<1x1x49x288xf32>
    %13 = vector.shape_cast %12 : vector<1x1x49x288xf32> to vector<49x288xf32>
    %cst_16 = arith.constant dense<0.000000e+00> : vector<49x64xf32>
    %14 = tpu.matmul %13, %0, %cst_16 {dimension_numbers = #tpu.dot_dimension_numbers<[1], [0], [0], [1], [0, 0, 1, 1], [], []>} : vector<49x288xf32>, vector<288x64xf32>, vector<49x64xf32> -> vector<49x64xf32>
    %15 = arith.maximumf %11, %14 : vector<49x64xf32>
    %c0_17 = arith.constant 0 : index
    %c0_18 = arith.constant 0 : index
    %16 = vector.load %arg3[%c0_17, %c0_18] : memref<1x64xf32, #tpu.memory_space<vmem>>, vector<1x64xf32>
    %17 = vector.broadcast %16 : vector<1x64xf32> to vector<49x64xf32>
    %18 = arith.addf %15, %17 : vector<49x64xf32>
    %cst_19 = arith.constant 0.000000e+00 : f32
    %19 = vector.broadcast %cst_19 : f32 to vector<49x64xf32>
    %20 = arith.maximumf %18, %19 : vector<49x64xf32>
    %c0_20 = arith.constant 0 : index
    %c0_21 = arith.constant 0 : index
    %c0_22 = arith.constant 0 : index
    %21 = vector.load %arg4[%c0_20, %c0_21, %c0_22] : memref<1x49x64xf32, #tpu.memory_space<vmem>>, vector<1x49x64xf32>
    %22 = vector.shape_cast %21 : vector<1x49x64xf32> to vector<49x64xf32>
    %23 = vector.shape_cast %20 : vector<49x64xf32> to vector<1x49x64xf32>
    tpu.vector_store %arg4[%c0_20, %c0_21, %c0_22], %23 {strides = array<i32>} : memref<1x49x64xf32, #tpu.memory_space<vmem>>, vector<1x49x64xf32>,
    return
  }
  func.func @transform_0(%arg0: i32) -> (i32, i32, i32, i32) {
    %c0_i32 = arith.constant 0 : i32
    %c0_i32_0 = arith.constant 0 : i32
    %c0_i32_1 = arith.constant 0 : i32
    %c0_i32_2 = arith.constant 0 : i32
    return %arg0, %c0_i32, %c0_i32_0, %c0_i32_1 : i32, i32, i32, i32
  }
  func.func @transform_1(%arg0: i32) -> (i32, i32) {
    %c0_i32 = arith.constant 0 : i32
    %c0_i32_0 = arith.constant 0 : i32
    %c0_i32_1 = arith.constant 0 : i32
    return %c0_i32, %c0_i32_0 : i32, i32
  }
  func.func @transform_2(%arg0: i32) -> (i32, i32) {
    %c0_i32 = arith.constant 0 : i32
    %c0_i32_0 = arith.constant 0 : i32
    %c0_i32_1 = arith.constant 0 : i32
    return %c0_i32, %c0_i32_0 : i32, i32
  }
  func.func @transform_3(%arg0: i32) -> (i32, i32, i32) {
    %c0_i32 = arith.constant 0 : i32
    %c0_i32_0 = arith.constant 0 : i32
    %c0_i32_1 = arith.constant 0 : i32
    return %arg0, %c0_i32, %c0_i32_0 : i32, i32, i32
  }
}

module attributes {stable_mosaic.version = 11 : i64} {
  func.func @_fc_kernel(%arg0: memref<2x3136xf32, #tpu.memory_space<vmem>>, %arg1: memref<3136x62xf32, #tpu.memory_space<vmem>>, %arg2: memref<1x62xf32, #tpu.memory_space<vmem>>, %arg3: memref<2x62xf32, #tpu.memory_space<vmem>>) attributes {dimension_semantics = [], scalar_prefetch = 0 : i64, scratch_operands = 0 : i64, tpu.core_type = #tpu.core_type<tc>} {
    %c0 = arith.constant 0 : index
    %c0_0 = arith.constant 0 : index
    %0 = vector.load %arg0[%c0, %c0_0] : memref<2x3136xf32, #tpu.memory_space<vmem>>, vector<2x3136xf32>
    %c0_1 = arith.constant 0 : index
    %c0_2 = arith.constant 0 : index
    %1 = vector.load %arg1[%c0_1, %c0_2] : memref<3136x62xf32, #tpu.memory_space<vmem>>, vector<3136x62xf32>
    %cst = arith.constant dense<0.000000e+00> : vector<2x62xf32>
    %2 = tpu.matmul %0, %1, %cst {dimension_numbers = #tpu.dot_dimension_numbers<[1], [0], [0], [1], [0, 0, 1, 1], [], []>} : vector<2x3136xf32>, vector<3136x62xf32>, vector<2x62xf32> -> vector<2x62xf32>
    %c0_3 = arith.constant 0 : index
    %c0_4 = arith.constant 0 : index
    %3 = vector.load %arg2[%c0_3, %c0_4] : memref<1x62xf32, #tpu.memory_space<vmem>>, vector<1x62xf32>
    %4 = vector.broadcast %3 : vector<1x62xf32> to vector<2x62xf32>
    %5 = arith.addf %2, %4 : vector<2x62xf32>
    %c0_5 = arith.constant 0 : index
    %c0_6 = arith.constant 0 : index
    %6 = vector.load %arg3[%c0_5, %c0_6] : memref<2x62xf32, #tpu.memory_space<vmem>>, vector<2x62xf32>
    tpu.vector_store %arg3[%c0_5, %c0_6], %5 {strides = array<i32>} : memref<2x62xf32, #tpu.memory_space<vmem>>, vector<2x62xf32>,
    return
  }
}

</mosaic_0001>

<llo_original>
// kernel: cnn_femnist_forward.3
$region0: #{cnn_femnist_forward.3}
  #allocation0 [shape = 'u32[]', space=smem, size = 0x4, offset = 0x4, fixed_abs, tag = 'smem constant byte address 0x4 - core index']
  #allocation1 [shape = 'u32[144,128]{1,0:T(1,128)}', space=vmem, size = 0x12000, scoped, tag = 'internal scratch']
  %s0 = inlined_call_operand.vmem [shape: f32[2,4,196,49], index: 0, kind: input, shape index: {}]
  %s1 = inlined_call_operand.vmem [shape: f32[49,32], index: 1, kind: input, shape index: {}]
  %s2 = inlined_call_operand.vmem [shape: f32[1,32], index: 2, kind: input, shape index: {}]
  %s3 = inlined_call_operand.vmem [shape: f32[2,196,32], index: 3, kind: output, shape index: {}]
  %s4 = sld [smem:[#allocation0]]
  $region45: #{cnn_femnist_forward.3} parent=0
    _
  %s6 = ssub.s32 1, %s4
  %s7 = scalar_select 0, %s6, %s4
  loop: start=0, step=1, limit=4
  $region2: #{cnn_femnist_forward.3} parent=0 // loop_pre_header
    _
  $region3: #{cnn_femnist_forward.3} parent=0 // loop_header
    %s9 = sphi 0, %s13
    %p10 = scmp.ge.s32.totalorder %s9, 4
    %s19 = sphi 0, %s21
    %s22 = sphi 0, %s19
    %s23 = sphi 0, %s22
    %s39 = sphi 0, %s23
    %s43 = sphi 0, %s43
    %s45 = sphi 0, %s43
    %s46 = sphi 0, %s45
    %s60 = sphi 0, %s46
    %s64 = sphi 0, %s64
    %s66 = sphi 0, %s64
    %s67 = sphi 0, %s66
    %s81 = sphi 0, %s67
    %s87 = sphi 0, %s89
    %s90 = sphi 0, %s87
    %s91 = sphi 0, %s90
    %s107 = sphi 0, %s91
  $region4: #{cnn_femnist_forward.3} parent=0 // loop_header_branch
    %12 = sbr.rel (%p10) target = $region8
  $region5: #{cnn_femnist_forward.3} parent=0 // loop_body
    %s14 = ssub.s32 %s9, 1
    %s15 = ssub.s32 %s9, 2
    %s16 = sadd.s32 %s9, 1
    %s17 = ssub.s32 %s9, %s16
    %p18 = scmp.eq.s32.totalorder %s17, 0
    %s20 = sadd.s32 %s19, 1
    %s21 = scalar_select %p18, %s19, %s20
    %p24 = pneg %p18
    %p25 = scmp.eq.s32.totalorder %s9, 1
    %p26 = por %p24, %p25
    %p27 = scmp.ne.s32.totalorder %s19, %s22
    %p28 = scmp.eq.s32.totalorder %s9, 0
    %p29 = por %p27, %p28
    %p30 = scmp.ne.s32.totalorder %s19, %s22
    %p31 = scmp.eq.s32.totalorder %s14, 1
    %p32 = por %p30, %p31
    %p33 = scmp.ne.s32.totalorder %s22, %s23
    %p34 = scmp.eq.s32.totalorder %s14, 0
    %p35 = por %p33, %p34
    %p36 = scmp.ne.s32.totalorder %s22, %s23
    %p37 = scmp.eq.s32.totalorder %s15, 1
    %p38 = por %p36, %p37
    %p40 = scmp.ne.s32.totalorder %s23, %s39
    %p41 = scmp.eq.s32.totalorder %s15, 0
    %p42 = por %p40, %p41
    %s44 = sadd.s32 %s43, 1
    %p47 = scmp.eq.s32.totalorder %s9, 1
    %p48 = scmp.ne.s32.totalorder %s43, %s45
    %p49 = scmp.eq.s32.totalorder %s9, 0
    %p50 = por %p48, %p49
    %p51 = scmp.ne.s32.totalorder %s43, %s45
    %p52 = scmp.eq.s32.totalorder %s14, 1
    %p53 = por %p51, %p52
    %p54 = scmp.ne.s32.totalorder %s45, %s46
    %p55 = scmp.eq.s32.totalorder %s14, 0
    %p56 = por %p54, %p55
    %p57 = scmp.ne.s32.totalorder %s45, %s46
    %p58 = scmp.eq.s32.totalorder %s15, 1
    %p59 = por %p57, %p58
    %p61 = scmp.ne.s32.totalorder %s46, %s60
    %p62 = scmp.eq.s32.totalorder %s15, 0
    %p63 = por %p61, %p62
    %s65 = sadd.s32 %s64, 1
    %p68 = scmp.eq.s32.totalorder %s9, 1
    %p69 = scmp.ne.s32.totalorder %s64, %s66
    %p70 = scmp.eq.s32.totalorder %s9, 0
    %p71 = por %p69, %p70
    %p72 = scmp.ne.s32.totalorder %s64, %s66
    %p73 = scmp.eq.s32.totalorder %s14, 1
    %p74 = por %p72, %p73
    %p75 = scmp.ne.s32.totalorder %s66, %s67
    %p76 = scmp.eq.s32.totalorder %s14, 0
    %p77 = por %p75, %p76
    %p78 = scmp.ne.s32.totalorder %s66, %s67
    %p79 = scmp.eq.s32.totalorder %s15, 1
    %p80 = por %p78, %p79
    %p82 = scmp.ne.s32.totalorder %s67, %s81
    %p83 = scmp.eq.s32.totalorder %s15, 0
    %p84 = por %p82, %p83
    %s85 = ssub.s32 %s9, %s16
    %p86 = scmp.eq.s32.totalorder %s85, 0
    %s88 = sadd.s32 %s87, 1
    %s89 = scalar_select %p86, %s87, %s88
    %p92 = pneg %p86
    %p93 = scmp.eq.s32.totalorder %s9, 1
    %p94 = por %p92, %p93
    %p95 = scmp.ne.s32.totalorder %s87, %s90
    %p96 = scmp.eq.s32.totalorder %s9, 0
    %p97 = por %p95, %p96
    %p98 = scmp.ne.s32.totalorder %s87, %s90
    %p99 = scmp.eq.s32.totalorder %s14, 1
    %p100 = por %p98, %p99
    %p101 = scmp.ne.s32.totalorder %s90, %s91
    %p102 = scmp.eq.s32.totalorder %s14, 0
    %p103 = por %p101, %p102
    %p104 = scmp.ne.s32.totalorder %s90, %s91
    %p105 = scmp.eq.s32.totalorder %s15, 1
    %p106 = por %p104, %p105
    %p108 = scmp.ne.s32.totalorder %s91, %s107
    %p109 = scmp.eq.s32.totalorder %s15, 0
    %p110 = por %p108, %p109
    %p111 = scmp.le.s32.totalorder 1, %s9
    %p112 = scmp.lt.s32.totalorder %s9, 3
    %p113 = pnand %p111, %p112
    %p114 = pneg %p113
    // Predicated region
    $region9: #{cnn_femnist_forward.3} parent=5 // pred_check
      _
    $region10: #{cnn_femnist_forward.3} parent=5 // pred_check_branch
      %116 = sbr.rel (%p113) target = $region12
    $region11: #{cnn_femnist_forward.3} parent=5 // pred_region
      %s117 = ssub.s32 %s9, 1
      // Predicated region
      $region13: #{cnn_femnist_forward.3} parent=11 // pred_check
        %p118 = pneg %p56
      $region14: #{cnn_femnist_forward.3} parent=11 // pred_check_branch
        %120 = sbr.rel (%p118) target = $region16
      $region15: #{cnn_femnist_forward.3} parent=11 // pred_region
        _
      $region16: #{cnn_femnist_forward.3} parent=11 // pred_fallthru
        _
      // Predicated region
      $region17: #{cnn_femnist_forward.3} parent=11 // pred_check
        %p121 = pneg %p77
      $region18: #{cnn_femnist_forward.3} parent=11 // pred_check_branch
        %123 = sbr.rel (%p121) target = $region20
      $region19: #{cnn_femnist_forward.3} parent=11 // pred_region
        _
      $region20: #{cnn_femnist_forward.3} parent=11 // pred_fallthru
        _
    $region12: #{cnn_femnist_forward.3} parent=5 // pred_fallthru
      _
    %p124 = scmp.lt.s32.totalorder %s9, 2
    // Predicated region
    $region21: #{cnn_femnist_forward.3} parent=5 // pred_check
      %p125 = pneg %p124
    $region22: #{cnn_femnist_forward.3} parent=5 // pred_check_branch
      %127 = sbr.rel (%p125) target = $region24
    $region23: #{cnn_femnist_forward.3} parent=5 // pred_region
      // Predicated region
      $region25: #{cnn_femnist_forward.3} parent=23 // pred_check
        %p128 = pneg %p29
      $region26: #{cnn_femnist_forward.3} parent=23 // pred_check_branch
        %130 = sbr.rel (%p128) target = $region28
      $region27: #{cnn_femnist_forward.3} parent=23 // pred_region
        %p131 = scmp.lt.s32.totalorder %s9, 1
        %s132 = scalar_select %p131, %s9, 1
        %s133 = smul.addr %s132, 100
        %s134 = smul.addr %s133, 8
        %s135 = scalar_lea.vmem %s0, %s134
      $region28: #{cnn_femnist_forward.3} parent=23 // pred_fallthru
        _
    $region24: #{cnn_femnist_forward.3} parent=5 // pred_fallthru
      _
    %p136 = scmp.le.s32.totalorder 1, %s9
    %p137 = scmp.lt.s32.totalorder %s9, 3
    %p138 = pnand %p136, %p137
    %p139 = pneg %p138
    // Predicated region
    $region29: #{cnn_femnist_forward.3} parent=5 // pred_check
      _
    $region30: #{cnn_femnist_forward.3} parent=5 // pred_check_branch
      %141 = sbr.rel (%p138) target = $region32
    $region31: #{cnn_femnist_forward.3} parent=5 // pred_region
      %s142 = ssub.s32 %s9, 1
      %p143 = scmp.lt.s32.totalorder %s14, 1
      %s144 = scalar_select %p143, %s14, 1
      %s145 = smul.addr %s144, 100
      %s146 = smul.addr %s145, 8
      %s147 = scalar_lea.vmem %s0, %s146
      %p148 = pneg %p35
      %p149 = pneg %p32
      %p150 = pneg %p56
      %p151 = pneg %p53
      %p152 = pneg %p77
      %p153 = pneg %p74
      %p154 = pneg %p103
      %p155 = pneg %p100
      %p156 = scmp.lt.s32.totalorder %s14, 1
      %s157 = scalar_select %p156, %s14, 1
      %s158 = smul.addr %s157, 25
      %s159 = smul.addr %s158, 8
      %s160 = scalar_lea.vmem %s3, %s159
      %p161 = scmp.lt.s32.totalorder %s14, 1
      %s162 = scalar_select %p161, %s14, 1
      %s163 = smul.addr %s162, 100
      %s164 = smul.addr %s163, 8
      %s165 = scalar_lea.vmem %s0, %s164
      %p166 = scmp.lt.s32.totalorder %s14, 1
      %s167 = scalar_select %p166, %s14, 1
      %s168 = smul.addr %s167, 25
      %s169 = smul.addr %s168, 8
      %s170 = scalar_lea.vmem %s3, %s169
      %v171 = vld [vmem:[%s1] sm:$0xff]
      %v172 = vld [vmem:[%s1 + $0x8] sm:$0xff]
      %v173 = vld [vmem:[%s1 + $0x10] sm:$0xff]
      %v174 = vld [vmem:[%s1 + $0x18] sm:$0xff]
      %v175 = vld [vmem:[%s1 + $0x20] sm:$0xff]
      %v176 = vld [vmem:[%s1 + $0x28] sm:$0xff]
      %v177 = vld [vmem:[%s1 + $0x30] sm:$0x1]
      %v178 = vld [vmem:[%s165] sm:$0xff]
      %v179 = vld [vmem:[%s165 + $0x8] sm:$0xff]
      %v180 = vld [vmem:[%s165 + $0x10] sm:$0xff]
      %v181 = vld [vmem:[%s165 + $0x18] sm:$0xff]
      %v182 = vld [vmem:[%s165 + $0x20] sm:$0xff]
      %v183 = vld [vmem:[%s165 + $0x28] sm:$0xff]
      %v184 = vld [vmem:[%s165 + $0x30] sm:$0xff]
      %v185 = vld [vmem:[%s165 + $0x38] sm:$0xff]
      %v186 = vld [vmem:[%s165 + $0x40] sm:$0xff]
      %v187 = vld [vmem:[%s165 + $0x48] sm:$0xff]
      %v188 = vld [vmem:[%s165 + $0x50] sm:$0xff]
      %v189 = vld [vmem:[%s165 + $0x58] sm:$0xff]
      %v190 = vld [vmem:[%s165 + $0x60] sm:$0xff]
      %v191 = vld [vmem:[%s165 + $0x68] sm:$0xff]
      %v192 = vld [vmem:[%s165 + $0x70] sm:$0xff]
      %v193 = vld [vmem:[%s165 + $0x78] sm:$0xff]
      %v194 = vld [vmem:[%s165 + $0x80] sm:$0xff]
      %v195 = vld [vmem:[%s165 + $0x88] sm:$0xff]
      %v196 = vld [vmem:[%s165 + $0x90] sm:$0xff]
      %v197 = vld [vmem:[%s165 + $0x98] sm:$0xff]
      %v198 = vld [vmem:[%s165 + $0xa0] sm:$0xff]
      %v199 = vld [vmem:[%s165 + $0xa8] sm:$0xff]
      %v200 = vld [vmem:[%s165 + $0xb0] sm:$0xff]
      %v201 = vld [vmem:[%s165 + $0xb8] sm:$0xff]
      %v202 = vld [vmem:[%s165 + $0xc0] sm:$0xf]
      %vm203 = vcmask 400384
      %v205 = vsel %vm203, %v178, 0
      %v208 = vsel %vm203, %v179, 0
      %v211 = vsel %vm203, %v180, 0
      %v214 = vsel %vm203, %v181, 0
      %v217 = vsel %vm203, %v182, 0
      %v220 = vsel %vm203, %v183, 0
      %v223 = vsel %vm203, %v184, 0
      %v226 = vsel %vm203, %v185, 0
      %v229 = vsel %vm203, %v186, 0
      %v232 = vsel %vm203, %v187, 0
      %v235 = vsel %vm203, %v188, 0
      %v238 = vsel %vm203, %v189, 0
      %v241 = vsel %vm203, %v190, 0
      %v244 = vsel %vm203, %v191, 0
      %v247 = vsel %vm203, %v192, 0
      %v250 = vsel %vm203, %v193, 0
      %v253 = vsel %vm203, %v194, 0
      %v256 = vsel %vm203, %v195, 0
      %v259 = vsel %vm203, %v196, 0
      %v262 = vsel %vm203, %v197, 0
      %v265 = vsel %vm203, %v198, 0
      %v268 = vsel %vm203, %v199, 0
      %v271 = vsel %vm203, %v200, 0
      %v274 = vsel %vm203, %v201, 0
      %v277 = vsel %vm203, %v202, 0
      %vm279 = vcmask 1040384
      %v281 = vsel %vm279, %v177, 0
      %283 = vmatprep.subr.mxu0 0.0
      %284 = vmatpush1.msra.mxu0 %v171
      %285 = vmatprep.subr.mxu0 0.0
      %286 = vmatpush1.msra.mxu0 %v172
      %287 = vmatprep.subr.mxu0 0.0
      %288 = vmatpush1.msra.mxu0 %v173
      %289 = vmatprep.subr.mxu0 0.0
      %290 = vmatpush1.msra.mxu0 %v174
      %291 = vmatprep.subr.mxu0 0.0
      %292 = vmatpush1.msra.mxu0 %v175
      %293 = vmatprep.subr.mxu0 0.0
      %294 = vmatpush1.msra.mxu0 %v176
      %295 = vmatprep.subr.mxu0 0.0
      %296 = vmatpush1.msra.mxu0 %v281
      %297 = vmatprep.subr.mxu0 0.0
      %298 = vmatpush1.msra.mxu0 0.0
      %299 = vmatprep.subr.mxu0 0.0
      %300 = vmatpush1.msra.mxu0 0.0
      %301 = vmatprep.subr.mxu0 0.0
      %302 = vmatpush1.msra.mxu0 0.0
      %303 = vmatprep.subr.mxu0 0.0
      %304 = vmatpush1.msra.mxu0 0.0
      %305 = vmatprep.subr.mxu0 0.0
      %306 = vmatpush1.msra.mxu0 0.0
      %307 = vmatprep.subr.mxu0 0.0
      %308 = vmatpush1.msra.mxu0 0.0
      %309 = vmatprep.subr.mxu0 0.0
      %310 = vmatpush1.msra.mxu0 0.0
      %311 = vmatprep.subr.mxu0 0.0
      %312 = vmatpush1.msra.mxu0 0.0
      %313 = vmatprep.subr.mxu0 0.0
      %314 = vmatpush1.msra.mxu0 0.0
      %315 = vmatprep.subr.mxu0 0.0
      %316 = vmatpush1.msra.mxu0 0.0
      %317 = vmatprep.subr.mxu0 0.0
      %318 = vmatpush1.msra.mxu0 0.0
      %319 = vmatprep.subr.mxu0 0.0
      %320 = vmatpush1.msra.mxu0 0.0
      %321 = vmatprep.subr.mxu0 0.0
      %322 = vmatpush1.msra.mxu0 0.0
      %323 = vmatprep.subr.mxu0 0.0
      %324 = vmatpush1.msra.mxu0 0.0
      %325 = vmatprep.subr.mxu0 0.0
      %326 = vmatpush1.msra.mxu0 0.0
      %327 = vmatprep.subr.mxu0 0.0
      %328 = vmatpush1.msra.mxu0 0.0
      %329 = vmatprep.subr.mxu0 0.0
      %330 = vmatpush1.msra.mxu0 0.0
      %331 = vmatprep.subr.mxu0 0.0
      %332 = vmatpush1.msra.mxu0 0.0
      %333 = vmatprep.subr.mxu0 0.0
      %334 = vmatpush1.msra.mxu0 0.0
      %335 = vmatprep.subr.mxu0 0.0
      %336 = vmatpush1.msra.mxu0 0.0
      %337 = vmatprep.subr.mxu0 0.0
      %338 = vmatpush1.msra.mxu0 0.0
      %339 = vmatprep.subr.mxu0 0.0
      %340 = vmatpush1.msra.mxu0 0.0
      %341 = vmatprep.subr.mxu0 0.0
      %342 = vmatpush1.msra.mxu0 0.0
      %343 = vmatprep.subr.mxu0 0.0
      %344 = vmatpush1.msra.mxu0 0.0
      %345 = vmatprep.subr.mxu0 0.0
      %346 = vmatpush1.msra.mxu0 0.0
      %347 = vmatprep.mubr.f32.mxu0 0.0
      %348 = vmatmul.mubr.f32.gmra.mrb[0].mxu0 %v205
      %v349 = vpop.f32.mrb[0].mxu0
      %v350 = vadd.f32 0.0, %v349
      %v351 = vpop.f32.mrb[0].mxu0
      %352 = vmatprep.mubr.f32.mxu0 0.0
      %353 = vmatmul.mubr.f32.gmra.mrb[0].mxu0 %v208
      %v354 = vpop.f32.mrb[0].mxu0
      %v355 = vadd.f32 0.0, %v354
      %v356 = vpop.f32.mrb[0].mxu0
      %357 = vmatprep.mubr.f32.mxu0 0.0
      %358 = vmatmul.mubr.f32.gmra.mrb[0].mxu0 %v211
      %v359 = vpop.f32.mrb[0].mxu0
      %v360 = vadd.f32 0.0, %v359
      %v361 = vpop.f32.mrb[0].mxu0
      %362 = vmatprep.mubr.f32.mxu0 0.0
      %363 = vmatmul.mubr.f32.gmra.mrb[0].mxu0 %v214
      %v364 = vpop.f32.mrb[0].mxu0
      %v365 = vadd.f32 0.0, %v364
      %v366 = vpop.f32.mrb[0].mxu0
      %367 = vmatprep.mubr.f32.mxu0 0.0
      %368 = vmatmul.mubr.f32.gmra.mrb[0].mxu0 %v217
      %v369 = vpop.f32.mrb[0].mxu0
      %v370 = vadd.f32 0.0, %v369
      %v371 = vpop.f32.mrb[0].mxu0
      %372 = vmatprep.mubr.f32.mxu0 0.0
      %373 = vmatmul.mubr.f32.gmra.mrb[0].mxu0 %v220
      %v374 = vpop.f32.mrb[0].mxu0
      %v375 = vadd.f32 0.0, %v374
      %v376 = vpop.f32.mrb[0].mxu0
      %377 = vmatprep.mubr.f32.mxu0 0.0
      %378 = vmatmul.mubr.f32.gmra.mrb[0].mxu0 %v223
      %v379 = vpop.f32.mrb[0].mxu0
      %v380 = vadd.f32 0.0, %v379
      %v381 = vpop.f32.mrb[0].mxu0
      %382 = vmatprep.mubr.f32.mxu0 0.0
      %383 = vmatmul.mubr.f32.gmra.mrb[0].mxu0 %v226
      %v384 = vpop.f32.mrb[0].mxu0
      %v385 = vadd.f32 0.0, %v384
      %v386 = vpop.f32.mrb[0].mxu0
      %387 = vmatprep.mubr.f32.mxu0 0.0
      %388 = vmatmul.mubr.f32.gmra.mrb[0].mxu0 %v229
      %v389 = vpop.f32.mrb[0].mxu0
      %v390 = vadd.f32 0.0, %v389
      %v391 = vpop.f32.mrb[0].mxu0
      %392 = vmatprep.mubr.f32.mxu0 0.0
      %393 = vmatmul.mubr.f32.gmra.mrb[0].mxu0 %v232
      %v394 = vpop.f32.mrb[0].mxu0
      %v395 = vadd.f32 0.0, %v394
      %v396 = vpop.f32.mrb[0].mxu0
      %397 = vmatprep.mubr.f32.mxu0 0.0
      %398 = vmatmul.mubr.f32.gmra.mrb[0].mxu0 %v235
      %v399 = vpop.f32.mrb[0].mxu0
      %v400 = vadd.f32 0.0, %v399
      %v401 = vpop.f32.mrb[0].mxu0
      %402 = vmatprep.mubr.f32.mxu0 0.0
      %403 = vmatmul.mubr.f32.gmra.mrb[0].mxu0 %v238
      %v404 = vpop.f32.mrb[0].mxu0
      %v405 = vadd.f32 0.0, %v404
      %v406 = vpop.f32.mrb[0].mxu0
      %407 = vmatprep.mubr.f32.mxu0 0.0
      %408 = vmatmul.mubr.f32.gmra.mrb[0].mxu0 %v241
      %v409 = vpop.f32.mrb[0].mxu0
      %v410 = vadd.f32 0.0, %v409
      %v411 = vpop.f32.mrb[0].mxu0
      %412 = vmatprep.mubr.f32.mxu0 0.0
      %413 = vmatmul.mubr.f32.gmra.mrb[0].mxu0 %v244
      %v414 = vpop.f32.mrb[0].mxu0
      %v415 = vadd.f32 0.0, %v414
      %v416 = vpop.f32.mrb[0].mxu0
      %417 = vmatprep.mubr.f32.mxu0 0.0
      %418 = vmatmul.mubr.f32.gmra.mrb[0].mxu0 %v247
      %v419 = vpop.f32.mrb[0].mxu0
      %v420 = vadd.f32 0.0, %v419
      %v421 = vpop.f32.mrb[0].mxu0
      %422 = vmatprep.mubr.f32.mxu0 0.0
      %423 = vmatmul.mubr.f32.gmra.mrb[0].mxu0 %v250
      %v424 = vpop.f32.mrb[0].mxu0
      %v425 = vadd.f32 0.0, %v424
      %v426 = vpop.f32.mrb[0].mxu0
      %427 = vmatprep.mubr.f32.mxu0 0.0
      %428 = vmatmul.mubr.f32.gmra.mrb[0].mxu0 %v253
      %v429 = vpop.f32.mrb[0].mxu0
      %v430 = vadd.f32 0.0, %v429
      %v431 = vpop.f32.mrb[0].mxu0
      %432 = vmatprep.mubr.f32.mxu0 0.0
      %433 = vmatmul.mubr.f32.gmra.mrb[0].mxu0 %v256
      %v434 = vpop.f32.mrb[0].mxu0
      %v435 = vadd.f32 0.0, %v434
      %v436 = vpop.f32.mrb[0].mxu0
      %437 = vmatprep.mubr.f32.mxu0 0.0
      %438 = vmatmul.mubr.f32.gmra.mrb[0].mxu0 %v259
      %v439 = vpop.f32.mrb[0].mxu0
      %v440 = vadd.f32 0.0, %v439
      %v441 = vpop.f32.mrb[0].mxu0
      %442 = vmatprep.mubr.f32.mxu0 0.0
      %443 = vmatmul.mubr.f32.gmra.mrb[0].mxu0 %v262
      %v444 = vpop.f32.mrb[0].mxu0
      %v445 = vadd.f32 0.0, %v444
      %v446 = vpop.f32.mrb[0].mxu0
      %447 = vmatprep.mubr.f32.mxu0 0.0
      %448 = vmatmul.mubr.f32.gmra.mrb[0].mxu0 %v265
      %v449 = vpop.f32.mrb[0].mxu0
      %v450 = vadd.f32 0.0, %v449
      %v451 = vpop.f32.mrb[0].mxu0
      %452 = vmatprep.mubr.f32.mxu0 0.0
      %453 = vmatmul.mubr.f32.gmra.mrb[0].mxu0 %v268
      %v454 = vpop.f32.mrb[0].mxu0
      %v455 = vadd.f32 0.0, %v454
      %v456 = vpop.f32.mrb[0].mxu0
      %457 = vmatprep.mubr.f32.mxu0 0.0
      %458 = vmatmul.mubr.f32.gmra.mrb[0].mxu0 %v271
      %v459 = vpop.f32.mrb[0].mxu0
      %v460 = vadd.f32 0.0, %v459
      %v461 = vpop.f32.mrb[0].mxu0
      %462 = vmatprep.mubr.f32.mxu0 0.0
      %463 = vmatmul.mubr.f32.gmra.mrb[0].mxu0 %v274
      %v464 = vpop.f32.mrb[0].mxu0
      %v465 = vadd.f32 0.0, %v464
      %v466 = vpop.f32.mrb[0].mxu0
      %467 = vmatprep.mubr.f32.mxu0 0.0
      %468 = vmatmul.mubr.f32.gmra.mrb[0].mxu0 %v277
      %v469 = vpop.f32.mrb[0].mxu0
      %v470 = vadd.f32 0.0, %v469
      %v471 = vpop.f32.mrb[0].mxu0
      %472 = vdwg.mxu0
      %s473 = scalar_lea.vmem %s165, 200
      %v474 = vld [vmem:[%s473] sm:$0xff]
      %v475 = vld [vmem:[%s473 + $0x8] sm:$0xff]
      %v476 = vld [vmem:[%s473 + $0x10] sm:$0xff]
      %v477 = vld [vmem:[%s473 + $0x18] sm:$0xff]
      %v478 = vld [vmem:[%s473 + $0x20] sm:$0xff]
      %v479 = vld [vmem:[%s473 + $0x28] sm:$0xff]
      %v480 = vld [vmem:[%s473 + $0x30] sm:$0xff]
      %v481 = vld [vmem:[%s473 + $0x38] sm:$0xff]
      %v482 = vld [vmem:[%s473 + $0x40] sm:$0xff]
      %v483 = vld [vmem:[%s473 + $0x48] sm:$0xff]
      %v484 = vld [vmem:[%s473 + $0x50] sm:$0xff]
      %v485 = vld [vmem:[%s473 + $0x58] sm:$0xff]
      %v486 = vld [vmem:[%s473 + $0x60] sm:$0xff]
      %v487 = vld [vmem:[%s473 + $0x68] sm:$0xff]
      %v488 = vld [vmem:[%s473 + $0x70] sm:$0xff]
      %v489 = vld [vmem:[%s473 + $0x78] sm:$0xff]
      %v490 = vld [vmem:[%s473 + $0x80] sm:$0xff]
      %v491 = vld [vmem:[%s473 + $0x88] sm:$0xff]
      %v492 = vld [vmem:[%s473 + $0x90] sm:$0xff]
      %v493 = vld [vmem:[%s473 + $0x98] sm:$0xff]
      %v494 = vld [vmem:[%s473 + $0xa0] sm:$0xff]
      %v495 = vld [vmem:[%s473 + $0xa8] sm:$0xff]
      %v496 = vld [vmem:[%s473 + $0xb0] sm:$0xff]
      %v497 = vld [vmem:[%s473 + $0xb8] sm:$0xff]
      %v498 = vld [vmem:[%s473 + $0xc0] sm:$0xf]
      %v500 = vsel %vm203, %v474, 0
      %v503 = vsel %vm203, %v475, 0
      %v506 = vsel %vm203, %v476, 0
      %v509 = vsel %vm203, %v477, 0
      %v512 = vsel %vm203, %v478, 0
      %v515 = vsel %vm203, %v479, 0
      %v518 = vsel %vm203, %v480, 0
      %v521 = vsel %vm203, %v481, 0
      %v524 = vsel %vm203, %v482, 0
      %v527 = vsel %vm203, %v483, 0
      %v530 = vsel %vm203, %v484, 0
      %v533 = vsel %vm203, %v485, 0
      %v536 = vsel %vm203, %v486, 0
      %v539 = vsel %vm203, %v487, 0
      %v542 = vsel %vm203, %v488, 0
      %v545 = vsel %vm203, %v489, 0
      %v548 = vsel %vm203, %v490, 0
      %v551 = vsel %vm203, %v491, 0
      %v554 = vsel %vm203, %v492, 0
      %v557 = vsel %vm203, %v493, 0
      %v560 = vsel %vm203, %v494, 0
      %v563 = vsel %vm203, %v495, 0
      %v566 = vsel %vm203, %v496, 0
      %v569 = vsel %vm203, %v497, 0
      %v572 = vsel %vm203, %v498, 0
      %574 = vmatprep.subr.mxu0 0.0
      %575 = vmatpush1.msra.mxu0 %v171
      %576 = vmatprep.subr.mxu0 0.0
      %577 = vmatpush1.msra.mxu0 %v172
      %578 = vmatprep.subr.mxu0 0.0
      %579 = vmatpush1.msra.mxu0 %v173
      %580 = vmatprep.subr.mxu0 0.0
      %581 = vmatpush1.msra.mxu0 %v174
      %582 = vmatprep.subr.mxu0 0.0
      %583 = vmatpush1.msra.mxu0 %v175
      %584 = vmatprep.subr.mxu0 0.0
      %585 = vmatpush1.msra.mxu0 %v176
      %586 = vmatprep.subr.mxu0 0.0
      %587 = vmatpush1.msra.mxu0 %v281
      %588 = vmatprep.subr.mxu0 0.0
      %589 = vmatpush1.msra.mxu0 0.0
      %590 = vmatprep.subr.mxu0 0.0
      %591 = vmatpush1.msra.mxu0 0.0
      %592 = vmatprep.subr.mxu0 0.0
      %593 = vmatpush1.msra.mxu0 0.0
      %594 = vmatprep.subr.mxu0 0.0
      %595 = vmatpush1.msra.mxu0 0.0
      %596 = vmatprep.subr.mxu0 0.0
      %597 = vmatpush1.msra.mxu0 0.0
      %598 = vmatprep.subr.mxu0 0.0
      %599 = vmatpush1.msra.mxu0 0.0
      %600 = vmatprep.subr.mxu0 0.0
      %601 = vmatpush1.msra.mxu0 0.0
      %602 = vmatprep.subr.mxu0 0.0
      %603 = vmatpush1.msra.mxu0 0.0
      %604 = vmatprep.subr.mxu0 0.0
      %605 = vmatpush1.msra.mxu0 0.0
      %606 = vmatprep.subr.mxu0 0.0
      %607 = vmatpush1.msra.mxu0 0.0
      %608 = vmatprep.subr.mxu0 0.0
      %609 = vmatpush1.msra.mxu0 0.0
      %610 = vmatprep.subr.mxu0 0.0
      %611 = vmatpush1.msra.mxu0 0.0
      %612 = vmatprep.subr.mxu0 0.0
      %613 = vmatpush1.msra.mxu0 0.0
      %614 = vmatprep.subr.mxu0 0.0
      %615 = vmatpush1.msra.mxu0 0.0
      %616 = vmatprep.subr.mxu0 0.0
      %617 = vmatpush1.msra.mxu0 0.0
      %618 = vmatprep.subr.mxu0 0.0
      %619 = vmatpush1.msra.mxu0 0.0
      %620 = vmatprep.subr.mxu0 0.0
      %621 = vmatpush1.msra.mxu0 0.0
      %622 = vmatprep.subr.mxu0 0.0
      %623 = vmatpush1.msra.mxu0 0.0
      %624 = vmatprep.subr.mxu0 0.0
      %625 = vmatpush1.msra.mxu0 0.0
      %626 = vmatprep.subr.mxu0 0.0
      %627 = vmatpush1.msra.mxu0 0.0
      %628 = vmatprep.subr.mxu0 0.0
      %629 = vmatpush1.msra.mxu0 0.0
      %630 = vmatprep.subr.mxu0 0.0
      %631 = vmatpush1.msra.mxu0 0.0
      %632 = vmatprep.subr.mxu0 0.0
      %633 = vmatpush1.msra.mxu0 0.0
      %634 = vmatprep.subr.mxu0 0.0
      %635 = vmatpush1.msra.mxu0 0.0
      %636 = vmatprep.subr.mxu0 0.0
      %637 = vmatpush1.msra.mxu0 0.0
      %638 = vmatprep.mubr.f32.mxu0 0.0
      %639 = vmatmul.mubr.f32.gmra.mrb[0].mxu0 %v500
      %v640 = vpop.f32.mrb[0].mxu0
      %v641 = vadd.f32 0.0, %v640
      %v642 = vpop.f32.mrb[0].mxu0
      %643 = vmatprep.mubr.f32.mxu0 0.0
      %644 = vmatmul.mubr.f32.gmra.mrb[0].mxu0 %v503
      %v645 = vpop.f32.mrb[0].mxu0
      %v646 = vadd.f32 0.0, %v645
      %v647 = vpop.f32.mrb[0].mxu0
      %648 = vmatprep.mubr.f32.mxu0 0.0
      %649 = vmatmul.mubr.f32.gmra.mrb[0].mxu0 %v506
      %v650 = vpop.f32.mrb[0].mxu0
      %v651 = vadd.f32 0.0, %v650
      %v652 = vpop.f32.mrb[0].mxu0
      %653 = vmatprep.mubr.f32.mxu0 0.0
      %654 = vmatmul.mubr.f32.gmra.mrb[0].mxu0 %v509
      %v655 = vpop.f32.mrb[0].mxu0
      %v656 = vadd.f32 0.0, %v655
      %v657 = vpop.f32.mrb[0].mxu0
      %658 = vmatprep.mubr.f32.mxu0 0.0
      %659 = vmatmul.mubr.f32.gmra.mrb[0].mxu0 %v512
      %v660 = vpop.f32.mrb[0].mxu0
      %v661 = vadd.f32 0.0, %v660
      %v662 = vpop.f32.mrb[0].mxu0
      %663 = vmatprep.mubr.f32.mxu0 0.0
      %664 = vmatmul.mubr.f32.gmra.mrb[0].mxu0 %v515
      %v665 = vpop.f32.mrb[0].mxu0
      %v666 = vadd.f32 0.0, %v665
      %v667 = vpop.f32.mrb[0].mxu0
      %668 = vmatprep.mubr.f32.mxu0 0.0
      %669 = vmatmul.mubr.f32.gmra.mrb[0].mxu0 %v518
      %v670 = vpop.f32.mrb[0].mxu0
      %v671 = vadd.f32 0.0, %v670
      %v672 = vpop.f32.mrb[0].mxu0
      %673 = vmatprep.mubr.f32.mxu0 0.0
      %674 = vmatmul.mubr.f32.gmra.mrb[0].mxu0 %v521
      %v675 = vpop.f32.mrb[0].mxu0
      %v676 = vadd.f32 0.0, %v675
      %v677 = vpop.f32.mrb[0].mxu0
      %678 = vmatprep.mubr.f32.mxu0 0.0
      %679 = vmatmul.mubr.f32.gmra.mrb[0].mxu0 %v524
      %v680 = vpop.f32.mrb[0].mxu0
      %v681 = vadd.f32 0.0, %v680
      %v682 = vpop.f32.mrb[0].mxu0
      %683 = vmatprep.mubr.f32.mxu0 0.0
      %684 = vmatmul.mubr.f32.gmra.mrb[0].mxu0 %v527
      %v685 = vpop.f32.mrb[0].mxu0
      %v686 = vadd.f32 0.0, %v685
      %v687 = vpop.f32.mrb[0].mxu0
      %688 = vmatprep.mubr.f32.mxu0 0.0
      %689 = vmatmul.mubr.f32.gmra.mrb[0].mxu0 %v530
      %v690 = vpop.f32.mrb[0].mxu0
      %v691 = vadd.f32 0.0, %v690
      %v692 = vpop.f32.mrb[0].mxu0
      %693 = vmatprep.mubr.f32.mxu0 0.0
      %694 = vmatmul.mubr.f32.gmra.mrb[0].mxu0 %v533
      %v695 = vpop.f32.mrb[0].mxu0
      %v696 = vadd.f32 0.0, %v695
      %v697 = vpop.f32.mrb[0].mxu0
      %698 = vmatprep.mubr.f32.mxu0 0.0
      %699 = vmatmul.mubr.f32.gmra.mrb[0].mxu0 %v536
      %v700 = vpop.f32.mrb[0].mxu0
      %v701 = vadd.f32 0.0, %v700
      %v702 = vpop.f32.mrb[0].mxu0
      %703 = vmatprep.mubr.f32.mxu0 0.0
      %704 = vmatmul.mubr.f32.gmra.mrb[0].mxu0 %v539
      %v705 = vpop.f32.mrb[0].mxu0
      %v706 = vadd.f32 0.0, %v705
      %v707 = vpop.f32.mrb[0].mxu0
      %708 = vmatprep.mubr.f32.mxu0 0.0
      %709 = vmatmul.mubr.f32.gmra.mrb[0].mxu0 %v542
      %v710 = vpop.f32.mrb[0].mxu0
      %v711 = vadd.f32 0.0, %v710
      %v712 = vpop.f32.mrb[0].mxu0
      %713 = vmatprep.mubr.f32.mxu0 0.0
      %714 = vmatmul.mubr.f32.gmra.mrb[0].mxu0 %v545
      %v715 = vpop.f32.mrb[0].mxu0
      %v716 = vadd.f32 0.0, %v715
      %v717 = vpop.f32.mrb[0].mxu0
      %718 = vmatprep.mubr.f32.mxu0 0.0
      %719 = vmatmul.mubr.f32.gmra.mrb[0].mxu0 %v548
      %v720 = vpop.f32.mrb[0].mxu0
      %v721 = vadd.f32 0.0, %v720
      %v722 = vpop.f32.mrb[0].mxu0
      %723 = vmatprep.mubr.f32.mxu0 0.0
      %724 = vmatmul.mubr.f32.gmra.mrb[0].mxu0 %v551
      %v725 = vpop.f32.mrb[0].mxu0
      %v726 = vadd.f32 0.0, %v725
      %v727 = vpop.f32.mrb[0].mxu0
      %728 = vmatprep.mubr.f32.mxu0 0.0
      %729 = vmatmul.mubr.f32.gmra.mrb[0].mxu0 %v554
      %v730 = vpop.f32.mrb[0].mxu0
      %v731 = vadd.f32 0.0, %v730
      %v732 = vpop.f32.mrb[0].mxu0
      %733 = vmatprep.mubr.f32.mxu0 0.0
      %734 = vmatmul.mubr.f32.gmra.mrb[0].mxu0 %v557
      %v735 = vpop.f32.mrb[0].mxu0
      %v736 = vadd.f32 0.0, %v735
      %v737 = vpop.f32.mrb[0].mxu0
      %738 = vmatprep.mubr.f32.mxu0 0.0
      %739 = vmatmul.mubr.f32.gmra.mrb[0].mxu0 %v560
      %v740 = vpop.f32.mrb[0].mxu0
      %v741 = vadd.f32 0.0, %v740
      %v742 = vpop.f32.mrb[0].mxu0
      %743 = vmatprep.mubr.f32.mxu0 0.0
      %744 = vmatmul.mubr.f32.gmra.mrb[0].mxu0 %v563
      %v745 = vpop.f32.mrb[0].mxu0
      %v746 = vadd.f32 0.0, %v745
      %v747 = vpop.f32.mrb[0].mxu0
      %748 = vmatprep.mubr.f32.mxu0 0.0
      %749 = vmatmul.mubr.f32.gmra.mrb[0].mxu0 %v566
      %v750 = vpop.f32.mrb[0].mxu0
      %v751 = vadd.f32 0.0, %v750
      %v752 = vpop.f32.mrb[0].mxu0
      %753 = vmatprep.mubr.f32.mxu0 0.0
      %754 = vmatmul.mubr.f32.gmra.mrb[0].mxu0 %v569
      %v755 = vpop.f32.mrb[0].mxu0
      %v756 = vadd.f32 0.0, %v755
      %v757 = vpop.f32.mrb[0].mxu0
      %758 = vmatprep.mubr.f32.mxu0 0.0
      %759 = vmatmul.mubr.f32.gmra.mrb[0].mxu0 %v572
      %v760 = vpop.f32.mrb[0].mxu0
      %v761 = vadd.f32 0.0, %v760
      %v762 = vpop.f32.mrb[0].mxu0
      %763 = vdwg.mxu0
      %v764 = vmax.f32 %v350, %v641
      %v765 = vmax.f32 %v355, %v646
      %v766 = vmax.f32 %v360, %v651
      %v767 = vmax.f32 %v365, %v656
      %v768 = vmax.f32 %v370, %v661
      %v769 = vmax.f32 %v375, %v666
      %v770 = vmax.f32 %v380, %v671
      %v771 = vmax.f32 %v385, %v676
      %v772 = vmax.f32 %v390, %v681
      %v773 = vmax.f32 %v395, %v686
      %v774 = vmax.f32 %v400, %v691
      %v775 = vmax.f32 %v405, %v696
      %v776 = vmax.f32 %v410, %v701
      %v777 = vmax.f32 %v415, %v706
      %v778 = vmax.f32 %v420, %v711
      %v779 = vmax.f32 %v425, %v716
      %v780 = vmax.f32 %v430, %v721
      %v781 = vmax.f32 %v435, %v726
      %v782 = vmax.f32 %v440, %v731
      %v783 = vmax.f32 %v445, %v736
      %v784 = vmax.f32 %v450, %v741
      %v785 = vmax.f32 %v455, %v746
      %v786 = vmax.f32 %v460, %v751
      %v787 = vmax.f32 %v465, %v756
      %v788 = vmax.f32 %v470, %v761
      %s789 = scalar_lea.vmem %s165, 400
      %v790 = vld [vmem:[%s789] sm:$0xff]
      %v791 = vld [vmem:[%s789 + $0x8] sm:$0xff]
      %v792 = vld [vmem:[%s789 + $0x10] sm:$0xff]
      %v793 = vld [vmem:[%s789 + $0x18] sm:$0xff]
      %v794 = vld [vmem:[%s789 + $0x20] sm:$0xff]
      %v795 = vld [vmem:[%s789 + $0x28] sm:$0xff]
      %v796 = vld [vmem:[%s789 + $0x30] sm:$0xff]
      %v797 = vld [vmem:[%s789 + $0x38] sm:$0xff]
      %v798 = vld [vmem:[%s789 + $0x40] sm:$0xff]
      %v799 = vld [vmem:[%s789 + $0x48] sm:$0xff]
      %v800 = vld [vmem:[%s789 + $0x50] sm:$0xff]
      %v801 = vld [vmem:[%s789 + $0x58] sm:$0xff]
      %v802 = vld [vmem:[%s789 + $0x60] sm:$0xff]
      %v803 = vld [vmem:[%s789 + $0x68] sm:$0xff]
      %v804 = vld [vmem:[%s789 + $0x70] sm:$0xff]
      %v805 = vld [vmem:[%s789 + $0x78] sm:$0xff]
      %v806 = vld [vmem:[%s789 + $0x80] sm:$0xff]
      %v807 = vld [vmem:[%s789 + $0x88] sm:$0xff]
      %v808 = vld [vmem:[%s789 + $0x90] sm:$0xff]
      %v809 = vld [vmem:[%s789 + $0x98] sm:$0xff]
      %v810 = vld [vmem:[%s789 + $0xa0] sm:$0xff]
      %v811 = vld [vmem:[%s789 + $0xa8] sm:$0xff]
      %v812 = vld [vmem:[%s789 + $0xb0] sm:$0xff]
      %v813 = vld [vmem:[%s789 + $0xb8] sm:$0xff]
      %v814 = vld [vmem:[%s789 + $0xc0] sm:$0xf]
      %v816 = vsel %vm203, %v790, 0
      %v819 = vsel %vm203, %v791, 0
      %v822 = vsel %vm203, %v792, 0
      %v825 = vsel %vm203, %v793, 0
      %v828 = vsel %vm203, %v794, 0
      %v831 = vsel %vm203, %v795, 0
      %v834 = vsel %vm203, %v796, 0
      %v837 = vsel %vm203, %v797, 0
      %v840 = vsel %vm203, %v798, 0
      %v843 = vsel %vm203, %v799, 0
      %v846 = vsel %vm203, %v800, 0
      %v849 = vsel %vm203, %v801, 0
      %v852 = vsel %vm203, %v802, 0
      %v855 = vsel %vm203, %v803, 0
      %v858 = vsel %vm203, %v804, 0
      %v861 = vsel %vm203, %v805, 0
      %v864 = vsel %vm203, %v806, 0
      %v867 = vsel %vm203, %v807, 0
      %v870 = vsel %vm203, %v808, 0
      %v873 = vsel %vm203, %v809, 0
      %v876 = vsel %vm203, %v810, 0
      %v879 = vsel %vm203, %v811, 0
      %v882 = vsel %vm203, %v812, 0
      %v885 = vsel %vm203, %v813, 0
      %v888 = vsel %vm203, %v814, 0
      %890 = vmatprep.subr.mxu0 0.0
      %891 = vmatpush1.msra.mxu0 %v171
      %892 = vmatprep.subr.mxu0 0.0
      %893 = vmatpush1.msra.mxu0 %v172
      %894 = vmatprep.subr.mxu0 0.0
      %895 = vmatpush1.msra.mxu0 %v173
      %896 = vmatprep.subr.mxu0 0.0
      %897 = vmatpush1.msra.mxu0 %v174
      %898 = vmatprep.subr.mxu0 0.0
      %899 = vmatpush1.msra.mxu0 %v175
      %900 = vmatprep.subr.mxu0 0.0
      %901 = vmatpush1.msra.mxu0 %v176
      %902 = vmatprep.subr.mxu0 0.0
      %903 = vmatpush1.msra.mxu0 %v281
      %904 = vmatprep.subr.mxu0 0.0
      %905 = vmatpush1.msra.mxu0 0.0
      %906 = vmatprep.subr.mxu0 0.0
      %907 = vmatpush1.msra.mxu0 0.0
      %908 = vmatprep.subr.mxu0 0.0
      %909 = vmatpush1.msra.mxu0 0.0
      %910 = vmatprep.subr.mxu0 0.0
      %911 = vmatpush1.msra.mxu0 0.0
      %912 = vmatprep.subr.mxu0 0.0
      %913 = vmatpush1.msra.mxu0 0.0
      %914 = vmatprep.subr.mxu0 0.0
      %915 = vmatpush1.msra.mxu0 0.0
      %916 = vmatprep.subr.mxu0 0.0
      %917 = vmatpush1.msra.mxu0 0.0
      %918 = vmatprep.subr.mxu0 0.0
      %919 = vmatpush1.msra.mxu0 0.0
      %920 = vmatprep.subr.mxu0 0.0
      %921 = vmatpush1.msra.mxu0 0.0
      %922 = vmatprep.subr.mxu0 0.0
      %923 = vmatpush1.msra.mxu0 0.0
      %924 = vmatprep.subr.mxu0 0.0
      %925 = vmatpush1.msra.mxu0 0.0
      %926 = vmatprep.subr.mxu0 0.0
      %927 = vmatpush1.msra.mxu0 0.0
      %928 = vmatprep.subr.mxu0 0.0
      %929 = vmatpush1.msra.mxu0 0.0
      %930 = vmatprep.subr.mxu0 0.0
      %931 = vmatpush1.msra.mxu0 0.0
      %932 = vmatprep.subr.mxu0 0.0
      %933 = vmatpush1.msra.mxu0 0.0
      %934 = vmatprep.subr.mxu0 0.0
      %935 = vmatpush1.msra.mxu0 0.0
      %936 = vmatprep.subr.mxu0 0.0
      %937 = vmatpush1.msra.mxu0 0.0
      %938 = vmatprep.subr.mxu0 0.0
      %939 = vmatpush1.msra.mxu0 0.0
      %940 = vmatprep.subr.mxu0 0.0
      %941 = vmatpush1.msra.mxu0 0.0
      %942 = vmatprep.subr.mxu0 0.0
      %943 = vmatpush1.msra.mxu0 0.0
      %944 = vmatprep.subr.mxu0 0.0
      %945 = vmatpush1.msra.mxu0 0.0
      %946 = vmatprep.subr.mxu0 0.0
      %947 = vmatpush1.msra.mxu0 0.0
      %948 = vmatprep.subr.mxu0 0.0
      %949 = vmatpush1.msra.mxu0 0.0
      %950 = vmatprep.subr.mxu0 0.0
      %951 = vmatpush1.msra.mxu0 0.0
      %952 = vmatprep.subr.mxu0 0.0
      %953 = vmatpush1.msra.mxu0 0.0
      %954 = vmatprep.mubr.f32.mxu0 0.0
      %955 = vmatmul.mubr.f32.gmra.mrb[0].mxu0 %v816
      %v956 = vpop.f32.mrb[0].mxu0
      %v957 = vadd.f32 0.0, %v956
      %v958 = vpop.f32.mrb[0].mxu0
      %959 = vmatprep.mubr.f32.mxu0 0.0
      %960 = vmatmul.mubr.f32.gmra.mrb[0].mxu0 %v819
      %v961 = vpop.f32.mrb[0].mxu0
      %v962 = vadd.f32 0.0, %v961
      %v963 = vpop.f32.mrb[0].mxu0
      %964 = vmatprep.mubr.f32.mxu0 0.0
      %965 = vmatmul.mubr.f32.gmra.mrb[0].mxu0 %v822
      %v966 = vpop.f32.mrb[0].mxu0
      %v967 = vadd.f32 0.0, %v966
      %v968 = vpop.f32.mrb[0].mxu0
      %969 = vmatprep.mubr.f32.mxu0 0.0
      %970 = vmatmul.mubr.f32.gmra.mrb[0].mxu0 %v825
      %v971 = vpop.f32.mrb[0].mxu0
      %v972 = vadd.f32 0.0, %v971
      %v973 = vpop.f32.mrb[0].mxu0
      %974 = vmatprep.mubr.f32.mxu0 0.0
      %975 = vmatmul.mubr.f32.gmra.mrb[0].mxu0 %v828
      %v976 = vpop.f32.mrb[0].mxu0
      %v977 = vadd.f32 0.0, %v976
      %v978 = vpop.f32.mrb[0].mxu0
      %979 = vmatprep.mubr.f32.mxu0 0.0
      %980 = vmatmul.mubr.f32.gmra.mrb[0].mxu0 %v831
      %v981 = vpop.f32.mrb[0].mxu0
      %v982 = vadd.f32 0.0, %v981
      %v983 = vpop.f32.mrb[0].mxu0
      %984 = vmatprep.mubr.f32.mxu0 0.0
      %985 = vmatmul.mubr.f32.gmra.mrb[0].mxu0 %v834
      %v986 = vpop.f32.mrb[0].mxu0
      %v987 = vadd.f32 0.0, %v986
      %v988 = vpop.f32.mrb[0].mxu0
      %989 = vmatprep.mubr.f32.mxu0 0.0
      %990 = vmatmul.mubr.f32.gmra.mrb[0].mxu0 %v837
      %v991 = vpop.f32.mrb[0].mxu0
      %v992 = vadd.f32 0.0, %v991
      %v993 = vpop.f32.mrb[0].mxu0
      %994 = vmatprep.mubr.f32.mxu0 0.0
      %995 = vmatmul.mubr.f32.gmra.mrb[0].mxu0 %v840
      %v996 = vpop.f32.mrb[0].mxu0
      %v997 = vadd.f32 0.0, %v996
      %v998 = vpop.f32.mrb[0].mxu0
      %999 = vmatprep.mubr.f32.mxu0 0.0
      %1000 = vmatmul.mubr.f32.gmra.mrb[0].mxu0 %v843
      %v1001 = vpop.f32.mrb[0].mxu0
      %v1002 = vadd.f32 0.0, %v1001
      %v1003 = vpop.f32.mrb[0].mxu0
      %1004 = vmatprep.mubr.f32.mxu0 0.0
      %1005 = vmatmul.mubr.f32.gmra.mrb[0].mxu0 %v846
      %v1006 = vpop.f32.mrb[0].mxu0
      %v1007 = vadd.f32 0.0, %v1006
      %v1008 = vpop.f32.mrb[0].mxu0
      %1009 = vmatprep.mubr.f32.mxu0 0.0
      %1010 = vmatmul.mubr.f32.gmra.mrb[0].mxu0 %v849
      %v1011 = vpop.f32.mrb[0].mxu0
      %v1012 = vadd.f32 0.0, %v1011
      %v1013 = vpop.f32.mrb[0].mxu0
      %1014 = vmatprep.mubr.f32.mxu0 0.0
      %1015 = vmatmul.mubr.f32.gmra.mrb[0].mxu0 %v852
      %v1016 = vpop.f32.mrb[0].mxu0
      %v1017 = vadd.f32 0.0, %v1016
      %v1018 = vpop.f32.mrb[0].mxu0
      %1019 = vmatprep.mubr.f32.mxu0 0.0
      %1020 = vmatmul.mubr.f32.gmra.mrb[0].mxu0 %v855
      %v1021 = vpop.f32.mrb[0].mxu0
      %v1022 = vadd.f32 0.0, %v1021
      %v1023 = vpop.f32.mrb[0].mxu0
      %1024 = vmatprep.mubr.f32.mxu0 0.0
      %1025 = vmatmul.mubr.f32.gmra.mrb[0].mxu0 %v858
      %v1026 = vpop.f32.mrb[0].mxu0
      %v1027 = vadd.f32 0.0, %v1026
      %v1028 = vpop.f32.mrb[0].mxu0
      %1029 = vmatprep.mubr.f32.mxu0 0.0
      %1030 = vmatmul.mubr.f32.gmra.mrb[0].mxu0 %v861
      %v1031 = vpop.f32.mrb[0].mxu0
      %v1032 = vadd.f32 0.0, %v1031
      %v1033 = vpop.f32.mrb[0].mxu0
      %1034 = vmatprep.mubr.f32.mxu0 0.0
      %1035 = vmatmul.mubr.f32.gmra.mrb[0].mxu0 %v864
      %v1036 = vpop.f32.mrb[0].mxu0
      %v1037 = vadd.f32 0.0, %v1036
      %v1038 = vpop.f32.mrb[0].mxu0
      %1039 = vmatprep.mubr.f32.mxu0 0.0
      %1040 = vmatmul.mubr.f32.gmra.mrb[0].mxu0 %v867
      %v1041 = vpop.f32.mrb[0].mxu0
      %v1042 = vadd.f32 0.0, %v1041
      %v1043 = vpop.f32.mrb[0].mxu0
      %1044 = vmatprep.mubr.f32.mxu0 0.0
      %1045 = vmatmul.mubr.f32.gmra.mrb[0].mxu0 %v870
      %v1046 = vpop.f32.mrb[0].mxu0
      %v1047 = vadd.f32 0.0, %v1046
      %v1048 = vpop.f32.mrb[0].mxu0
      %1049 = vmatprep.mubr.f32.mxu0 0.0
      %1050 = vmatmul.mubr.f32.gmra.mrb[0].mxu0 %v873
      %v1051 = vpop.f32.mrb[0].mxu0
      %v1052 = vadd.f32 0.0, %v1051
      %v1053 = vpop.f32.mrb[0].mxu0
      %1054 = vmatprep.mubr.f32.mxu0 0.0
      %1055 = vmatmul.mubr.f32.gmra.mrb[0].mxu0 %v876
      %v1056 = vpop.f32.mrb[0].mxu0
      %v1057 = vadd.f32 0.0, %v1056
      %v1058 = vpop.f32.mrb[0].mxu0
      %1059 = vmatprep.mubr.f32.mxu0 0.0
      %1060 = vmatmul.mubr.f32.gmra.mrb[0].mxu0 %v879
      %v1061 = vpop.f32.mrb[0].mxu0
      %v1062 = vadd.f32 0.0, %v1061
      %v1063 = vpop.f32.mrb[0].mxu0
      %1064 = vmatprep.mubr.f32.mxu0 0.0
      %1065 = vmatmul.mubr.f32.gmra.mrb[0].mxu0 %v882
      %v1066 = vpop.f32.mrb[0].mxu0
      %v1067 = vadd.f32 0.0, %v1066
      %v1068 = vpop.f32.mrb[0].mxu0
      %1069 = vmatprep.mubr.f32.mxu0 0.0
      %1070 = vmatmul.mubr.f32.gmra.mrb[0].mxu0 %v885
      %v1071 = vpop.f32.mrb[0].mxu0
      %v1072 = vadd.f32 0.0, %v1071
      %v1073 = vpop.f32.mrb[0].mxu0
      %1074 = vmatprep.mubr.f32.mxu0 0.0
      %1075 = vmatmul.mubr.f32.gmra.mrb[0].mxu0 %v888
      %v1076 = vpop.f32.mrb[0].mxu0
      %v1077 = vadd.f32 0.0, %v1076
      %v1078 = vpop.f32.mrb[0].mxu0
      %1079 = vdwg.mxu0
      %v1080 = vmax.f32 %v764, %v957
      %v1081 = vmax.f32 %v765, %v962
      %v1082 = vmax.f32 %v766, %v967
      %v1083 = vmax.f32 %v767, %v972
      %v1084 = vmax.f32 %v768, %v977
      %v1085 = vmax.f32 %v769, %v982
      %v1086 = vmax.f32 %v770, %v987
      %v1087 = vmax.f32 %v771, %v992
      %v1088 = vmax.f32 %v772, %v997
      %v1089 = vmax.f32 %v773, %v1002
      %v1090 = vmax.f32 %v774, %v1007
      %v1091 = vmax.f32 %v775, %v1012
      %v1092 = vmax.f32 %v776, %v1017
      %v1093 = vmax.f32 %v777, %v1022
      %v1094 = vmax.f32 %v778, %v1027
      %v1095 = vmax.f32 %v779, %v1032
      %v1096 = vmax.f32 %v780, %v1037
      %v1097 = vmax.f32 %v781, %v1042
      %v1098 = vmax.f32 %v782, %v1047
      %v1099 = vmax.f32 %v783, %v1052
      %v1100 = vmax.f32 %v784, %v1057
      %v1101 = vmax.f32 %v785, %v1062
      %v1102 = vmax.f32 %v786, %v1067
      %v1103 = vmax.f32 %v787, %v1072
      %v1104 = vmax.f32 %v788, %v1077
      %s1105 = scalar_lea.vmem %s165, 600
      %v1106 = vld [vmem:[%s1105] sm:$0xff]
      %v1107 = vld [vmem:[%s1105 + $0x8] sm:$0xff]
      %v1108 = vld [vmem:[%s1105 + $0x10] sm:$0xff]
      %v1109 = vld [vmem:[%s1105 + $0x18] sm:$0xff]
      %v1110 = vld [vmem:[%s1105 + $0x20] sm:$0xff]
      %v1111 = vld [vmem:[%s1105 + $0x28] sm:$0xff]
      %v1112 = vld [vmem:[%s1105 + $0x30] sm:$0xff]
      %v1113 = vld [vmem:[%s1105 + $0x38] sm:$0xff]
      %v1114 = vld [vmem:[%s1105 + $0x40] sm:$0xff]
      %v1115 = vld [vmem:[%s1105 + $0x48] sm:$0xff]
      %v1116 = vld [vmem:[%s1105 + $0x50] sm:$0xff]
      %v1117 = vld [vmem:[%s1105 + $0x58] sm:$0xff]
      %v1118 = vld [vmem:[%s1105 + $0x60] sm:$0xff]
      %v1119 = vld [vmem:[%s1105 + $0x68] sm:$0xff]
      %v1120 = vld [vmem:[%s1105 + $0x70] sm:$0xff]
      %v1121 = vld [vmem:[%s1105 + $0x78] sm:$0xff]
      %v1122 = vld [vmem:[%s1105 + $0x80] sm:$0xff]
      %v1123 = vld [vmem:[%s1105 + $0x88] sm:$0xff]
      %v1124 = vld [vmem:[%s1105 + $0x90] sm:$0xff]
      %v1125 = vld [vmem:[%s1105 + $0x98] sm:$0xff]
      %v1126 = vld [vmem:[%s1105 + $0xa0] sm:$0xff]
      %v1127 = vld [vmem:[%s1105 + $0xa8] sm:$0xff]
      %v1128 = vld [vmem:[%s1105 + $0xb0] sm:$0xff]
      %v1129 = vld [vmem:[%s1105 + $0xb8] sm:$0xff]
      %v1130 = vld [vmem:[%s1105 + $0xc0] sm:$0xf]
      %v1132 = vsel %vm203, %v1106, 0
      %v1135 = vsel %vm203, %v1107, 0
      %v1138 = vsel %vm203, %v1108, 0
      %v1141 = vsel %vm203, %v1109, 0
      %v1144 = vsel %vm203, %v1110, 0
      %v1147 = vsel %vm203, %v1111, 0
      %v1150 = vsel %vm203, %v1112, 0
      %v1153 = vsel %vm203, %v1113, 0
      %v1156 = vsel %vm203, %v1114, 0
      %v1159 = vsel %vm203, %v1115, 0
      %v1162 = vsel %vm203, %v1116, 0
      %v1165 = vsel %vm203, %v1117, 0
      %v1168 = vsel %vm203, %v1118, 0
      %v1171 = vsel %vm203, %v1119, 0
      %v1174 = vsel %vm203, %v1120, 0
      %v1177 = vsel %vm203, %v1121, 0
      %v1180 = vsel %vm203, %v1122, 0
      %v1183 = vsel %vm203, %v1123, 0
      %v1186 = vsel %vm203, %v1124, 0
      %v1189 = vsel %vm203, %v1125, 0
      %v1192 = vsel %vm203, %v1126, 0
      %v1195 = vsel %vm203, %v1127, 0
      %v1198 = vsel %vm203, %v1128, 0
      %v1201 = vsel %vm203, %v1129, 0
      %v1204 = vsel %vm203, %v1130, 0
      %1206 = vmatprep.subr.mxu0 0.0
      %1207 = vmatpush1.msra.mxu0 %v171
      %1208 = vmatprep.subr.mxu0 0.0
      %1209 = vmatpush1.msra.mxu0 %v172
      %1210 = vmatprep.subr.mxu0 0.0
      %1211 = vmatpush1.msra.mxu0 %v173
      %1212 = vmatprep.subr.mxu0 0.0
      %1213 = vmatpush1.msra.mxu0 %v174
      %1214 = vmatprep.subr.mxu0 0.0
      %1215 = vmatpush1.msra.mxu0 %v175
      %1216 = vmatprep.subr.mxu0 0.0
      %1217 = vmatpush1.msra.mxu0 %v176
      %1218 = vmatprep.subr.mxu0 0.0
      %1219 = vmatpush1.msra.mxu0 %v281
      %1220 = vmatprep.subr.mxu0 0.0
      %1221 = vmatpush1.msra.mxu0 0.0
      %1222 = vmatprep.subr.mxu0 0.0
      %1223 = vmatpush1.msra.mxu0 0.0
      %1224 = vmatprep.subr.mxu0 0.0
      %1225 = vmatpush1.msra.mxu0 0.0
      %1226 = vmatprep.subr.mxu0 0.0
      %1227 = vmatpush1.msra.mxu0 0.0
      %1228 = vmatprep.subr.mxu0 0.0
      %1229 = vmatpush1.msra.mxu0 0.0
      %1230 = vmatprep.subr.mxu0 0.0
      %1231 = vmatpush1.msra.mxu0 0.0
      %1232 = vmatprep.subr.mxu0 0.0
      %1233 = vmatpush1.msra.mxu0 0.0
      %1234 = vmatprep.subr.mxu0 0.0
      %1235 = vmatpush1.msra.mxu0 0.0
      %1236 = vmatprep.subr.mxu0 0.0
      %1237 = vmatpush1.msra.mxu0 0.0
      %1238 = vmatprep.subr.mxu0 0.0
      %1239 = vmatpush1.msra.mxu0 0.0
      %1240 = vmatprep.subr.mxu0 0.0
      %1241 = vmatpush1.msra.mxu0 0.0
      %1242 = vmatprep.subr.mxu0 0.0
      %1243 = vmatpush1.msra.mxu0 0.0
      %1244 = vmatprep.subr.mxu0 0.0
      %1245 = vmatpush1.msra.mxu0 0.0
      %1246 = vmatprep.subr.mxu0 0.0
      %1247 = vmatpush1.msra.mxu0 0.0
      %1248 = vmatprep.subr.mxu0 0.0
      %1249 = vmatpush1.msra.mxu0 0.0
      %1250 = vmatprep.subr.mxu0 0.0
      %1251 = vmatpush1.msra.mxu0 0.0
      %1252 = vmatprep.subr.mxu0 0.0
      %1253 = vmatpush1.msra.mxu0 0.0
      %1254 = vmatprep.subr.mxu0 0.0
      %1255 = vmatpush1.msra.mxu0 0.0
      %1256 = vmatprep.subr.mxu0 0.0
      %1257 = vmatpush1.msra.mxu0 0.0
      %1258 = vmatprep.subr.mxu0 0.0
      %1259 = vmatpush1.msra.mxu0 0.0
      %1260 = vmatprep.subr.mxu0 0.0
      %1261 = vmatpush1.msra.mxu0 0.0
      %1262 = vmatprep.subr.mxu0 0.0
      %1263 = vmatpush1.msra.mxu0 0.0
      %1264 = vmatprep.subr.mxu0 0.0
      %1265 = vmatpush1.msra.mxu0 0.0
      %1266 = vmatprep.subr.mxu0 0.0
      %1267 = vmatpush1.msra.mxu0 0.0
      %1268 = vmatprep.subr.mxu0 0.0
      %1269 = vmatpush1.msra.mxu0 0.0
      %1270 = vmatprep.mubr.f32.mxu0 0.0
      %1271 = vmatmul.mubr.f32.gmra.mrb[0].mxu0 %v1132
      %v1272 = vpop.f32.mrb[0].mxu0
      %v1273 = vadd.f32 0.0, %v1272
      %v1274 = vpop.f32.mrb[0].mxu0
      %1275 = vmatprep.mubr.f32.mxu0 0.0
      %1276 = vmatmul.mubr.f32.gmra.mrb[0].mxu0 %v1135
      %v1277 = vpop.f32.mrb[0].mxu0
      %v1278 = vadd.f32 0.0, %v1277
      %v1279 = vpop.f32.mrb[0].mxu0
      %1280 = vmatprep.mubr.f32.mxu0 0.0
      %1281 = vmatmul.mubr.f32.gmra.mrb[0].mxu0 %v1138
      %v1282 = vpop.f32.mrb[0].mxu0
      %v1283 = vadd.f32 0.0, %v1282
      %v1284 = vpop.f32.mrb[0].mxu0
      %1285 = vmatprep.mubr.f32.mxu0 0.0
      %1286 = vmatmul.mubr.f32.gmra.mrb[0].mxu0 %v1141
      %v1287 = vpop.f32.mrb[0].mxu0
      %v1288 = vadd.f32 0.0, %v1287
      %v1289 = vpop.f32.mrb[0].mxu0
      %1290 = vmatprep.mubr.f32.mxu0 0.0
      %1291 = vmatmul.mubr.f32.gmra.mrb[0].mxu0 %v1144
      %v1292 = vpop.f32.mrb[0].mxu0
      %v1293 = vadd.f32 0.0, %v1292
      %v1294 = vpop.f32.mrb[0].mxu0
      %1295 = vmatprep.mubr.f32.mxu0 0.0
      %1296 = vmatmul.mubr.f32.gmra.mrb[0].mxu0 %v1147
      %v1297 = vpop.f32.mrb[0].mxu0
      %v1298 = vadd.f32 0.0, %v1297
      %v1299 = vpop.f32.mrb[0].mxu0
      %1300 = vmatprep.mubr.f32.mxu0 0.0
      %1301 = vmatmul.mubr.f32.gmra.mrb[0].mxu0 %v1150
      %v1302 = vpop.f32.mrb[0].mxu0
      %v1303 = vadd.f32 0.0, %v1302
      %v1304 = vpop.f32.mrb[0].mxu0
      %1305 = vmatprep.mubr.f32.mxu0 0.0
      %1306 = vmatmul.mubr.f32.gmra.mrb[0].mxu0 %v1153
      %v1307 = vpop.f32.mrb[0].mxu0
      %v1308 = vadd.f32 0.0, %v1307
      %v1309 = vpop.f32.mrb[0].mxu0
      %1310 = vmatprep.mubr.f32.mxu0 0.0
      %1311 = vmatmul.mubr.f32.gmra.mrb[0].mxu0 %v1156
      %v1312 = vpop.f32.mrb[0].mxu0
      %v1313 = vadd.f32 0.0, %v1312
      %v1314 = vpop.f32.mrb[0].mxu0
      %1315 = vmatprep.mubr.f32.mxu0 0.0
      %1316 = vmatmul.mubr.f32.gmra.mrb[0].mxu0 %v1159
      %v1317 = vpop.f32.mrb[0].mxu0
      %v1318 = vadd.f32 0.0, %v1317
      %v1319 = vpop.f32.mrb[0].mxu0
      %1320 = vmatprep.mubr.f32.mxu0 0.0
      %1321 = vmatmul.mubr.f32.gmra.mrb[0].mxu0 %v1162
      %v1322 = vpop.f32.mrb[0].mxu0
      %v1323 = vadd.f32 0.0, %v1322
      %v1324 = vpop.f32.mrb[0].mxu0
      %1325 = vmatprep.mubr.f32.mxu0 0.0
      %1326 = vmatmul.mubr.f32.gmra.mrb[0].mxu0 %v1165
      %v1327 = vpop.f32.mrb[0].mxu0
      %v1328 = vadd.f32 0.0, %v1327
      %v1329 = vpop.f32.mrb[0].mxu0
      %1330 = vmatprep.mubr.f32.mxu0 0.0
      %1331 = vmatmul.mubr.f32.gmra.mrb[0].mxu0 %v1168
      %v1332 = vpop.f32.mrb[0].mxu0
      %v1333 = vadd.f32 0.0, %v1332
      %v1334 = vpop.f32.mrb[0].mxu0
      %1335 = vmatprep.mubr.f32.mxu0 0.0
      %1336 = vmatmul.mubr.f32.gmra.mrb[0].mxu0 %v1171
      %v1337 = vpop.f32.mrb[0].mxu0
      %v1338 = vadd.f32 0.0, %v1337
      %v1339 = vpop.f32.mrb[0].mxu0
      %1340 = vmatprep.mubr.f32.mxu0 0.0
      %1341 = vmatmul.mubr.f32.gmra.mrb[0].mxu0 %v1174
      %v1342 = vpop.f32.mrb[0].mxu0
      %v1343 = vadd.f32 0.0, %v1342
      %v1344 = vpop.f32.mrb[0].mxu0
      %1345 = vmatprep.mubr.f32.mxu0 0.0
      %1346 = vmatmul.mubr.f32.gmra.mrb[0].mxu0 %v1177
      %v1347 = vpop.f32.mrb[0].mxu0
      %v1348 = vadd.f32 0.0, %v1347
      %v1349 = vpop.f32.mrb[0].mxu0
      %1350 = vmatprep.mubr.f32.mxu0 0.0
      %1351 = vmatmul.mubr.f32.gmra.mrb[0].mxu0 %v1180
      %v1352 = vpop.f32.mrb[0].mxu0
      %v1353 = vadd.f32 0.0, %v1352
      %v1354 = vpop.f32.mrb[0].mxu0
      %1355 = vmatprep.mubr.f32.mxu0 0.0
      %1356 = vmatmul.mubr.f32.gmra.mrb[0].mxu0 %v1183
      %v1357 = vpop.f32.mrb[0].mxu0
      %v1358 = vadd.f32 0.0, %v1357
      %v1359 = vpop.f32.mrb[0].mxu0
      %1360 = vmatprep.mubr.f32.mxu0 0.0
      %1361 = vmatmul.mubr.f32.gmra.mrb[0].mxu0 %v1186
      %v1362 = vpop.f32.mrb[0].mxu0
      %v1363 = vadd.f32 0.0, %v1362
      %v1364 = vpop.f32.mrb[0].mxu0
      %1365 = vmatprep.mubr.f32.mxu0 0.0
      %1366 = vmatmul.mubr.f32.gmra.mrb[0].mxu0 %v1189
      %v1367 = vpop.f32.mrb[0].mxu0
      %v1368 = vadd.f32 0.0, %v1367
      %v1369 = vpop.f32.mrb[0].mxu0
      %1370 = vmatprep.mubr.f32.mxu0 0.0
      %1371 = vmatmul.mubr.f32.gmra.mrb[0].mxu0 %v1192
      %v1372 = vpop.f32.mrb[0].mxu0
      %v1373 = vadd.f32 0.0, %v1372
      %v1374 = vpop.f32.mrb[0].mxu0
      %1375 = vmatprep.mubr.f32.mxu0 0.0
      %1376 = vmatmul.mubr.f32.gmra.mrb[0].mxu0 %v1195
      %v1377 = vpop.f32.mrb[0].mxu0
      %v1378 = vadd.f32 0.0, %v1377
      %v1379 = vpop.f32.mrb[0].mxu0
      %1380 = vmatprep.mubr.f32.mxu0 0.0
      %1381 = vmatmul.mubr.f32.gmra.mrb[0].mxu0 %v1198
      %v1382 = vpop.f32.mrb[0].mxu0
      %v1383 = vadd.f32 0.0, %v1382
      %v1384 = vpop.f32.mrb[0].mxu0
      %1385 = vmatprep.mubr.f32.mxu0 0.0
      %1386 = vmatmul.mubr.f32.gmra.mrb[0].mxu0 %v1201
      %v1387 = vpop.f32.mrb[0].mxu0
      %v1388 = vadd.f32 0.0, %v1387
      %v1389 = vpop.f32.mrb[0].mxu0
      %1390 = vmatprep.mubr.f32.mxu0 0.0
      %1391 = vmatmul.mubr.f32.gmra.mrb[0].mxu0 %v1204
      %v1392 = vpop.f32.mrb[0].mxu0
      %v1393 = vadd.f32 0.0, %v1392
      %v1394 = vpop.f32.mrb[0].mxu0
      %1395 = vdwg.mxu0
      %v1396 = vmax.f32 %v1080, %v1273
      %v1397 = vmax.f32 %v1081, %v1278
      %v1398 = vmax.f32 %v1082, %v1283
      %v1399 = vmax.f32 %v1083, %v1288
      %v1400 = vmax.f32 %v1084, %v1293
      %v1401 = vmax.f32 %v1085, %v1298
      %v1402 = vmax.f32 %v1086, %v1303
      %v1403 = vmax.f32 %v1087, %v1308
      %v1404 = vmax.f32 %v1088, %v1313
      %v1405 = vmax.f32 %v1089, %v1318
      %v1406 = vmax.f32 %v1090, %v1323
      %v1407 = vmax.f32 %v1091, %v1328
      %v1408 = vmax.f32 %v1092, %v1333
      %v1409 = vmax.f32 %v1093, %v1338
      %v1410 = vmax.f32 %v1094, %v1343
      %v1411 = vmax.f32 %v1095, %v1348
      %v1412 = vmax.f32 %v1096, %v1353
      %v1413 = vmax.f32 %v1097, %v1358
      %v1414 = vmax.f32 %v1098, %v1363
      %v1415 = vmax.f32 %v1099, %v1368
      %v1416 = vmax.f32 %v1100, %v1373
      %v1417 = vmax.f32 %v1101, %v1378
      %v1418 = vmax.f32 %v1102, %v1383
      %v1419 = vmax.f32 %v1103, %v1388
      %v1420 = vmax.f32 %v1104, %v1393
      %v1421 = vld [vmem:[%s2] sm:$0x1]
      %v1423 = vlaneseq
      %v1424 = vshrl.u32 %v1423, 7
      %v1425 = vsub.s32 0, %v1424
      %v1426 = vrot.slane %v1421, %v1425
      %v1428 = vadd.f32 %v1396, %v1426
      %v1429 = vadd.f32 %v1397, %v1426
      %v1430 = vadd.f32 %v1398, %v1426
      %v1431 = vadd.f32 %v1399, %v1426
      %v1432 = vadd.f32 %v1400, %v1426
      %v1433 = vadd.f32 %v1401, %v1426
      %v1434 = vadd.f32 %v1402, %v1426
      %v1435 = vadd.f32 %v1403, %v1426
      %v1436 = vadd.f32 %v1404, %v1426
      %v1437 = vadd.f32 %v1405, %v1426
      %v1438 = vadd.f32 %v1406, %v1426
      %v1439 = vadd.f32 %v1407, %v1426
      %v1440 = vadd.f32 %v1408, %v1426
      %v1441 = vadd.f32 %v1409, %v1426
      %v1442 = vadd.f32 %v1410, %v1426
      %v1443 = vadd.f32 %v1411, %v1426
      %v1444 = vadd.f32 %v1412, %v1426
      %v1445 = vadd.f32 %v1413, %v1426
      %v1446 = vadd.f32 %v1414, %v1426
      %v1447 = vadd.f32 %v1415, %v1426
      %v1448 = vadd.f32 %v1416, %v1426
      %v1449 = vadd.f32 %v1417, %v1426
      %v1450 = vadd.f32 %v1418, %v1426
      %v1451 = vadd.f32 %v1419, %v1426
      %v1452 = vadd.f32 %v1420, %v1426
      %v1453 = vmax.f32 %v1428, 0.0
      %v1454 = vmax.f32 %v1429, 0.0
      %v1455 = vmax.f32 %v1430, 0.0
      %v1456 = vmax.f32 %v1431, 0.0
      %v1457 = vmax.f32 %v1432, 0.0
      %v1458 = vmax.f32 %v1433, 0.0
      %v1459 = vmax.f32 %v1434, 0.0
      %v1460 = vmax.f32 %v1435, 0.0
      %v1461 = vmax.f32 %v1436, 0.0
      %v1462 = vmax.f32 %v1437, 0.0
      %v1463 = vmax.f32 %v1438, 0.0
      %v1464 = vmax.f32 %v1439, 0.0
      %v1465 = vmax.f32 %v1440, 0.0
      %v1466 = vmax.f32 %v1441, 0.0
      %v1467 = vmax.f32 %v1442, 0.0
      %v1468 = vmax.f32 %v1443, 0.0
      %v1469 = vmax.f32 %v1444, 0.0
      %v1470 = vmax.f32 %v1445, 0.0
      %v1471 = vmax.f32 %v1446, 0.0
      %v1472 = vmax.f32 %v1447, 0.0
      %v1473 = vmax.f32 %v1448, 0.0
      %v1474 = vmax.f32 %v1449, 0.0
      %v1475 = vmax.f32 %v1450, 0.0
      %v1476 = vmax.f32 %v1451, 0.0
      %v1477 = vmax.f32 %v1452, 0.0
      %vm1478 = vcmask 261120
      %1479 = vst.msk [vmem:[%s170] sm:$0xff] %vm1478, %v1453
      %1480 = vst.msk [vmem:[%s170 + $0x8] sm:$0xff] %vm1478, %v1454
      %1481 = vst.msk [vmem:[%s170 + $0x10] sm:$0xff] %vm1478, %v1455
      %1482 = vst.msk [vmem:[%s170 + $0x18] sm:$0xff] %vm1478, %v1456
      %1483 = vst.msk [vmem:[%s170 + $0x20] sm:$0xff] %vm1478, %v1457
      %1484 = vst.msk [vmem:[%s170 + $0x28] sm:$0xff] %vm1478, %v1458
      %1485 = vst.msk [vmem:[%s170 + $0x30] sm:$0xff] %vm1478, %v1459
      %1486 = vst.msk [vmem:[%s170 + $0x38] sm:$0xff] %vm1478, %v1460
      %1487 = vst.msk [vmem:[%s170 + $0x40] sm:$0xff] %vm1478, %v1461
      %1488 = vst.msk [vmem:[%s170 + $0x48] sm:$0xff] %vm1478, %v1462
      %1489 = vst.msk [vmem:[%s170 + $0x50] sm:$0xff] %vm1478, %v1463
      %1490 = vst.msk [vmem:[%s170 + $0x58] sm:$0xff] %vm1478, %v1464
      %1491 = vst.msk [vmem:[%s170 + $0x60] sm:$0xff] %vm1478, %v1465
      %1492 = vst.msk [vmem:[%s170 + $0x68] sm:$0xff] %vm1478, %v1466
      %1493 = vst.msk [vmem:[%s170 + $0x70] sm:$0xff] %vm1478, %v1467
      %1494 = vst.msk [vmem:[%s170 + $0x78] sm:$0xff] %vm1478, %v1468
      %1495 = vst.msk [vmem:[%s170 + $0x80] sm:$0xff] %vm1478, %v1469
      %1496 = vst.msk [vmem:[%s170 + $0x88] sm:$0xff] %vm1478, %v1470
      %1497 = vst.msk [vmem:[%s170 + $0x90] sm:$0xff] %vm1478, %v1471
      %1498 = vst.msk [vmem:[%s170 + $0x98] sm:$0xff] %vm1478, %v1472
      %1499 = vst.msk [vmem:[%s170 + $0xa0] sm:$0xff] %vm1478, %v1473
      %1500 = vst.msk [vmem:[%s170 + $0xa8] sm:$0xff] %vm1478, %v1474
      %1501 = vst.msk [vmem:[%s170 + $0xb0] sm:$0xff] %vm1478, %v1475
      %1502 = vst.msk [vmem:[%s170 + $0xb8] sm:$0xff] %vm1478, %v1476
      %vm1503 = vcmask 257024
      %1504 = vst.msk [vmem:[%s170 + $0xc0] sm:$0xf] %vm1503, %v1477
      %p1505 = scmp.lt.s32.totalorder %s14, 1
      %s1506 = scalar_select %p1505, %s14, 1
      %s1507 = smul.addr %s1506, 25
      %s1508 = smul.addr %s1507, 8
      %s1509 = scalar_lea.vmem %s3, %s1508
      // Predicated region
      $region33: #{cnn_femnist_forward.3} parent=31 // pred_check
        %p1510 = pneg %p100
      $region34: #{cnn_femnist_forward.3} parent=31 // pred_check_branch
        %1512 = sbr.rel (%p1510) target = $region36
      $region35: #{cnn_femnist_forward.3} parent=31 // pred_region
        _
      $region36: #{cnn_femnist_forward.3} parent=31 // pred_fallthru
        _
    $region32: #{cnn_femnist_forward.3} parent=5 // pred_fallthru
      _
    %p1513 = scmp.le.s32.totalorder 2, %s9
    // Predicated region
    $region37: #{cnn_femnist_forward.3} parent=5 // pred_check
      %p1514 = pneg %p1513
    $region38: #{cnn_femnist_forward.3} parent=5 // pred_check_branch
      %1516 = sbr.rel (%p1514) target = $region40
    $region39: #{cnn_femnist_forward.3} parent=5 // pred_region
      %s1517 = ssub.s32 %s9, 2
      // Predicated region
      $region41: #{cnn_femnist_forward.3} parent=39 // pred_check
        %p1518 = pneg %p106
      $region42: #{cnn_femnist_forward.3} parent=39 // pred_check_branch
        %1520 = sbr.rel (%p1518) target = $region44
      $region43: #{cnn_femnist_forward.3} parent=39 // pred_region
        %p1521 = scmp.lt.s32.totalorder %s15, 1
        %s1522 = scalar_select %p1521, %s15, 1
        %s1523 = smul.addr %s1522, 25
        %s1524 = smul.addr %s1523, 8
        %s1525 = scalar_lea.vmem %s3, %s1524
      $region44: #{cnn_femnist_forward.3} parent=39 // pred_fallthru
        _
    $region40: #{cnn_femnist_forward.3} parent=5 // pred_fallthru
      _
  $region6: #{cnn_femnist_forward.3} parent=0 // loop_footer
    %s13 = sadd.s32 1, %s9
  $region7: #{cnn_femnist_forward.3} parent=0 // loop_footer_branch
    %8 = sbr.rel target = $region3
  $region8: #{cnn_femnist_forward.3} parent=0 // loop_exit
    _

// kernel: cnn_femnist_forward.4
$region0: #{cnn_femnist_forward.4}
  #allocation0 [shape = 'u32[]', space=smem, size = 0x4, offset = 0x4, fixed_abs, tag = 'smem constant byte address 0x4 - core index']
  #allocation1 [shape = 'u32[144,128]{1,0:T(1,128)}', space=vmem, size = 0x12000, scoped, tag = 'internal scratch']
  %s0 = inlined_call_operand.vmem [shape: f32[2,4,49,288], index: 0, kind: input, shape index: {}]
  %s1 = inlined_call_operand.vmem [shape: f32[288,64], index: 1, kind: input, shape index: {}]
  %s2 = inlined_call_operand.vmem [shape: f32[1,64], index: 2, kind: input, shape index: {}]
  %s3 = inlined_call_operand.vmem [shape: f32[2,49,64], index: 3, kind: output, shape index: {}]
  %s4 = sld [smem:[#allocation0]]
  $region45: #{cnn_femnist_forward.4} parent=0
    _
  %s6 = ssub.s32 1, %s4
  %s7 = scalar_select 0, %s6, %s4
  loop: start=0, step=1, limit=4
  $region2: #{cnn_femnist_forward.4} parent=0 // loop_pre_header
    _
  $region3: #{cnn_femnist_forward.4} parent=0 // loop_header
    %s9 = sphi 0, %s13
    %p10 = scmp.ge.s32.totalorder %s9, 4
    %s19 = sphi 0, %s21
    %s22 = sphi 0, %s19
    %s23 = sphi 0, %s22
    %s39 = sphi 0, %s23
    %s43 = sphi 0, %s43
    %s45 = sphi 0, %s43
    %s46 = sphi 0, %s45
    %s60 = sphi 0, %s46
    %s64 = sphi 0, %s64
    %s66 = sphi 0, %s64
    %s67 = sphi 0, %s66
    %s81 = sphi 0, %s67
    %s87 = sphi 0, %s89
    %s90 = sphi 0, %s87
    %s91 = sphi 0, %s90
    %s107 = sphi 0, %s91
  $region4: #{cnn_femnist_forward.4} parent=0 // loop_header_branch
    %12 = sbr.rel (%p10) target = $region8
  $region5: #{cnn_femnist_forward.4} parent=0 // loop_body
    %s14 = ssub.s32 %s9, 1
    %s15 = ssub.s32 %s9, 2
    %s16 = sadd.s32 %s9, 1
    %s17 = ssub.s32 %s9, %s16
    %p18 = scmp.eq.s32.totalorder %s17, 0
    %s20 = sadd.s32 %s19, 1
    %s21 = scalar_select %p18, %s19, %s20
    %p24 = pneg %p18
    %p25 = scmp.eq.s32.totalorder %s9, 1
    %p26 = por %p24, %p25
    %p27 = scmp.ne.s32.totalorder %s19, %s22
    %p28 = scmp.eq.s32.totalorder %s9, 0
    %p29 = por %p27, %p28
    %p30 = scmp.ne.s32.totalorder %s19, %s22
    %p31 = scmp.eq.s32.totalorder %s14, 1
    %p32 = por %p30, %p31
    %p33 = scmp.ne.s32.totalorder %s22, %s23
    %p34 = scmp.eq.s32.totalorder %s14, 0
    %p35 = por %p33, %p34
    %p36 = scmp.ne.s32.totalorder %s22, %s23
    %p37 = scmp.eq.s32.totalorder %s15, 1
    %p38 = por %p36, %p37
    %p40 = scmp.ne.s32.totalorder %s23, %s39
    %p41 = scmp.eq.s32.totalorder %s15, 0
    %p42 = por %p40, %p41
    %s44 = sadd.s32 %s43, 1
    %p47 = scmp.eq.s32.totalorder %s9, 1
    %p48 = scmp.ne.s32.totalorder %s43, %s45
    %p49 = scmp.eq.s32.totalorder %s9, 0
    %p50 = por %p48, %p49
    %p51 = scmp.ne.s32.totalorder %s43, %s45
    %p52 = scmp.eq.s32.totalorder %s14, 1
    %p53 = por %p51, %p52
    %p54 = scmp.ne.s32.totalorder %s45, %s46
    %p55 = scmp.eq.s32.totalorder %s14, 0
    %p56 = por %p54, %p55
    %p57 = scmp.ne.s32.totalorder %s45, %s46
    %p58 = scmp.eq.s32.totalorder %s15, 1
    %p59 = por %p57, %p58
    %p61 = scmp.ne.s32.totalorder %s46, %s60
    %p62 = scmp.eq.s32.totalorder %s15, 0
    %p63 = por %p61, %p62
    %s65 = sadd.s32 %s64, 1
    %p68 = scmp.eq.s32.totalorder %s9, 1
    %p69 = scmp.ne.s32.totalorder %s64, %s66
    %p70 = scmp.eq.s32.totalorder %s9, 0
    %p71 = por %p69, %p70
    %p72 = scmp.ne.s32.totalorder %s64, %s66
    %p73 = scmp.eq.s32.totalorder %s14, 1
    %p74 = por %p72, %p73
    %p75 = scmp.ne.s32.totalorder %s66, %s67
    %p76 = scmp.eq.s32.totalorder %s14, 0
    %p77 = por %p75, %p76
    %p78 = scmp.ne.s32.totalorder %s66, %s67
    %p79 = scmp.eq.s32.totalorder %s15, 1
    %p80 = por %p78, %p79
    %p82 = scmp.ne.s32.totalorder %s67, %s81
    %p83 = scmp.eq.s32.totalorder %s15, 0
    %p84 = por %p82, %p83
    %s85 = ssub.s32 %s9, %s16
    %p86 = scmp.eq.s32.totalorder %s85, 0
    %s88 = sadd.s32 %s87, 1
    %s89 = scalar_select %p86, %s87, %s88
    %p92 = pneg %p86
    %p93 = scmp.eq.s32.totalorder %s9, 1
    %p94 = por %p92, %p93
    %p95 = scmp.ne.s32.totalorder %s87, %s90
    %p96 = scmp.eq.s32.totalorder %s9, 0
    %p97 = por %p95, %p96
    %p98 = scmp.ne.s32.totalorder %s87, %s90
    %p99 = scmp.eq.s32.totalorder %s14, 1
    %p100 = por %p98, %p99
    %p101 = scmp.ne.s32.totalorder %s90, %s91
    %p102 = scmp.eq.s32.totalorder %s14, 0
    %p103 = por %p101, %p102
    %p104 = scmp.ne.s32.totalorder %s90, %s91
    %p105 = scmp.eq.s32.totalorder %s15, 1
    %p106 = por %p104, %p105
    %p108 = scmp.ne.s32.totalorder %s91, %s107
    %p109 = scmp.eq.s32.totalorder %s15, 0
    %p110 = por %p108, %p109
    %p111 = scmp.le.s32.totalorder 1, %s9
    %p112 = scmp.lt.s32.totalorder %s9, 3
    %p113 = pnand %p111, %p112
    %p114 = pneg %p113
    // Predicated region
    $region9: #{cnn_femnist_forward.4} parent=5 // pred_check
      _
    $region10: #{cnn_femnist_forward.4} parent=5 // pred_check_branch
      %116 = sbr.rel (%p113) target = $region12
    $region11: #{cnn_femnist_forward.4} parent=5 // pred_region
      %s117 = ssub.s32 %s9, 1
      // Predicated region
      $region13: #{cnn_femnist_forward.4} parent=11 // pred_check
        %p118 = pneg %p56
      $region14: #{cnn_femnist_forward.4} parent=11 // pred_check_branch
        %120 = sbr.rel (%p118) target = $region16
      $region15: #{cnn_femnist_forward.4} parent=11 // pred_region
        _
      $region16: #{cnn_femnist_forward.4} parent=11 // pred_fallthru
        _
      // Predicated region
      $region17: #{cnn_femnist_forward.4} parent=11 // pred_check
        %p121 = pneg %p77
      $region18: #{cnn_femnist_forward.4} parent=11 // pred_check_branch
        %123 = sbr.rel (%p121) target = $region20
      $region19: #{cnn_femnist_forward.4} parent=11 // pred_region
        _
      $region20: #{cnn_femnist_forward.4} parent=11 // pred_fallthru
        _
    $region12: #{cnn_femnist_forward.4} parent=5 // pred_fallthru
      _
    %p124 = scmp.lt.s32.totalorder %s9, 2
    // Predicated region
    $region21: #{cnn_femnist_forward.4} parent=5 // pred_check
      %p125 = pneg %p124
    $region22: #{cnn_femnist_forward.4} parent=5 // pred_check_branch
      %127 = sbr.rel (%p125) target = $region24
    $region23: #{cnn_femnist_forward.4} parent=5 // pred_region
      // Predicated region
      $region25: #{cnn_femnist_forward.4} parent=23 // pred_check
        %p128 = pneg %p29
      $region26: #{cnn_femnist_forward.4} parent=23 // pred_check_branch
        %130 = sbr.rel (%p128) target = $region28
      $region27: #{cnn_femnist_forward.4} parent=23 // pred_region
        %p131 = scmp.lt.s32.totalorder %s9, 1
        %s132 = scalar_select %p131, %s9, 1
        %s133 = smul.addr %s132, 84
        %s134 = smul.addr %s133, 8
        %s135 = scalar_lea.vmem %s0, %s134
      $region28: #{cnn_femnist_forward.4} parent=23 // pred_fallthru
        _
    $region24: #{cnn_femnist_forward.4} parent=5 // pred_fallthru
      _
    %p136 = scmp.le.s32.totalorder 1, %s9
    %p137 = scmp.lt.s32.totalorder %s9, 3
    %p138 = pnand %p136, %p137
    %p139 = pneg %p138
    // Predicated region
    $region29: #{cnn_femnist_forward.4} parent=5 // pred_check
      _
    $region30: #{cnn_femnist_forward.4} parent=5 // pred_check_branch
      %141 = sbr.rel (%p138) target = $region32
    $region31: #{cnn_femnist_forward.4} parent=5 // pred_region
      %s142 = ssub.s32 %s9, 1
      %p143 = scmp.lt.s32.totalorder %s14, 1
      %s144 = scalar_select %p143, %s14, 1
      %s145 = smul.addr %s144, 84
      %s146 = smul.addr %s145, 8
      %s147 = scalar_lea.vmem %s0, %s146
      %p148 = pneg %p35
      %p149 = pneg %p32
      %p150 = pneg %p56
      %p151 = pneg %p53
      %p152 = pneg %p77
      %p153 = pneg %p74
      %p154 = pneg %p103
      %p155 = pneg %p100
      %p156 = scmp.lt.s32.totalorder %s14, 1
      %s157 = scalar_select %p156, %s14, 1
      %s158 = smul.addr %s157, 7
      %s159 = smul.addr %s158, 8
      %s160 = scalar_lea.vmem %s3, %s159
      %p161 = scmp.lt.s32.totalorder %s14, 1
      %s162 = scalar_select %p161, %s14, 1
      %s163 = smul.addr %s162, 84
      %s164 = smul.addr %s163, 8
      %s165 = scalar_lea.vmem %s0, %s164
      %p166 = scmp.lt.s32.totalorder %s14, 1
      %s167 = scalar_select %p166, %s14, 1
      %s168 = smul.addr %s167, 7
      %s169 = smul.addr %s168, 8
      %s170 = scalar_lea.vmem %s3, %s169
      %v171 = vld [vmem:[%s1] sm:$0xff]
      %v172 = vld [vmem:[%s1 + $0x8] sm:$0xff]
      %v173 = vld [vmem:[%s1 + $0x10] sm:$0xff]
      %v174 = vld [vmem:[%s1 + $0x18] sm:$0xff]
      %v175 = vld [vmem:[%s1 + $0x20] sm:$0xff]
      %v176 = vld [vmem:[%s1 + $0x28] sm:$0xff]
      %v177 = vld [vmem:[%s1 + $0x30] sm:$0xff]
      %v178 = vld [vmem:[%s1 + $0x38] sm:$0xff]
      %v179 = vld [vmem:[%s1 + $0x40] sm:$0xff]
      %v180 = vld [vmem:[%s1 + $0x48] sm:$0xff]
      %v181 = vld [vmem:[%s1 + $0x50] sm:$0xff]
      %v182 = vld [vmem:[%s1 + $0x58] sm:$0xff]
      %v183 = vld [vmem:[%s1 + $0x60] sm:$0xff]
      %v184 = vld [vmem:[%s1 + $0x68] sm:$0xff]
      %v185 = vld [vmem:[%s1 + $0x70] sm:$0xff]
      %v186 = vld [vmem:[%s1 + $0x78] sm:$0xff]
      %v187 = vld [vmem:[%s1 + $0x80] sm:$0xff]
      %v188 = vld [vmem:[%s1 + $0x88] sm:$0xff]
      %v189 = vld [vmem:[%s1 + $0x90] sm:$0xff]
      %v190 = vld [vmem:[%s1 + $0x98] sm:$0xff]
      %v191 = vld [vmem:[%s1 + $0xa0] sm:$0xff]
      %v192 = vld [vmem:[%s1 + $0xa8] sm:$0xff]
      %v193 = vld [vmem:[%s1 + $0xb0] sm:$0xff]
      %v194 = vld [vmem:[%s1 + $0xb8] sm:$0xff]
      %v195 = vld [vmem:[%s1 + $0xc0] sm:$0xff]
      %v196 = vld [vmem:[%s1 + $0xc8] sm:$0xff]
      %v197 = vld [vmem:[%s1 + $0xd0] sm:$0xff]
      %v198 = vld [vmem:[%s1 + $0xd8] sm:$0xff]
      %v199 = vld [vmem:[%s1 + $0xe0] sm:$0xff]
      %v200 = vld [vmem:[%s1 + $0xe8] sm:$0xff]
      %v201 = vld [vmem:[%s1 + $0xf0] sm:$0xff]
      %v202 = vld [vmem:[%s1 + $0xf8] sm:$0xff]
      %v203 = vld [vmem:[%s1 + $0x100] sm:$0xff]
      %v204 = vld [vmem:[%s1 + $0x108] sm:$0xff]
      %v205 = vld [vmem:[%s1 + $0x110] sm:$0xff]
      %v206 = vld [vmem:[%s1 + $0x118] sm:$0xff]
      %v207 = vld [vmem:[%s165] sm:$0xff]
      %v208 = vld [vmem:[%s165 + $0x8] sm:$0xff]
      %v209 = vld [vmem:[%s165 + $0x10] sm:$0xff]
      %v210 = vld [vmem:[%s165 + $0x18] sm:$0xff]
      %v211 = vld [vmem:[%s165 + $0x20] sm:$0xff]
      %v212 = vld [vmem:[%s165 + $0x28] sm:$0xff]
      %v213 = vld [vmem:[%s165 + $0x30] sm:$0xff]
      %v214 = vld [vmem:[%s165 + $0x38] sm:$0xff]
      %v215 = vld [vmem:[%s165 + $0x40] sm:$0xff]
      %v216 = vld [vmem:[%s165 + $0x48] sm:$0xff]
      %v217 = vld [vmem:[%s165 + $0x50] sm:$0xff]
      %v218 = vld [vmem:[%s165 + $0x58] sm:$0xff]
      %v219 = vld [vmem:[%s165 + $0x60] sm:$0xff]
      %v220 = vld [vmem:[%s165 + $0x68] sm:$0xff]
      %v221 = vld [vmem:[%s165 + $0x70] sm:$0xff]
      %v222 = vld [vmem:[%s165 + $0x78] sm:$0xff]
      %v223 = vld [vmem:[%s165 + $0x80] sm:$0xff]
      %v224 = vld [vmem:[%s165 + $0x88] sm:$0xff]
      %v225 = vld [vmem:[%s165 + $0x90] sm:$0x1]
      %v226 = vld [vmem:[%s165 + $0x98] sm:$0x1]
      %v227 = vld [vmem:[%s165 + $0xa0] sm:$0x1]
      %vm228 = vcmask 261120
      %v230 = vsel %vm228, %v209, 0
      %v233 = vsel %vm228, %v212, 0
      %v236 = vsel %vm228, %v215, 0
      %v239 = vsel %vm228, %v218, 0
      %v242 = vsel %vm228, %v221, 0
      %v245 = vsel %vm228, %v224, 0
      %v248 = vsel %vm228, %v227, 0
      %250 = vmatprep.subr.mxu0 0.0
      %251 = vmatpush1.msra.mxu0 %v171
      %252 = vmatprep.subr.mxu0 0.0
      %253 = vmatpush1.msra.mxu0 %v172
      %254 = vmatprep.subr.mxu0 0.0
      %255 = vmatpush1.msra.mxu0 %v173
      %256 = vmatprep.subr.mxu0 0.0
      %257 = vmatpush1.msra.mxu0 %v174
      %258 = vmatprep.subr.mxu0 0.0
      %259 = vmatpush1.msra.mxu0 %v175
      %260 = vmatprep.subr.mxu0 0.0
      %261 = vmatpush1.msra.mxu0 %v176
      %262 = vmatprep.subr.mxu0 0.0
      %263 = vmatpush1.msra.mxu0 %v177
      %264 = vmatprep.subr.mxu0 0.0
      %265 = vmatpush1.msra.mxu0 %v178
      %266 = vmatprep.subr.mxu0 0.0
      %267 = vmatpush1.msra.mxu0 %v179
      %268 = vmatprep.subr.mxu0 0.0
      %269 = vmatpush1.msra.mxu0 %v180
      %270 = vmatprep.subr.mxu0 0.0
      %271 = vmatpush1.msra.mxu0 %v181
      %272 = vmatprep.subr.mxu0 0.0
      %273 = vmatpush1.msra.mxu0 %v182
      %274 = vmatprep.subr.mxu0 0.0
      %275 = vmatpush1.msra.mxu0 %v183
      %276 = vmatprep.subr.mxu0 0.0
      %277 = vmatpush1.msra.mxu0 %v184
      %278 = vmatprep.subr.mxu0 0.0
      %279 = vmatpush1.msra.mxu0 %v185
      %280 = vmatprep.subr.mxu0 0.0
      %281 = vmatpush1.msra.mxu0 %v186
      %282 = vmatprep.subr.mxu0 0.0
      %283 = vmatpush1.msra.mxu0 %v187
      %284 = vmatprep.subr.mxu0 0.0
      %285 = vmatpush1.msra.mxu0 %v188
      %286 = vmatprep.subr.mxu0 0.0
      %287 = vmatpush1.msra.mxu0 %v189
      %288 = vmatprep.subr.mxu0 0.0
      %289 = vmatpush1.msra.mxu0 %v190
      %290 = vmatprep.subr.mxu0 0.0
      %291 = vmatpush1.msra.mxu0 %v191
      %292 = vmatprep.subr.mxu0 0.0
      %293 = vmatpush1.msra.mxu0 %v192
      %294 = vmatprep.subr.mxu0 0.0
      %295 = vmatpush1.msra.mxu0 %v193
      %296 = vmatprep.subr.mxu0 0.0
      %297 = vmatpush1.msra.mxu0 %v194
      %298 = vmatprep.subr.mxu0 0.0
      %299 = vmatpush1.msra.mxu0 %v195
      %300 = vmatprep.subr.mxu0 0.0
      %301 = vmatpush1.msra.mxu0 %v196
      %302 = vmatprep.subr.mxu0 0.0
      %303 = vmatpush1.msra.mxu0 %v197
      %304 = vmatprep.subr.mxu0 0.0
      %305 = vmatpush1.msra.mxu0 %v198
      %306 = vmatprep.subr.mxu0 0.0
      %307 = vmatpush1.msra.mxu0 %v199
      %308 = vmatprep.subr.mxu0 0.0
      %309 = vmatpush1.msra.mxu0 %v200
      %310 = vmatprep.subr.mxu0 0.0
      %311 = vmatpush1.msra.mxu0 %v201
      %312 = vmatprep.subr.mxu0 0.0
      %313 = vmatpush1.msra.mxu0 %v202
      %314 = vmatprep.mubr.f32.mxu0 %v208
      %315 = vmatmul.mubr.f32.gmra.mrb[0].mxu0 %v207
      %v316 = vpop.f32.mrb[0].mxu0
      %v317 = vadd.f32 0.0, %v316
      %v318 = vpop.f32.mrb[0].mxu0
      %319 = vmatprep.mubr.f32.mxu0 %v211
      %320 = vmatmul.mubr.f32.gmra.mrb[0].mxu0 %v210
      %v321 = vpop.f32.mrb[0].mxu0
      %v322 = vadd.f32 0.0, %v321
      %v323 = vpop.f32.mrb[0].mxu0
      %324 = vmatprep.mubr.f32.mxu0 %v214
      %325 = vmatmul.mubr.f32.gmra.mrb[0].mxu0 %v213
      %v326 = vpop.f32.mrb[0].mxu0
      %v327 = vadd.f32 0.0, %v326
      %v328 = vpop.f32.mrb[0].mxu0
      %329 = vmatprep.mubr.f32.mxu0 %v217
      %330 = vmatmul.mubr.f32.gmra.mrb[0].mxu0 %v216
      %v331 = vpop.f32.mrb[0].mxu0
      %v332 = vadd.f32 0.0, %v331
      %v333 = vpop.f32.mrb[0].mxu0
      %334 = vmatprep.mubr.f32.mxu0 %v220
      %335 = vmatmul.mubr.f32.gmra.mrb[0].mxu0 %v219
      %v336 = vpop.f32.mrb[0].mxu0
      %v337 = vadd.f32 0.0, %v336
      %v338 = vpop.f32.mrb[0].mxu0
      %339 = vmatprep.mubr.f32.mxu0 %v223
      %340 = vmatmul.mubr.f32.gmra.mrb[0].mxu0 %v222
      %v341 = vpop.f32.mrb[0].mxu0
      %v342 = vadd.f32 0.0, %v341
      %v343 = vpop.f32.mrb[0].mxu0
      %344 = vmatprep.mubr.f32.mxu0 %v226
      %345 = vmatmul.mubr.f32.gmra.mrb[0].mxu0 %v225
      %v346 = vpop.f32.mrb[0].mxu0
      %v347 = vadd.f32 0.0, %v346
      %v348 = vpop.f32.mrb[0].mxu0
      %349 = vdwg.mxu0
      %350 = vmatprep.subr.mxu0 0.0
      %351 = vmatpush1.msra.mxu0 %v203
      %352 = vmatprep.subr.mxu0 0.0
      %353 = vmatpush1.msra.mxu0 %v204
      %354 = vmatprep.subr.mxu0 0.0
      %355 = vmatpush1.msra.mxu0 %v205
      %356 = vmatprep.subr.mxu0 0.0
      %357 = vmatpush1.msra.mxu0 %v206
      %358 = vmatprep.subr.mxu0 0.0
      %359 = vmatpush1.msra.mxu0 0.0
      %360 = vmatprep.subr.mxu0 0.0
      %361 = vmatpush1.msra.mxu0 0.0
      %362 = vmatprep.subr.mxu0 0.0
      %363 = vmatpush1.msra.mxu0 0.0
      %364 = vmatprep.subr.mxu0 0.0
      %365 = vmatpush1.msra.mxu0 0.0
      %366 = vmatprep.subr.mxu0 0.0
      %367 = vmatpush1.msra.mxu0 0.0
      %368 = vmatprep.subr.mxu0 0.0
      %369 = vmatpush1.msra.mxu0 0.0
      %370 = vmatprep.subr.mxu0 0.0
      %371 = vmatpush1.msra.mxu0 0.0
      %372 = vmatprep.subr.mxu0 0.0
      %373 = vmatpush1.msra.mxu0 0.0
      %374 = vmatprep.subr.mxu0 0.0
      %375 = vmatpush1.msra.mxu0 0.0
      %376 = vmatprep.subr.mxu0 0.0
      %377 = vmatpush1.msra.mxu0 0.0
      %378 = vmatprep.subr.mxu0 0.0
      %379 = vmatpush1.msra.mxu0 0.0
      %380 = vmatprep.subr.mxu0 0.0
      %381 = vmatpush1.msra.mxu0 0.0
      %382 = vmatprep.subr.mxu0 0.0
      %383 = vmatpush1.msra.mxu0 0.0
      %384 = vmatprep.subr.mxu0 0.0
      %385 = vmatpush1.msra.mxu0 0.0
      %386 = vmatprep.subr.mxu0 0.0
      %387 = vmatpush1.msra.mxu0 0.0
      %388 = vmatprep.subr.mxu0 0.0
      %389 = vmatpush1.msra.mxu0 0.0
      %390 = vmatprep.subr.mxu0 0.0
      %391 = vmatpush1.msra.mxu0 0.0
      %392 = vmatprep.subr.mxu0 0.0
      %393 = vmatpush1.msra.mxu0 0.0
      %394 = vmatprep.subr.mxu0 0.0
      %395 = vmatpush1.msra.mxu0 0.0
      %396 = vmatprep.subr.mxu0 0.0
      %397 = vmatpush1.msra.mxu0 0.0
      %398 = vmatprep.subr.mxu0 0.0
      %399 = vmatpush1.msra.mxu0 0.0
      %400 = vmatprep.subr.mxu0 0.0
      %401 = vmatpush1.msra.mxu0 0.0
      %402 = vmatprep.subr.mxu0 0.0
      %403 = vmatpush1.msra.mxu0 0.0
      %404 = vmatprep.subr.mxu0 0.0
      %405 = vmatpush1.msra.mxu0 0.0
      %406 = vmatprep.subr.mxu0 0.0
      %407 = vmatpush1.msra.mxu0 0.0
      %408 = vmatprep.subr.mxu0 0.0
      %409 = vmatpush1.msra.mxu0 0.0
      %410 = vmatprep.subr.mxu0 0.0
      %411 = vmatpush1.msra.mxu0 0.0
      %412 = vmatprep.subr.mxu0 0.0
      %413 = vmatpush1.msra.mxu0 0.0
      %414 = vmatprep.mubr.f32.mxu0 0.0
      %415 = vmatmul.mubr.f32.gmra.mrb[0].mxu0 %v230
      %v416 = vpop.f32.mrb[0].mxu0
      %v417 = vadd.f32 %v317, %v416
      %v418 = vpop.f32.mrb[0].mxu0
      %419 = vmatprep.mubr.f32.mxu0 0.0
      %420 = vmatmul.mubr.f32.gmra.mrb[0].mxu0 %v233
      %v421 = vpop.f32.mrb[0].mxu0
      %v422 = vadd.f32 %v322, %v421
      %v423 = vpop.f32.mrb[0].mxu0
      %424 = vmatprep.mubr.f32.mxu0 0.0
      %425 = vmatmul.mubr.f32.gmra.mrb[0].mxu0 %v236
      %v426 = vpop.f32.mrb[0].mxu0
      %v427 = vadd.f32 %v327, %v426
      %v428 = vpop.f32.mrb[0].mxu0
      %429 = vmatprep.mubr.f32.mxu0 0.0
      %430 = vmatmul.mubr.f32.gmra.mrb[0].mxu0 %v239
      %v431 = vpop.f32.mrb[0].mxu0
      %v432 = vadd.f32 %v332, %v431
      %v433 = vpop.f32.mrb[0].mxu0
      %434 = vmatprep.mubr.f32.mxu0 0.0
      %435 = vmatmul.mubr.f32.gmra.mrb[0].mxu0 %v242
      %v436 = vpop.f32.mrb[0].mxu0
      %v437 = vadd.f32 %v337, %v436
      %v438 = vpop.f32.mrb[0].mxu0
      %439 = vmatprep.mubr.f32.mxu0 0.0
      %440 = vmatmul.mubr.f32.gmra.mrb[0].mxu0 %v245
      %v441 = vpop.f32.mrb[0].mxu0
      %v442 = vadd.f32 %v342, %v441
      %v443 = vpop.f32.mrb[0].mxu0
      %444 = vmatprep.mubr.f32.mxu0 0.0
      %445 = vmatmul.mubr.f32.gmra.mrb[0].mxu0 %v248
      %v446 = vpop.f32.mrb[0].mxu0
      %v447 = vadd.f32 %v347, %v446
      %v448 = vpop.f32.mrb[0].mxu0
      %449 = vdwg.mxu0
      %s450 = scalar_lea.vmem %s165, 168
      %v451 = vld [vmem:[%s450] sm:$0xff]
      %v452 = vld [vmem:[%s450 + $0x8] sm:$0xff]
      %v453 = vld [vmem:[%s450 + $0x10] sm:$0xff]
      %v454 = vld [vmem:[%s450 + $0x18] sm:$0xff]
      %v455 = vld [vmem:[%s450 + $0x20] sm:$0xff]
      %v456 = vld [vmem:[%s450 + $0x28] sm:$0xff]
      %v457 = vld [vmem:[%s450 + $0x30] sm:$0xff]
      %v458 = vld [vmem:[%s450 + $0x38] sm:$0xff]
      %v459 = vld [vmem:[%s450 + $0x40] sm:$0xff]
      %v460 = vld [vmem:[%s450 + $0x48] sm:$0xff]
      %v461 = vld [vmem:[%s450 + $0x50] sm:$0xff]
      %v462 = vld [vmem:[%s450 + $0x58] sm:$0xff]
      %v463 = vld [vmem:[%s450 + $0x60] sm:$0xff]
      %v464 = vld [vmem:[%s450 + $0x68] sm:$0xff]
      %v465 = vld [vmem:[%s450 + $0x70] sm:$0xff]
      %v466 = vld [vmem:[%s450 + $0x78] sm:$0xff]
      %v467 = vld [vmem:[%s450 + $0x80] sm:$0xff]
      %v468 = vld [vmem:[%s450 + $0x88] sm:$0xff]
      %v469 = vld [vmem:[%s450 + $0x90] sm:$0x1]
      %v470 = vld [vmem:[%s450 + $0x98] sm:$0x1]
      %v471 = vld [vmem:[%s450 + $0xa0] sm:$0x1]
      %v473 = vsel %vm228, %v453, 0
      %v476 = vsel %vm228, %v456, 0
      %v479 = vsel %vm228, %v459, 0
      %v482 = vsel %vm228, %v462, 0
      %v485 = vsel %vm228, %v465, 0
      %v488 = vsel %vm228, %v468, 0
      %v491 = vsel %vm228, %v471, 0
      %493 = vmatprep.subr.mxu0 0.0
      %494 = vmatpush1.msra.mxu0 %v171
      %495 = vmatprep.subr.mxu0 0.0
      %496 = vmatpush1.msra.mxu0 %v172
      %497 = vmatprep.subr.mxu0 0.0
      %498 = vmatpush1.msra.mxu0 %v173
      %499 = vmatprep.subr.mxu0 0.0
      %500 = vmatpush1.msra.mxu0 %v174
      %501 = vmatprep.subr.mxu0 0.0
      %502 = vmatpush1.msra.mxu0 %v175
      %503 = vmatprep.subr.mxu0 0.0
      %504 = vmatpush1.msra.mxu0 %v176
      %505 = vmatprep.subr.mxu0 0.0
      %506 = vmatpush1.msra.mxu0 %v177
      %507 = vmatprep.subr.mxu0 0.0
      %508 = vmatpush1.msra.mxu0 %v178
      %509 = vmatprep.subr.mxu0 0.0
      %510 = vmatpush1.msra.mxu0 %v179
      %511 = vmatprep.subr.mxu0 0.0
      %512 = vmatpush1.msra.mxu0 %v180
      %513 = vmatprep.subr.mxu0 0.0
      %514 = vmatpush1.msra.mxu0 %v181
      %515 = vmatprep.subr.mxu0 0.0
      %516 = vmatpush1.msra.mxu0 %v182
      %517 = vmatprep.subr.mxu0 0.0
      %518 = vmatpush1.msra.mxu0 %v183
      %519 = vmatprep.subr.mxu0 0.0
      %520 = vmatpush1.msra.mxu0 %v184
      %521 = vmatprep.subr.mxu0 0.0
      %522 = vmatpush1.msra.mxu0 %v185
      %523 = vmatprep.subr.mxu0 0.0
      %524 = vmatpush1.msra.mxu0 %v186
      %525 = vmatprep.subr.mxu0 0.0
      %526 = vmatpush1.msra.mxu0 %v187
      %527 = vmatprep.subr.mxu0 0.0
      %528 = vmatpush1.msra.mxu0 %v188
      %529 = vmatprep.subr.mxu0 0.0
      %530 = vmatpush1.msra.mxu0 %v189
      %531 = vmatprep.subr.mxu0 0.0
      %532 = vmatpush1.msra.mxu0 %v190
      %533 = vmatprep.subr.mxu0 0.0
      %534 = vmatpush1.msra.mxu0 %v191
      %535 = vmatprep.subr.mxu0 0.0
      %536 = vmatpush1.msra.mxu0 %v192
      %537 = vmatprep.subr.mxu0 0.0
      %538 = vmatpush1.msra.mxu0 %v193
      %539 = vmatprep.subr.mxu0 0.0
      %540 = vmatpush1.msra.mxu0 %v194
      %541 = vmatprep.subr.mxu0 0.0
      %542 = vmatpush1.msra.mxu0 %v195
      %543 = vmatprep.subr.mxu0 0.0
      %544 = vmatpush1.msra.mxu0 %v196
      %545 = vmatprep.subr.mxu0 0.0
      %546 = vmatpush1.msra.mxu0 %v197
      %547 = vmatprep.subr.mxu0 0.0
      %548 = vmatpush1.msra.mxu0 %v198
      %549 = vmatprep.subr.mxu0 0.0
      %550 = vmatpush1.msra.mxu0 %v199
      %551 = vmatprep.subr.mxu0 0.0
      %552 = vmatpush1.msra.mxu0 %v200
      %553 = vmatprep.subr.mxu0 0.0
      %554 = vmatpush1.msra.mxu0 %v201
      %555 = vmatprep.subr.mxu0 0.0
      %556 = vmatpush1.msra.mxu0 %v202
      %557 = vmatprep.mubr.f32.mxu0 %v452
      %558 = vmatmul.mubr.f32.gmra.mrb[0].mxu0 %v451
      %v559 = vpop.f32.mrb[0].mxu0
      %v560 = vadd.f32 0.0, %v559
      %v561 = vpop.f32.mrb[0].mxu0
      %562 = vmatprep.mubr.f32.mxu0 %v455
      %563 = vmatmul.mubr.f32.gmra.mrb[0].mxu0 %v454
      %v564 = vpop.f32.mrb[0].mxu0
      %v565 = vadd.f32 0.0, %v564
      %v566 = vpop.f32.mrb[0].mxu0
      %567 = vmatprep.mubr.f32.mxu0 %v458
      %568 = vmatmul.mubr.f32.gmra.mrb[0].mxu0 %v457
      %v569 = vpop.f32.mrb[0].mxu0
      %v570 = vadd.f32 0.0, %v569
      %v571 = vpop.f32.mrb[0].mxu0
      %572 = vmatprep.mubr.f32.mxu0 %v461
      %573 = vmatmul.mubr.f32.gmra.mrb[0].mxu0 %v460
      %v574 = vpop.f32.mrb[0].mxu0
      %v575 = vadd.f32 0.0, %v574
      %v576 = vpop.f32.mrb[0].mxu0
      %577 = vmatprep.mubr.f32.mxu0 %v464
      %578 = vmatmul.mubr.f32.gmra.mrb[0].mxu0 %v463
      %v579 = vpop.f32.mrb[0].mxu0
      %v580 = vadd.f32 0.0, %v579
      %v581 = vpop.f32.mrb[0].mxu0
      %582 = vmatprep.mubr.f32.mxu0 %v467
      %583 = vmatmul.mubr.f32.gmra.mrb[0].mxu0 %v466
      %v584 = vpop.f32.mrb[0].mxu0
      %v585 = vadd.f32 0.0, %v584
      %v586 = vpop.f32.mrb[0].mxu0
      %587 = vmatprep.mubr.f32.mxu0 %v470
      %588 = vmatmul.mubr.f32.gmra.mrb[0].mxu0 %v469
      %v589 = vpop.f32.mrb[0].mxu0
      %v590 = vadd.f32 0.0, %v589
      %v591 = vpop.f32.mrb[0].mxu0
      %592 = vdwg.mxu0
      %593 = vmatprep.subr.mxu0 0.0
      %594 = vmatpush1.msra.mxu0 %v203
      %595 = vmatprep.subr.mxu0 0.0
      %596 = vmatpush1.msra.mxu0 %v204
      %597 = vmatprep.subr.mxu0 0.0
      %598 = vmatpush1.msra.mxu0 %v205
      %599 = vmatprep.subr.mxu0 0.0
      %600 = vmatpush1.msra.mxu0 %v206
      %601 = vmatprep.subr.mxu0 0.0
      %602 = vmatpush1.msra.mxu0 0.0
      %603 = vmatprep.subr.mxu0 0.0
      %604 = vmatpush1.msra.mxu0 0.0
      %605 = vmatprep.subr.mxu0 0.0
      %606 = vmatpush1.msra.mxu0 0.0
      %607 = vmatprep.subr.mxu0 0.0
      %608 = vmatpush1.msra.mxu0 0.0
      %609 = vmatprep.subr.mxu0 0.0
      %610 = vmatpush1.msra.mxu0 0.0
      %611 = vmatprep.subr.mxu0 0.0
      %612 = vmatpush1.msra.mxu0 0.0
      %613 = vmatprep.subr.mxu0 0.0
      %614 = vmatpush1.msra.mxu0 0.0
      %615 = vmatprep.subr.mxu0 0.0
      %616 = vmatpush1.msra.mxu0 0.0
      %617 = vmatprep.subr.mxu0 0.0
      %618 = vmatpush1.msra.mxu0 0.0
      %619 = vmatprep.subr.mxu0 0.0
      %620 = vmatpush1.msra.mxu0 0.0
      %621 = vmatprep.subr.mxu0 0.0
      %622 = vmatpush1.msra.mxu0 0.0
      %623 = vmatprep.subr.mxu0 0.0
      %624 = vmatpush1.msra.mxu0 0.0
      %625 = vmatprep.subr.mxu0 0.0
      %626 = vmatpush1.msra.mxu0 0.0
      %627 = vmatprep.subr.mxu0 0.0
      %628 = vmatpush1.msra.mxu0 0.0
      %629 = vmatprep.subr.mxu0 0.0
      %630 = vmatpush1.msra.mxu0 0.0
      %631 = vmatprep.subr.mxu0 0.0
      %632 = vmatpush1.msra.mxu0 0.0
      %633 = vmatprep.subr.mxu0 0.0
      %634 = vmatpush1.msra.mxu0 0.0
      %635 = vmatprep.subr.mxu0 0.0
      %636 = vmatpush1.msra.mxu0 0.0
      %637 = vmatprep.subr.mxu0 0.0
      %638 = vmatpush1.msra.mxu0 0.0
      %639 = vmatprep.subr.mxu0 0.0
      %640 = vmatpush1.msra.mxu0 0.0
      %641 = vmatprep.subr.mxu0 0.0
      %642 = vmatpush1.msra.mxu0 0.0
      %643 = vmatprep.subr.mxu0 0.0
      %644 = vmatpush1.msra.mxu0 0.0
      %645 = vmatprep.subr.mxu0 0.0
      %646 = vmatpush1.msra.mxu0 0.0
      %647 = vmatprep.subr.mxu0 0.0
      %648 = vmatpush1.msra.mxu0 0.0
      %649 = vmatprep.subr.mxu0 0.0
      %650 = vmatpush1.msra.mxu0 0.0
      %651 = vmatprep.subr.mxu0 0.0
      %652 = vmatpush1.msra.mxu0 0.0
      %653 = vmatprep.subr.mxu0 0.0
      %654 = vmatpush1.msra.mxu0 0.0
      %655 = vmatprep.subr.mxu0 0.0
      %656 = vmatpush1.msra.mxu0 0.0
      %657 = vmatprep.mubr.f32.mxu0 0.0
      %658 = vmatmul.mubr.f32.gmra.mrb[0].mxu0 %v473
      %v659 = vpop.f32.mrb[0].mxu0
      %v660 = vadd.f32 %v560, %v659
      %v661 = vpop.f32.mrb[0].mxu0
      %662 = vmatprep.mubr.f32.mxu0 0.0
      %663 = vmatmul.mubr.f32.gmra.mrb[0].mxu0 %v476
      %v664 = vpop.f32.mrb[0].mxu0
      %v665 = vadd.f32 %v565, %v664
      %v666 = vpop.f32.mrb[0].mxu0
      %667 = vmatprep.mubr.f32.mxu0 0.0
      %668 = vmatmul.mubr.f32.gmra.mrb[0].mxu0 %v479
      %v669 = vpop.f32.mrb[0].mxu0
      %v670 = vadd.f32 %v570, %v669
      %v671 = vpop.f32.mrb[0].mxu0
      %672 = vmatprep.mubr.f32.mxu0 0.0
      %673 = vmatmul.mubr.f32.gmra.mrb[0].mxu0 %v482
      %v674 = vpop.f32.mrb[0].mxu0
      %v675 = vadd.f32 %v575, %v674
      %v676 = vpop.f32.mrb[0].mxu0
      %677 = vmatprep.mubr.f32.mxu0 0.0
      %678 = vmatmul.mubr.f32.gmra.mrb[0].mxu0 %v485
      %v679 = vpop.f32.mrb[0].mxu0
      %v680 = vadd.f32 %v580, %v679
      %v681 = vpop.f32.mrb[0].mxu0
      %682 = vmatprep.mubr.f32.mxu0 0.0
      %683 = vmatmul.mubr.f32.gmra.mrb[0].mxu0 %v488
      %v684 = vpop.f32.mrb[0].mxu0
      %v685 = vadd.f32 %v585, %v684
      %v686 = vpop.f32.mrb[0].mxu0
      %687 = vmatprep.mubr.f32.mxu0 0.0
      %688 = vmatmul.mubr.f32.gmra.mrb[0].mxu0 %v491
      %v689 = vpop.f32.mrb[0].mxu0
      %v690 = vadd.f32 %v590, %v689
      %v691 = vpop.f32.mrb[0].mxu0
      %692 = vdwg.mxu0
      %v693 = vmax.f32 %v417, %v660
      %v694 = vmax.f32 %v422, %v665
      %v695 = vmax.f32 %v427, %v670
      %v696 = vmax.f32 %v432, %v675
      %v697 = vmax.f32 %v437, %v680
      %v698 = vmax.f32 %v442, %v685
      %v699 = vmax.f32 %v447, %v690
      %s700 = scalar_lea.vmem %s165, 336
      %v701 = vld [vmem:[%s700] sm:$0xff]
      %v702 = vld [vmem:[%s700 + $0x8] sm:$0xff]
      %v703 = vld [vmem:[%s700 + $0x10] sm:$0xff]
      %v704 = vld [vmem:[%s700 + $0x18] sm:$0xff]
      %v705 = vld [vmem:[%s700 + $0x20] sm:$0xff]
      %v706 = vld [vmem:[%s700 + $0x28] sm:$0xff]
      %v707 = vld [vmem:[%s700 + $0x30] sm:$0xff]
      %v708 = vld [vmem:[%s700 + $0x38] sm:$0xff]
      %v709 = vld [vmem:[%s700 + $0x40] sm:$0xff]
      %v710 = vld [vmem:[%s700 + $0x48] sm:$0xff]
      %v711 = vld [vmem:[%s700 + $0x50] sm:$0xff]
      %v712 = vld [vmem:[%s700 + $0x58] sm:$0xff]
      %v713 = vld [vmem:[%s700 + $0x60] sm:$0xff]
      %v714 = vld [vmem:[%s700 + $0x68] sm:$0xff]
      %v715 = vld [vmem:[%s700 + $0x70] sm:$0xff]
      %v716 = vld [vmem:[%s700 + $0x78] sm:$0xff]
      %v717 = vld [vmem:[%s700 + $0x80] sm:$0xff]
      %v718 = vld [vmem:[%s700 + $0x88] sm:$0xff]
      %v719 = vld [vmem:[%s700 + $0x90] sm:$0x1]
      %v720 = vld [vmem:[%s700 + $0x98] sm:$0x1]
      %v721 = vld [vmem:[%s700 + $0xa0] sm:$0x1]
      %v723 = vsel %vm228, %v703, 0
      %v726 = vsel %vm228, %v706, 0
      %v729 = vsel %vm228, %v709, 0
      %v732 = vsel %vm228, %v712, 0
      %v735 = vsel %vm228, %v715, 0
      %v738 = vsel %vm228, %v718, 0
      %v741 = vsel %vm228, %v721, 0
      %743 = vmatprep.subr.mxu0 0.0
      %744 = vmatpush1.msra.mxu0 %v171
      %745 = vmatprep.subr.mxu0 0.0
      %746 = vmatpush1.msra.mxu0 %v172
      %747 = vmatprep.subr.mxu0 0.0
      %748 = vmatpush1.msra.mxu0 %v173
      %749 = vmatprep.subr.mxu0 0.0
      %750 = vmatpush1.msra.mxu0 %v174
      %751 = vmatprep.subr.mxu0 0.0
      %752 = vmatpush1.msra.mxu0 %v175
      %753 = vmatprep.subr.mxu0 0.0
      %754 = vmatpush1.msra.mxu0 %v176
      %755 = vmatprep.subr.mxu0 0.0
      %756 = vmatpush1.msra.mxu0 %v177
      %757 = vmatprep.subr.mxu0 0.0
      %758 = vmatpush1.msra.mxu0 %v178
      %759 = vmatprep.subr.mxu0 0.0
      %760 = vmatpush1.msra.mxu0 %v179
      %761 = vmatprep.subr.mxu0 0.0
      %762 = vmatpush1.msra.mxu0 %v180
      %763 = vmatprep.subr.mxu0 0.0
      %764 = vmatpush1.msra.mxu0 %v181
      %765 = vmatprep.subr.mxu0 0.0
      %766 = vmatpush1.msra.mxu0 %v182
      %767 = vmatprep.subr.mxu0 0.0
      %768 = vmatpush1.msra.mxu0 %v183
      %769 = vmatprep.subr.mxu0 0.0
      %770 = vmatpush1.msra.mxu0 %v184
      %771 = vmatprep.subr.mxu0 0.0
      %772 = vmatpush1.msra.mxu0 %v185
      %773 = vmatprep.subr.mxu0 0.0
      %774 = vmatpush1.msra.mxu0 %v186
      %775 = vmatprep.subr.mxu0 0.0
      %776 = vmatpush1.msra.mxu0 %v187
      %777 = vmatprep.subr.mxu0 0.0
      %778 = vmatpush1.msra.mxu0 %v188
      %779 = vmatprep.subr.mxu0 0.0
      %780 = vmatpush1.msra.mxu0 %v189
      %781 = vmatprep.subr.mxu0 0.0
      %782 = vmatpush1.msra.mxu0 %v190
      %783 = vmatprep.subr.mxu0 0.0
      %784 = vmatpush1.msra.mxu0 %v191
      %785 = vmatprep.subr.mxu0 0.0
      %786 = vmatpush1.msra.mxu0 %v192
      %787 = vmatprep.subr.mxu0 0.0
      %788 = vmatpush1.msra.mxu0 %v193
      %789 = vmatprep.subr.mxu0 0.0
      %790 = vmatpush1.msra.mxu0 %v194
      %791 = vmatprep.subr.mxu0 0.0
      %792 = vmatpush1.msra.mxu0 %v195
      %793 = vmatprep.subr.mxu0 0.0
      %794 = vmatpush1.msra.mxu0 %v196
      %795 = vmatprep.subr.mxu0 0.0
      %796 = vmatpush1.msra.mxu0 %v197
      %797 = vmatprep.subr.mxu0 0.0
      %798 = vmatpush1.msra.mxu0 %v198
      %799 = vmatprep.subr.mxu0 0.0
      %800 = vmatpush1.msra.mxu0 %v199
      %801 = vmatprep.subr.mxu0 0.0
      %802 = vmatpush1.msra.mxu0 %v200
      %803 = vmatprep.subr.mxu0 0.0
      %804 = vmatpush1.msra.mxu0 %v201
      %805 = vmatprep.subr.mxu0 0.0
      %806 = vmatpush1.msra.mxu0 %v202
      %807 = vmatprep.mubr.f32.mxu0 %v702
      %808 = vmatmul.mubr.f32.gmra.mrb[0].mxu0 %v701
      %v809 = vpop.f32.mrb[0].mxu0
      %v810 = vadd.f32 0.0, %v809
      %v811 = vpop.f32.mrb[0].mxu0
      %812 = vmatprep.mubr.f32.mxu0 %v705
      %813 = vmatmul.mubr.f32.gmra.mrb[0].mxu0 %v704
      %v814 = vpop.f32.mrb[0].mxu0
      %v815 = vadd.f32 0.0, %v814
      %v816 = vpop.f32.mrb[0].mxu0
      %817 = vmatprep.mubr.f32.mxu0 %v708
      %818 = vmatmul.mubr.f32.gmra.mrb[0].mxu0 %v707
      %v819 = vpop.f32.mrb[0].mxu0
      %v820 = vadd.f32 0.0, %v819
      %v821 = vpop.f32.mrb[0].mxu0
      %822 = vmatprep.mubr.f32.mxu0 %v711
      %823 = vmatmul.mubr.f32.gmra.mrb[0].mxu0 %v710
      %v824 = vpop.f32.mrb[0].mxu0
      %v825 = vadd.f32 0.0, %v824
      %v826 = vpop.f32.mrb[0].mxu0
      %827 = vmatprep.mubr.f32.mxu0 %v714
      %828 = vmatmul.mubr.f32.gmra.mrb[0].mxu0 %v713
      %v829 = vpop.f32.mrb[0].mxu0
      %v830 = vadd.f32 0.0, %v829
      %v831 = vpop.f32.mrb[0].mxu0
      %832 = vmatprep.mubr.f32.mxu0 %v717
      %833 = vmatmul.mubr.f32.gmra.mrb[0].mxu0 %v716
      %v834 = vpop.f32.mrb[0].mxu0
      %v835 = vadd.f32 0.0, %v834
      %v836 = vpop.f32.mrb[0].mxu0
      %837 = vmatprep.mubr.f32.mxu0 %v720
      %838 = vmatmul.mubr.f32.gmra.mrb[0].mxu0 %v719
      %v839 = vpop.f32.mrb[0].mxu0
      %v840 = vadd.f32 0.0, %v839
      %v841 = vpop.f32.mrb[0].mxu0
      %842 = vdwg.mxu0
      %843 = vmatprep.subr.mxu0 0.0
      %844 = vmatpush1.msra.mxu0 %v203
      %845 = vmatprep.subr.mxu0 0.0
      %846 = vmatpush1.msra.mxu0 %v204
      %847 = vmatprep.subr.mxu0 0.0
      %848 = vmatpush1.msra.mxu0 %v205
      %849 = vmatprep.subr.mxu0 0.0
      %850 = vmatpush1.msra.mxu0 %v206
      %851 = vmatprep.subr.mxu0 0.0
      %852 = vmatpush1.msra.mxu0 0.0
      %853 = vmatprep.subr.mxu0 0.0
      %854 = vmatpush1.msra.mxu0 0.0
      %855 = vmatprep.subr.mxu0 0.0
      %856 = vmatpush1.msra.mxu0 0.0
      %857 = vmatprep.subr.mxu0 0.0
      %858 = vmatpush1.msra.mxu0 0.0
      %859 = vmatprep.subr.mxu0 0.0
      %860 = vmatpush1.msra.mxu0 0.0
      %861 = vmatprep.subr.mxu0 0.0
      %862 = vmatpush1.msra.mxu0 0.0
      %863 = vmatprep.subr.mxu0 0.0
      %864 = vmatpush1.msra.mxu0 0.0
      %865 = vmatprep.subr.mxu0 0.0
      %866 = vmatpush1.msra.mxu0 0.0
      %867 = vmatprep.subr.mxu0 0.0
      %868 = vmatpush1.msra.mxu0 0.0
      %869 = vmatprep.subr.mxu0 0.0
      %870 = vmatpush1.msra.mxu0 0.0
      %871 = vmatprep.subr.mxu0 0.0
      %872 = vmatpush1.msra.mxu0 0.0
      %873 = vmatprep.subr.mxu0 0.0
      %874 = vmatpush1.msra.mxu0 0.0
      %875 = vmatprep.subr.mxu0 0.0
      %876 = vmatpush1.msra.mxu0 0.0
      %877 = vmatprep.subr.mxu0 0.0
      %878 = vmatpush1.msra.mxu0 0.0
      %879 = vmatprep.subr.mxu0 0.0
      %880 = vmatpush1.msra.mxu0 0.0
      %881 = vmatprep.subr.mxu0 0.0
      %882 = vmatpush1.msra.mxu0 0.0
      %883 = vmatprep.subr.mxu0 0.0
      %884 = vmatpush1.msra.mxu0 0.0
      %885 = vmatprep.subr.mxu0 0.0
      %886 = vmatpush1.msra.mxu0 0.0
      %887 = vmatprep.subr.mxu0 0.0
      %888 = vmatpush1.msra.mxu0 0.0
      %889 = vmatprep.subr.mxu0 0.0
      %890 = vmatpush1.msra.mxu0 0.0
      %891 = vmatprep.subr.mxu0 0.0
      %892 = vmatpush1.msra.mxu0 0.0
      %893 = vmatprep.subr.mxu0 0.0
      %894 = vmatpush1.msra.mxu0 0.0
      %895 = vmatprep.subr.mxu0 0.0
      %896 = vmatpush1.msra.mxu0 0.0
      %897 = vmatprep.subr.mxu0 0.0
      %898 = vmatpush1.msra.mxu0 0.0
      %899 = vmatprep.subr.mxu0 0.0
      %900 = vmatpush1.msra.mxu0 0.0
      %901 = vmatprep.subr.mxu0 0.0
      %902 = vmatpush1.msra.mxu0 0.0
      %903 = vmatprep.subr.mxu0 0.0
      %904 = vmatpush1.msra.mxu0 0.0
      %905 = vmatprep.subr.mxu0 0.0
      %906 = vmatpush1.msra.mxu0 0.0
      %907 = vmatprep.mubr.f32.mxu0 0.0
      %908 = vmatmul.mubr.f32.gmra.mrb[0].mxu0 %v723
      %v909 = vpop.f32.mrb[0].mxu0
      %v910 = vadd.f32 %v810, %v909
      %v911 = vpop.f32.mrb[0].mxu0
      %912 = vmatprep.mubr.f32.mxu0 0.0
      %913 = vmatmul.mubr.f32.gmra.mrb[0].mxu0 %v726
      %v914 = vpop.f32.mrb[0].mxu0
      %v915 = vadd.f32 %v815, %v914
      %v916 = vpop.f32.mrb[0].mxu0
      %917 = vmatprep.mubr.f32.mxu0 0.0
      %918 = vmatmul.mubr.f32.gmra.mrb[0].mxu0 %v729
      %v919 = vpop.f32.mrb[0].mxu0
      %v920 = vadd.f32 %v820, %v919
      %v921 = vpop.f32.mrb[0].mxu0
      %922 = vmatprep.mubr.f32.mxu0 0.0
      %923 = vmatmul.mubr.f32.gmra.mrb[0].mxu0 %v732
      %v924 = vpop.f32.mrb[0].mxu0
      %v925 = vadd.f32 %v825, %v924
      %v926 = vpop.f32.mrb[0].mxu0
      %927 = vmatprep.mubr.f32.mxu0 0.0
      %928 = vmatmul.mubr.f32.gmra.mrb[0].mxu0 %v735
      %v929 = vpop.f32.mrb[0].mxu0
      %v930 = vadd.f32 %v830, %v929
      %v931 = vpop.f32.mrb[0].mxu0
      %932 = vmatprep.mubr.f32.mxu0 0.0
      %933 = vmatmul.mubr.f32.gmra.mrb[0].mxu0 %v738
      %v934 = vpop.f32.mrb[0].mxu0
      %v935 = vadd.f32 %v835, %v934
      %v936 = vpop.f32.mrb[0].mxu0
      %937 = vmatprep.mubr.f32.mxu0 0.0
      %938 = vmatmul.mubr.f32.gmra.mrb[0].mxu0 %v741
      %v939 = vpop.f32.mrb[0].mxu0
      %v940 = vadd.f32 %v840, %v939
      %v941 = vpop.f32.mrb[0].mxu0
      %942 = vdwg.mxu0
      %v943 = vmax.f32 %v693, %v910
      %v944 = vmax.f32 %v694, %v915
      %v945 = vmax.f32 %v695, %v920
      %v946 = vmax.f32 %v696, %v925
      %v947 = vmax.f32 %v697, %v930
      %v948 = vmax.f32 %v698, %v935
      %v949 = vmax.f32 %v699, %v940
      %s950 = scalar_lea.vmem %s165, 504
      %v951 = vld [vmem:[%s950] sm:$0xff]
      %v952 = vld [vmem:[%s950 + $0x8] sm:$0xff]
      %v953 = vld [vmem:[%s950 + $0x10] sm:$0xff]
      %v954 = vld [vmem:[%s950 + $0x18] sm:$0xff]
      %v955 = vld [vmem:[%s950 + $0x20] sm:$0xff]
      %v956 = vld [vmem:[%s950 + $0x28] sm:$0xff]
      %v957 = vld [vmem:[%s950 + $0x30] sm:$0xff]
      %v958 = vld [vmem:[%s950 + $0x38] sm:$0xff]
      %v959 = vld [vmem:[%s950 + $0x40] sm:$0xff]
      %v960 = vld [vmem:[%s950 + $0x48] sm:$0xff]
      %v961 = vld [vmem:[%s950 + $0x50] sm:$0xff]
      %v962 = vld [vmem:[%s950 + $0x58] sm:$0xff]
      %v963 = vld [vmem:[%s950 + $0x60] sm:$0xff]
      %v964 = vld [vmem:[%s950 + $0x68] sm:$0xff]
      %v965 = vld [vmem:[%s950 + $0x70] sm:$0xff]
      %v966 = vld [vmem:[%s950 + $0x78] sm:$0xff]
      %v967 = vld [vmem:[%s950 + $0x80] sm:$0xff]
      %v968 = vld [vmem:[%s950 + $0x88] sm:$0xff]
      %v969 = vld [vmem:[%s950 + $0x90] sm:$0x1]
      %v970 = vld [vmem:[%s950 + $0x98] sm:$0x1]
      %v971 = vld [vmem:[%s950 + $0xa0] sm:$0x1]
      %v973 = vsel %vm228, %v953, 0
      %v976 = vsel %vm228, %v956, 0
      %v979 = vsel %vm228, %v959, 0
      %v982 = vsel %vm228, %v962, 0
      %v985 = vsel %vm228, %v965, 0
      %v988 = vsel %vm228, %v968, 0
      %v991 = vsel %vm228, %v971, 0
      %993 = vmatprep.subr.mxu0 0.0
      %994 = vmatpush1.msra.mxu0 %v171
      %995 = vmatprep.subr.mxu0 0.0
      %996 = vmatpush1.msra.mxu0 %v172
      %997 = vmatprep.subr.mxu0 0.0
      %998 = vmatpush1.msra.mxu0 %v173
      %999 = vmatprep.subr.mxu0 0.0
      %1000 = vmatpush1.msra.mxu0 %v174
      %1001 = vmatprep.subr.mxu0 0.0
      %1002 = vmatpush1.msra.mxu0 %v175
      %1003 = vmatprep.subr.mxu0 0.0
      %1004 = vmatpush1.msra.mxu0 %v176
      %1005 = vmatprep.subr.mxu0 0.0
      %1006 = vmatpush1.msra.mxu0 %v177
      %1007 = vmatprep.subr.mxu0 0.0
      %1008 = vmatpush1.msra.mxu0 %v178
      %1009 = vmatprep.subr.mxu0 0.0
      %1010 = vmatpush1.msra.mxu0 %v179
      %1011 = vmatprep.subr.mxu0 0.0
      %1012 = vmatpush1.msra.mxu0 %v180
      %1013 = vmatprep.subr.mxu0 0.0
      %1014 = vmatpush1.msra.mxu0 %v181
      %1015 = vmatprep.subr.mxu0 0.0
      %1016 = vmatpush1.msra.mxu0 %v182
      %1017 = vmatprep.subr.mxu0 0.0
      %1018 = vmatpush1.msra.mxu0 %v183
      %1019 = vmatprep.subr.mxu0 0.0
      %1020 = vmatpush1.msra.mxu0 %v184
      %1021 = vmatprep.subr.mxu0 0.0
      %1022 = vmatpush1.msra.mxu0 %v185
      %1023 = vmatprep.subr.mxu0 0.0
      %1024 = vmatpush1.msra.mxu0 %v186
      %1025 = vmatprep.subr.mxu0 0.0
      %1026 = vmatpush1.msra.mxu0 %v187
      %1027 = vmatprep.subr.mxu0 0.0
      %1028 = vmatpush1.msra.mxu0 %v188
      %1029 = vmatprep.subr.mxu0 0.0
      %1030 = vmatpush1.msra.mxu0 %v189
      %1031 = vmatprep.subr.mxu0 0.0
      %1032 = vmatpush1.msra.mxu0 %v190
      %1033 = vmatprep.subr.mxu0 0.0
      %1034 = vmatpush1.msra.mxu0 %v191
      %1035 = vmatprep.subr.mxu0 0.0
      %1036 = vmatpush1.msra.mxu0 %v192
      %1037 = vmatprep.subr.mxu0 0.0
      %1038 = vmatpush1.msra.mxu0 %v193
      %1039 = vmatprep.subr.mxu0 0.0
      %1040 = vmatpush1.msra.mxu0 %v194
      %1041 = vmatprep.subr.mxu0 0.0
      %1042 = vmatpush1.msra.mxu0 %v195
      %1043 = vmatprep.subr.mxu0 0.0
      %1044 = vmatpush1.msra.mxu0 %v196
      %1045 = vmatprep.subr.mxu0 0.0
      %1046 = vmatpush1.msra.mxu0 %v197
      %1047 = vmatprep.subr.mxu0 0.0
      %1048 = vmatpush1.msra.mxu0 %v198
      %1049 = vmatprep.subr.mxu0 0.0
      %1050 = vmatpush1.msra.mxu0 %v199
      %1051 = vmatprep.subr.mxu0 0.0
      %1052 = vmatpush1.msra.mxu0 %v200
      %1053 = vmatprep.subr.mxu0 0.0
      %1054 = vmatpush1.msra.mxu0 %v201
      %1055 = vmatprep.subr.mxu0 0.0
      %1056 = vmatpush1.msra.mxu0 %v202
      %1057 = vmatprep.mubr.f32.mxu0 %v952
      %1058 = vmatmul.mubr.f32.gmra.mrb[0].mxu0 %v951
      %v1059 = vpop.f32.mrb[0].mxu0
      %v1060 = vadd.f32 0.0, %v1059
      %v1061 = vpop.f32.mrb[0].mxu0
      %1062 = vmatprep.mubr.f32.mxu0 %v955
      %1063 = vmatmul.mubr.f32.gmra.mrb[0].mxu0 %v954
      %v1064 = vpop.f32.mrb[0].mxu0
      %v1065 = vadd.f32 0.0, %v1064
      %v1066 = vpop.f32.mrb[0].mxu0
      %1067 = vmatprep.mubr.f32.mxu0 %v958
      %1068 = vmatmul.mubr.f32.gmra.mrb[0].mxu0 %v957
      %v1069 = vpop.f32.mrb[0].mxu0
      %v1070 = vadd.f32 0.0, %v1069
      %v1071 = vpop.f32.mrb[0].mxu0
      %1072 = vmatprep.mubr.f32.mxu0 %v961
      %1073 = vmatmul.mubr.f32.gmra.mrb[0].mxu0 %v960
      %v1074 = vpop.f32.mrb[0].mxu0
      %v1075 = vadd.f32 0.0, %v1074
      %v1076 = vpop.f32.mrb[0].mxu0
      %1077 = vmatprep.mubr.f32.mxu0 %v964
      %1078 = vmatmul.mubr.f32.gmra.mrb[0].mxu0 %v963
      %v1079 = vpop.f32.mrb[0].mxu0
      %v1080 = vadd.f32 0.0, %v1079
      %v1081 = vpop.f32.mrb[0].mxu0
      %1082 = vmatprep.mubr.f32.mxu0 %v967
      %1083 = vmatmul.mubr.f32.gmra.mrb[0].mxu0 %v966
      %v1084 = vpop.f32.mrb[0].mxu0
      %v1085 = vadd.f32 0.0, %v1084
      %v1086 = vpop.f32.mrb[0].mxu0
      %1087 = vmatprep.mubr.f32.mxu0 %v970
      %1088 = vmatmul.mubr.f32.gmra.mrb[0].mxu0 %v969
      %v1089 = vpop.f32.mrb[0].mxu0
      %v1090 = vadd.f32 0.0, %v1089
      %v1091 = vpop.f32.mrb[0].mxu0
      %1092 = vdwg.mxu0
      %1093 = vmatprep.subr.mxu0 0.0
      %1094 = vmatpush1.msra.mxu0 %v203
      %1095 = vmatprep.subr.mxu0 0.0
      %1096 = vmatpush1.msra.mxu0 %v204
      %1097 = vmatprep.subr.mxu0 0.0
      %1098 = vmatpush1.msra.mxu0 %v205
      %1099 = vmatprep.subr.mxu0 0.0
      %1100 = vmatpush1.msra.mxu0 %v206
      %1101 = vmatprep.subr.mxu0 0.0
      %1102 = vmatpush1.msra.mxu0 0.0
      %1103 = vmatprep.subr.mxu0 0.0
      %1104 = vmatpush1.msra.mxu0 0.0
      %1105 = vmatprep.subr.mxu0 0.0
      %1106 = vmatpush1.msra.mxu0 0.0
      %1107 = vmatprep.subr.mxu0 0.0
      %1108 = vmatpush1.msra.mxu0 0.0
      %1109 = vmatprep.subr.mxu0 0.0
      %1110 = vmatpush1.msra.mxu0 0.0
      %1111 = vmatprep.subr.mxu0 0.0
      %1112 = vmatpush1.msra.mxu0 0.0
      %1113 = vmatprep.subr.mxu0 0.0
      %1114 = vmatpush1.msra.mxu0 0.0
      %1115 = vmatprep.subr.mxu0 0.0
      %1116 = vmatpush1.msra.mxu0 0.0
      %1117 = vmatprep.subr.mxu0 0.0
      %1118 = vmatpush1.msra.mxu0 0.0
      %1119 = vmatprep.subr.mxu0 0.0
      %1120 = vmatpush1.msra.mxu0 0.0
      %1121 = vmatprep.subr.mxu0 0.0
      %1122 = vmatpush1.msra.mxu0 0.0
      %1123 = vmatprep.subr.mxu0 0.0
      %1124 = vmatpush1.msra.mxu0 0.0
      %1125 = vmatprep.subr.mxu0 0.0
      %1126 = vmatpush1.msra.mxu0 0.0
      %1127 = vmatprep.subr.mxu0 0.0
      %1128 = vmatpush1.msra.mxu0 0.0
      %1129 = vmatprep.subr.mxu0 0.0
      %1130 = vmatpush1.msra.mxu0 0.0
      %1131 = vmatprep.subr.mxu0 0.0
      %1132 = vmatpush1.msra.mxu0 0.0
      %1133 = vmatprep.subr.mxu0 0.0
      %1134 = vmatpush1.msra.mxu0 0.0
      %1135 = vmatprep.subr.mxu0 0.0
      %1136 = vmatpush1.msra.mxu0 0.0
      %1137 = vmatprep.subr.mxu0 0.0
      %1138 = vmatpush1.msra.mxu0 0.0
      %1139 = vmatprep.subr.mxu0 0.0
      %1140 = vmatpush1.msra.mxu0 0.0
      %1141 = vmatprep.subr.mxu0 0.0
      %1142 = vmatpush1.msra.mxu0 0.0
      %1143 = vmatprep.subr.mxu0 0.0
      %1144 = vmatpush1.msra.mxu0 0.0
      %1145 = vmatprep.subr.mxu0 0.0
      %1146 = vmatpush1.msra.mxu0 0.0
      %1147 = vmatprep.subr.mxu0 0.0
      %1148 = vmatpush1.msra.mxu0 0.0
      %1149 = vmatprep.subr.mxu0 0.0
      %1150 = vmatpush1.msra.mxu0 0.0
      %1151 = vmatprep.subr.mxu0 0.0
      %1152 = vmatpush1.msra.mxu0 0.0
      %1153 = vmatprep.subr.mxu0 0.0
      %1154 = vmatpush1.msra.mxu0 0.0
      %1155 = vmatprep.subr.mxu0 0.0
      %1156 = vmatpush1.msra.mxu0 0.0
      %1157 = vmatprep.mubr.f32.mxu0 0.0
      %1158 = vmatmul.mubr.f32.gmra.mrb[0].mxu0 %v973
      %v1159 = vpop.f32.mrb[0].mxu0
      %v1160 = vadd.f32 %v1060, %v1159
      %v1161 = vpop.f32.mrb[0].mxu0
      %1162 = vmatprep.mubr.f32.mxu0 0.0
      %1163 = vmatmul.mubr.f32.gmra.mrb[0].mxu0 %v976
      %v1164 = vpop.f32.mrb[0].mxu0
      %v1165 = vadd.f32 %v1065, %v1164
      %v1166 = vpop.f32.mrb[0].mxu0
      %1167 = vmatprep.mubr.f32.mxu0 0.0
      %1168 = vmatmul.mubr.f32.gmra.mrb[0].mxu0 %v979
      %v1169 = vpop.f32.mrb[0].mxu0
      %v1170 = vadd.f32 %v1070, %v1169
      %v1171 = vpop.f32.mrb[0].mxu0
      %1172 = vmatprep.mubr.f32.mxu0 0.0
      %1173 = vmatmul.mubr.f32.gmra.mrb[0].mxu0 %v982
      %v1174 = vpop.f32.mrb[0].mxu0
      %v1175 = vadd.f32 %v1075, %v1174
      %v1176 = vpop.f32.mrb[0].mxu0
      %1177 = vmatprep.mubr.f32.mxu0 0.0
      %1178 = vmatmul.mubr.f32.gmra.mrb[0].mxu0 %v985
      %v1179 = vpop.f32.mrb[0].mxu0
      %v1180 = vadd.f32 %v1080, %v1179
      %v1181 = vpop.f32.mrb[0].mxu0
      %1182 = vmatprep.mubr.f32.mxu0 0.0
      %1183 = vmatmul.mubr.f32.gmra.mrb[0].mxu0 %v988
      %v1184 = vpop.f32.mrb[0].mxu0
      %v1185 = vadd.f32 %v1085, %v1184
      %v1186 = vpop.f32.mrb[0].mxu0
      %1187 = vmatprep.mubr.f32.mxu0 0.0
      %1188 = vmatmul.mubr.f32.gmra.mrb[0].mxu0 %v991
      %v1189 = vpop.f32.mrb[0].mxu0
      %v1190 = vadd.f32 %v1090, %v1189
      %v1191 = vpop.f32.mrb[0].mxu0
      %1192 = vdwg.mxu0
      %v1193 = vmax.f32 %v943, %v1160
      %v1194 = vmax.f32 %v944, %v1165
      %v1195 = vmax.f32 %v945, %v1170
      %v1196 = vmax.f32 %v946, %v1175
      %v1197 = vmax.f32 %v947, %v1180
      %v1198 = vmax.f32 %v948, %v1185
      %v1199 = vmax.f32 %v949, %v1190
      %v1200 = vld [vmem:[%s2] sm:$0x1]
      %v1202 = vlaneseq
      %v1203 = vshrl.u32 %v1202, 7
      %v1204 = vsub.s32 0, %v1203
      %v1205 = vrot.slane %v1200, %v1204
      %v1207 = vadd.f32 %v1193, %v1205
      %v1208 = vadd.f32 %v1194, %v1205
      %v1209 = vadd.f32 %v1195, %v1205
      %v1210 = vadd.f32 %v1196, %v1205
      %v1211 = vadd.f32 %v1197, %v1205
      %v1212 = vadd.f32 %v1198, %v1205
      %v1213 = vadd.f32 %v1199, %v1205
      %v1214 = vmax.f32 %v1207, 0.0
      %v1215 = vmax.f32 %v1208, 0.0
      %v1216 = vmax.f32 %v1209, 0.0
      %v1217 = vmax.f32 %v1210, 0.0
      %v1218 = vmax.f32 %v1211, 0.0
      %v1219 = vmax.f32 %v1212, 0.0
      %v1220 = vmax.f32 %v1213, 0.0
      %vm1221 = vcmask 523264
      %1222 = vst.msk [vmem:[%s170] sm:$0xff] %vm1221, %v1214
      %1223 = vst.msk [vmem:[%s170 + $0x8] sm:$0xff] %vm1221, %v1215
      %1224 = vst.msk [vmem:[%s170 + $0x10] sm:$0xff] %vm1221, %v1216
      %1225 = vst.msk [vmem:[%s170 + $0x18] sm:$0xff] %vm1221, %v1217
      %1226 = vst.msk [vmem:[%s170 + $0x20] sm:$0xff] %vm1221, %v1218
      %1227 = vst.msk [vmem:[%s170 + $0x28] sm:$0xff] %vm1221, %v1219
      %vm1228 = vcmask 516096
      %1229 = vst.msk [vmem:[%s170 + $0x30] sm:$0x1] %vm1228, %v1220
      %p1230 = scmp.lt.s32.totalorder %s14, 1
      %s1231 = scalar_select %p1230, %s14, 1
      %s1232 = smul.addr %s1231, 7
      %s1233 = smul.addr %s1232, 8
      %s1234 = scalar_lea.vmem %s3, %s1233
      // Predicated region
      $region33: #{cnn_femnist_forward.4} parent=31 // pred_check
        %p1235 = pneg %p100
      $region34: #{cnn_femnist_forward.4} parent=31 // pred_check_branch
        %1237 = sbr.rel (%p1235) target = $region36
      $region35: #{cnn_femnist_forward.4} parent=31 // pred_region
        _
      $region36: #{cnn_femnist_forward.4} parent=31 // pred_fallthru
        _
    $region32: #{cnn_femnist_forward.4} parent=5 // pred_fallthru
      _
    %p1238 = scmp.le.s32.totalorder 2, %s9
    // Predicated region
    $region37: #{cnn_femnist_forward.4} parent=5 // pred_check
      %p1239 = pneg %p1238
    $region38: #{cnn_femnist_forward.4} parent=5 // pred_check_branch
      %1241 = sbr.rel (%p1239) target = $region40
    $region39: #{cnn_femnist_forward.4} parent=5 // pred_region
      %s1242 = ssub.s32 %s9, 2
      // Predicated region
      $region41: #{cnn_femnist_forward.4} parent=39 // pred_check
        %p1243 = pneg %p106
      $region42: #{cnn_femnist_forward.4} parent=39 // pred_check_branch
        %1245 = sbr.rel (%p1243) target = $region44
      $region43: #{cnn_femnist_forward.4} parent=39 // pred_region
        %p1246 = scmp.lt.s32.totalorder %s15, 1
        %s1247 = scalar_select %p1246, %s15, 1
        %s1248 = smul.addr %s1247, 7
        %s1249 = smul.addr %s1248, 8
        %s1250 = scalar_lea.vmem %s3, %s1249
      $region44: #{cnn_femnist_forward.4} parent=39 // pred_fallthru
        _
    $region40: #{cnn_femnist_forward.4} parent=5 // pred_fallthru
      _
  $region6: #{cnn_femnist_forward.4} parent=0 // loop_footer
    %s13 = sadd.s32 1, %s9
  $region7: #{cnn_femnist_forward.4} parent=0 // loop_footer_branch
    %8 = sbr.rel target = $region3
  $region8: #{cnn_femnist_forward.4} parent=0 // loop_exit
    _

// kernel: cnn_femnist_forward.5
$region0: #{cnn_femnist_forward.5}
  #allocation0 [shape = 'u32[]', space=smem, size = 0x4, offset = 0x4, fixed_abs, tag = 'smem constant byte address 0x4 - core index']
  #allocation1 [shape = 'u32[144,128]{1,0:T(1,128)}', space=vmem, size = 0x12000, scoped, tag = 'internal scratch']
  %s0 = inlined_call_operand.vmem [shape: f32[2,3136], index: 0, kind: input, shape index: {}]
  %s1 = inlined_call_operand.vmem [shape: f32[3136,62], index: 1, kind: input, shape index: {}]
  %s2 = inlined_call_operand.vmem [shape: f32[1,62], index: 2, kind: input, shape index: {}]
  %s3 = inlined_call_operand.hbm [shape: f32[2,62], index: 3, kind: output, shape index: {}]
  %s4 = sld [smem:[#allocation0]]
  $region22: #{cnn_femnist_forward.5} parent=0
    _
  %s6 = ssub.s32 1, %s4
  %s7 = scalar_select 0, %s6, %s4
  $region1: #{cnn_femnist_forward.5} parent=0
    #allocation2 [shape = 'u8[1024]{0}', space=vmem, size = 0x400, scoped, tag = 'output window, operand 0, single buffered']
    #allocation3 [shape = 's32[1]{0}', space=sflag, size = 0x4, scoped, tag = 'scoped memory for cnn_femnist_forward.5']
    %8 = vsyncpa [#allocation3], 0
    // Predicated region
    $region2: #{cnn_femnist_forward.5} parent=1 // pred_check
      _
    $region3: #{cnn_femnist_forward.5} parent=1 // pred_check_branch
      %10 = sbr.rel (0) target = $region5
    $region4: #{cnn_femnist_forward.5} parent=1 // pred_region
      _
    $region5: #{cnn_femnist_forward.5} parent=1 // pred_fallthru
      _
    // Predicated region
    $region6: #{cnn_femnist_forward.5} parent=1 // pred_check
      _
    $region7: #{cnn_femnist_forward.5} parent=1 // pred_check_branch
      %12 = sbr.rel (0) target = $region9
    $region8: #{cnn_femnist_forward.5} parent=1 // pred_region
      _
    $region9: #{cnn_femnist_forward.5} parent=1 // pred_fallthru
      _
    // Predicated region
    $region10: #{cnn_femnist_forward.5} parent=1 // pred_check
      _
    $region11: #{cnn_femnist_forward.5} parent=1 // pred_check_branch
      %14 = sbr.rel (0) target = $region13
    $region12: #{cnn_femnist_forward.5} parent=1 // pred_region
      _
    $region13: #{cnn_femnist_forward.5} parent=1 // pred_fallthru
      _
    %v15 = vld [vmem:[%s0] sm:$0xff]
    %v16 = vld [vmem:[%s0 + $0x8] sm:$0xff]
    %v17 = vld [vmem:[%s0 + $0x10] sm:$0xff]
    %v18 = vld [vmem:[%s0 + $0x18] sm:$0xff]
    %v19 = vld [vmem:[%s0 + $0x20] sm:$0xff]
    %v20 = vld [vmem:[%s0 + $0x28] sm:$0xff]
    %v21 = vld [vmem:[%s0 + $0x30] sm:$0x3]
    %v22 = vld [vmem:[%s1] sm:$0xff]
    %v23 = vld [vmem:[%s1 + $0x8] sm:$0xff]
    %v24 = vld [vmem:[%s1 + $0x10] sm:$0xff]
    %v25 = vld [vmem:[%s1 + $0x18] sm:$0xff]
    %v26 = vld [vmem:[%s1 + $0x20] sm:$0xff]
    %v27 = vld [vmem:[%s1 + $0x28] sm:$0xff]
    %v28 = vld [vmem:[%s1 + $0x30] sm:$0xff]
    %v29 = vld [vmem:[%s1 + $0x38] sm:$0xff]
    %v30 = vld [vmem:[%s1 + $0x40] sm:$0xff]
    %v31 = vld [vmem:[%s1 + $0x48] sm:$0xff]
    %v32 = vld [vmem:[%s1 + $0x50] sm:$0xff]
    %v33 = vld [vmem:[%s1 + $0x58] sm:$0xff]
    %v34 = vld [vmem:[%s1 + $0x60] sm:$0xff]
    %v35 = vld [vmem:[%s1 + $0x68] sm:$0xff]
    %v36 = vld [vmem:[%s1 + $0x70] sm:$0xff]
    %v37 = vld [vmem:[%s1 + $0x78] sm:$0xff]
    %v38 = vld [vmem:[%s1 + $0x80] sm:$0xff]
    %v39 = vld [vmem:[%s1 + $0x88] sm:$0xff]
    %v40 = vld [vmem:[%s1 + $0x90] sm:$0xff]
    %v41 = vld [vmem:[%s1 + $0x98] sm:$0xff]
    %v42 = vld [vmem:[%s1 + $0xa0] sm:$0xff]
    %v43 = vld [vmem:[%s1 + $0xa8] sm:$0xff]
    %v44 = vld [vmem:[%s1 + $0xb0] sm:$0xff]
    %v45 = vld [vmem:[%s1 + $0xb8] sm:$0xff]
    %v46 = vld [vmem:[%s1 + $0xc0] sm:$0xff]
    %v47 = vld [vmem:[%s1 + $0xc8] sm:$0xff]
    %v48 = vld [vmem:[%s1 + $0xd0] sm:$0xff]
    %v49 = vld [vmem:[%s1 + $0xd8] sm:$0xff]
    %v50 = vld [vmem:[%s1 + $0xe0] sm:$0xff]
    %v51 = vld [vmem:[%s1 + $0xe8] sm:$0xff]
    %v52 = vld [vmem:[%s1 + $0xf0] sm:$0xff]
    %v53 = vld [vmem:[%s1 + $0xf8] sm:$0xff]
    %v54 = vld [vmem:[%s1 + $0x100] sm:$0xff]
    %v55 = vld [vmem:[%s1 + $0x108] sm:$0xff]
    %v56 = vld [vmem:[%s1 + $0x110] sm:$0xff]
    %v57 = vld [vmem:[%s1 + $0x118] sm:$0xff]
    %v58 = vld [vmem:[%s1 + $0x120] sm:$0xff]
    %v59 = vld [vmem:[%s1 + $0x128] sm:$0xff]
    %v60 = vld [vmem:[%s1 + $0x130] sm:$0xff]
    %v61 = vld [vmem:[%s1 + $0x138] sm:$0xff]
    %v62 = vld [vmem:[%s1 + $0x140] sm:$0xff]
    %v63 = vld [vmem:[%s1 + $0x148] sm:$0xff]
    %v64 = vld [vmem:[%s1 + $0x150] sm:$0xff]
    %v65 = vld [vmem:[%s1 + $0x158] sm:$0xff]
    %v66 = vld [vmem:[%s1 + $0x160] sm:$0xff]
    %v67 = vld [vmem:[%s1 + $0x168] sm:$0xff]
    %v68 = vld [vmem:[%s1 + $0x170] sm:$0xff]
    %v69 = vld [vmem:[%s1 + $0x178] sm:$0xff]
    %v70 = vld [vmem:[%s1 + $0x180] sm:$0xff]
    %v71 = vld [vmem:[%s1 + $0x188] sm:$0xff]
    %v72 = vld [vmem:[%s1 + $0x190] sm:$0xff]
    %v73 = vld [vmem:[%s1 + $0x198] sm:$0xff]
    %v74 = vld [vmem:[%s1 + $0x1a0] sm:$0xff]
    %v75 = vld [vmem:[%s1 + $0x1a8] sm:$0xff]
    %v76 = vld [vmem:[%s1 + $0x1b0] sm:$0xff]
    %v77 = vld [vmem:[%s1 + $0x1b8] sm:$0xff]
    %v78 = vld [vmem:[%s1 + $0x1c0] sm:$0xff]
    %v79 = vld [vmem:[%s1 + $0x1c8] sm:$0xff]
    %v80 = vld [vmem:[%s1 + $0x1d0] sm:$0xff]
    %v81 = vld [vmem:[%s1 + $0x1d8] sm:$0xff]
    %v82 = vld [vmem:[%s1 + $0x1e0] sm:$0xff]
    %v83 = vld [vmem:[%s1 + $0x1e8] sm:$0xff]
    %v84 = vld [vmem:[%s1 + $0x1f0] sm:$0xff]
    %v85 = vld [vmem:[%s1 + $0x1f8] sm:$0xff]
    %v86 = vld [vmem:[%s1 + $0x200] sm:$0xff]
    %v87 = vld [vmem:[%s1 + $0x208] sm:$0xff]
    %v88 = vld [vmem:[%s1 + $0x210] sm:$0xff]
    %v89 = vld [vmem:[%s1 + $0x218] sm:$0xff]
    %v90 = vld [vmem:[%s1 + $0x220] sm:$0xff]
    %v91 = vld [vmem:[%s1 + $0x228] sm:$0xff]
    %v92 = vld [vmem:[%s1 + $0x230] sm:$0xff]
    %v93 = vld [vmem:[%s1 + $0x238] sm:$0xff]
    %v94 = vld [vmem:[%s1 + $0x240] sm:$0xff]
    %v95 = vld [vmem:[%s1 + $0x248] sm:$0xff]
    %v96 = vld [vmem:[%s1 + $0x250] sm:$0xff]
    %v97 = vld [vmem:[%s1 + $0x258] sm:$0xff]
    %v98 = vld [vmem:[%s1 + $0x260] sm:$0xff]
    %v99 = vld [vmem:[%s1 + $0x268] sm:$0xff]
    %v100 = vld [vmem:[%s1 + $0x270] sm:$0xff]
    %v101 = vld [vmem:[%s1 + $0x278] sm:$0xff]
    %v102 = vld [vmem:[%s1 + $0x280] sm:$0xff]
    %v103 = vld [vmem:[%s1 + $0x288] sm:$0xff]
    %v104 = vld [vmem:[%s1 + $0x290] sm:$0xff]
    %v105 = vld [vmem:[%s1 + $0x298] sm:$0xff]
    %v106 = vld [vmem:[%s1 + $0x2a0] sm:$0xff]
    %v107 = vld [vmem:[%s1 + $0x2a8] sm:$0xff]
    %v108 = vld [vmem:[%s1 + $0x2b0] sm:$0xff]
    %v109 = vld [vmem:[%s1 + $0x2b8] sm:$0xff]
    %v110 = vld [vmem:[%s1 + $0x2c0] sm:$0xff]
    %v111 = vld [vmem:[%s1 + $0x2c8] sm:$0xff]
    %v112 = vld [vmem:[%s1 + $0x2d0] sm:$0xff]
    %v113 = vld [vmem:[%s1 + $0x2d8] sm:$0xff]
    %v114 = vld [vmem:[%s1 + $0x2e0] sm:$0xff]
    %v115 = vld [vmem:[%s1 + $0x2e8] sm:$0xff]
    %v116 = vld [vmem:[%s1 + $0x2f0] sm:$0xff]
    %v117 = vld [vmem:[%s1 + $0x2f8] sm:$0xff]
    %v118 = vld [vmem:[%s1 + $0x300] sm:$0xff]
    %v119 = vld [vmem:[%s1 + $0x308] sm:$0xff]
    %v120 = vld [vmem:[%s1 + $0x310] sm:$0xff]
    %v121 = vld [vmem:[%s1 + $0x318] sm:$0xff]
    %v122 = vld [vmem:[%s1 + $0x320] sm:$0xff]
    %v123 = vld [vmem:[%s1 + $0x328] sm:$0xff]
    %v124 = vld [vmem:[%s1 + $0x330] sm:$0xff]
    %v125 = vld [vmem:[%s1 + $0x338] sm:$0xff]
    %v126 = vld [vmem:[%s1 + $0x340] sm:$0xff]
    %v127 = vld [vmem:[%s1 + $0x348] sm:$0xff]
    %v128 = vld [vmem:[%s1 + $0x350] sm:$0xff]
    %v129 = vld [vmem:[%s1 + $0x358] sm:$0xff]
    %v130 = vld [vmem:[%s1 + $0x360] sm:$0xff]
    %v131 = vld [vmem:[%s1 + $0x368] sm:$0xff]
    %v132 = vld [vmem:[%s1 + $0x370] sm:$0xff]
    %v133 = vld [vmem:[%s1 + $0x378] sm:$0xff]
    %v134 = vld [vmem:[%s1 + $0x380] sm:$0xff]
    %v135 = vld [vmem:[%s1 + $0x388] sm:$0xff]
    %v136 = vld [vmem:[%s1 + $0x390] sm:$0xff]
    %v137 = vld [vmem:[%s1 + $0x398] sm:$0xff]
    %v138 = vld [vmem:[%s1 + $0x3a0] sm:$0xff]
    %v139 = vld [vmem:[%s1 + $0x3a8] sm:$0xff]
    %v140 = vld [vmem:[%s1 + $0x3b0] sm:$0xff]
    %v141 = vld [vmem:[%s1 + $0x3b8] sm:$0xff]
    %v142 = vld [vmem:[%s1 + $0x3c0] sm:$0xff]
    %v143 = vld [vmem:[%s1 + $0x3c8] sm:$0xff]
    %v144 = vld [vmem:[%s1 + $0x3d0] sm:$0xff]
    %v145 = vld [vmem:[%s1 + $0x3d8] sm:$0xff]
    %v146 = vld [vmem:[%s1 + $0x3e0] sm:$0xff]
    %v147 = vld [vmem:[%s1 + $0x3e8] sm:$0xff]
    %v148 = vld [vmem:[%s1 + $0x3f0] sm:$0xff]
    %v149 = vld [vmem:[%s1 + $0x3f8] sm:$0xff]
    %v150 = vld [vmem:[%s1 + $0x400] sm:$0xff]
    %v151 = vld [vmem:[%s1 + $0x408] sm:$0xff]
    %v152 = vld [vmem:[%s1 + $0x410] sm:$0xff]
    %v153 = vld [vmem:[%s1 + $0x418] sm:$0xff]
    %v154 = vld [vmem:[%s1 + $0x420] sm:$0xff]
    %v155 = vld [vmem:[%s1 + $0x428] sm:$0xff]
    %v156 = vld [vmem:[%s1 + $0x430] sm:$0xff]
    %v157 = vld [vmem:[%s1 + $0x438] sm:$0xff]
    %v158 = vld [vmem:[%s1 + $0x440] sm:$0xff]
    %v159 = vld [vmem:[%s1 + $0x448] sm:$0xff]
    %v160 = vld [vmem:[%s1 + $0x450] sm:$0xff]
    %v161 = vld [vmem:[%s1 + $0x458] sm:$0xff]
    %v162 = vld [vmem:[%s1 + $0x460] sm:$0xff]
    %v163 = vld [vmem:[%s1 + $0x468] sm:$0xff]
    %v164 = vld [vmem:[%s1 + $0x470] sm:$0xff]
    %v165 = vld [vmem:[%s1 + $0x478] sm:$0xff]
    %v166 = vld [vmem:[%s1 + $0x480] sm:$0xff]
    %v167 = vld [vmem:[%s1 + $0x488] sm:$0xff]
    %v168 = vld [vmem:[%s1 + $0x490] sm:$0xff]
    %v169 = vld [vmem:[%s1 + $0x498] sm:$0xff]
    %v170 = vld [vmem:[%s1 + $0x4a0] sm:$0xff]
    %v171 = vld [vmem:[%s1 + $0x4a8] sm:$0xff]
    %v172 = vld [vmem:[%s1 + $0x4b0] sm:$0xff]
    %v173 = vld [vmem:[%s1 + $0x4b8] sm:$0xff]
    %v174 = vld [vmem:[%s1 + $0x4c0] sm:$0xff]
    %v175 = vld [vmem:[%s1 + $0x4c8] sm:$0xff]
    %v176 = vld [vmem:[%s1 + $0x4d0] sm:$0xff]
    %v177 = vld [vmem:[%s1 + $0x4d8] sm:$0xff]
    %v178 = vld [vmem:[%s1 + $0x4e0] sm:$0xff]
    %v179 = vld [vmem:[%s1 + $0x4e8] sm:$0xff]
    %v180 = vld [vmem:[%s1 + $0x4f0] sm:$0xff]
    %v181 = vld [vmem:[%s1 + $0x4f8] sm:$0xff]
    %v182 = vld [vmem:[%s1 + $0x500] sm:$0xff]
    %v183 = vld [vmem:[%s1 + $0x508] sm:$0xff]
    %v184 = vld [vmem:[%s1 + $0x510] sm:$0xff]
    %v185 = vld [vmem:[%s1 + $0x518] sm:$0xff]
    %v186 = vld [vmem:[%s1 + $0x520] sm:$0xff]
    %v187 = vld [vmem:[%s1 + $0x528] sm:$0xff]
    %v188 = vld [vmem:[%s1 + $0x530] sm:$0xff]
    %v189 = vld [vmem:[%s1 + $0x538] sm:$0xff]
    %v190 = vld [vmem:[%s1 + $0x540] sm:$0xff]
    %v191 = vld [vmem:[%s1 + $0x548] sm:$0xff]
    %v192 = vld [vmem:[%s1 + $0x550] sm:$0xff]
    %v193 = vld [vmem:[%s1 + $0x558] sm:$0xff]
    %v194 = vld [vmem:[%s1 + $0x560] sm:$0xff]
    %v195 = vld [vmem:[%s1 + $0x568] sm:$0xff]
    %v196 = vld [vmem:[%s1 + $0x570] sm:$0xff]
    %v197 = vld [vmem:[%s1 + $0x578] sm:$0xff]
    %v198 = vld [vmem:[%s1 + $0x580] sm:$0xff]
    %v199 = vld [vmem:[%s1 + $0x588] sm:$0xff]
    %v200 = vld [vmem:[%s1 + $0x590] sm:$0xff]
    %v201 = vld [vmem:[%s1 + $0x598] sm:$0xff]
    %v202 = vld [vmem:[%s1 + $0x5a0] sm:$0xff]
    %v203 = vld [vmem:[%s1 + $0x5a8] sm:$0xff]
    %v204 = vld [vmem:[%s1 + $0x5b0] sm:$0xff]
    %v205 = vld [vmem:[%s1 + $0x5b8] sm:$0xff]
    %v206 = vld [vmem:[%s1 + $0x5c0] sm:$0xff]
    %v207 = vld [vmem:[%s1 + $0x5c8] sm:$0xff]
    %v208 = vld [vmem:[%s1 + $0x5d0] sm:$0xff]
    %v209 = vld [vmem:[%s1 + $0x5d8] sm:$0xff]
    %v210 = vld [vmem:[%s1 + $0x5e0] sm:$0xff]
    %v211 = vld [vmem:[%s1 + $0x5e8] sm:$0xff]
    %v212 = vld [vmem:[%s1 + $0x5f0] sm:$0xff]
    %v213 = vld [vmem:[%s1 + $0x5f8] sm:$0xff]
    %v214 = vld [vmem:[%s1 + $0x600] sm:$0xff]
    %v215 = vld [vmem:[%s1 + $0x608] sm:$0xff]
    %v216 = vld [vmem:[%s1 + $0x610] sm:$0xff]
    %v217 = vld [vmem:[%s1 + $0x618] sm:$0xff]
    %v218 = vld [vmem:[%s1 + $0x620] sm:$0xff]
    %v219 = vld [vmem:[%s1 + $0x628] sm:$0xff]
    %v220 = vld [vmem:[%s1 + $0x630] sm:$0xff]
    %v221 = vld [vmem:[%s1 + $0x638] sm:$0xff]
    %v222 = vld [vmem:[%s1 + $0x640] sm:$0xff]
    %v223 = vld [vmem:[%s1 + $0x648] sm:$0xff]
    %v224 = vld [vmem:[%s1 + $0x650] sm:$0xff]
    %v225 = vld [vmem:[%s1 + $0x658] sm:$0xff]
    %v226 = vld [vmem:[%s1 + $0x660] sm:$0xff]
    %v227 = vld [vmem:[%s1 + $0x668] sm:$0xff]
    %v228 = vld [vmem:[%s1 + $0x670] sm:$0xff]
    %v229 = vld [vmem:[%s1 + $0x678] sm:$0xff]
    %v230 = vld [vmem:[%s1 + $0x680] sm:$0xff]
    %v231 = vld [vmem:[%s1 + $0x688] sm:$0xff]
    %v232 = vld [vmem:[%s1 + $0x690] sm:$0xff]
    %v233 = vld [vmem:[%s1 + $0x698] sm:$0xff]
    %v234 = vld [vmem:[%s1 + $0x6a0] sm:$0xff]
    %v235 = vld [vmem:[%s1 + $0x6a8] sm:$0xff]
    %v236 = vld [vmem:[%s1 + $0x6b0] sm:$0xff]
    %v237 = vld [vmem:[%s1 + $0x6b8] sm:$0xff]
    %v238 = vld [vmem:[%s1 + $0x6c0] sm:$0xff]
    %v239 = vld [vmem:[%s1 + $0x6c8] sm:$0xff]
    %v240 = vld [vmem:[%s1 + $0x6d0] sm:$0xff]
    %v241 = vld [vmem:[%s1 + $0x6d8] sm:$0xff]
    %v242 = vld [vmem:[%s1 + $0x6e0] sm:$0xff]
    %v243 = vld [vmem:[%s1 + $0x6e8] sm:$0xff]
    %v244 = vld [vmem:[%s1 + $0x6f0] sm:$0xff]
    %v245 = vld [vmem:[%s1 + $0x6f8] sm:$0xff]
    %v246 = vld [vmem:[%s1 + $0x700] sm:$0xff]
    %v247 = vld [vmem:[%s1 + $0x708] sm:$0xff]
    %v248 = vld [vmem:[%s1 + $0x710] sm:$0xff]
    %v249 = vld [vmem:[%s1 + $0x718] sm:$0xff]
    %v250 = vld [vmem:[%s1 + $0x720] sm:$0xff]
    %v251 = vld [vmem:[%s1 + $0x728] sm:$0xff]
    %v252 = vld [vmem:[%s1 + $0x730] sm:$0xff]
    %v253 = vld [vmem:[%s1 + $0x738] sm:$0xff]
    %v254 = vld [vmem:[%s1 + $0x740] sm:$0xff]
    %v255 = vld [vmem:[%s1 + $0x748] sm:$0xff]
    %v256 = vld [vmem:[%s1 + $0x750] sm:$0xff]
    %v257 = vld [vmem:[%s1 + $0x758] sm:$0xff]
    %v258 = vld [vmem:[%s1 + $0x760] sm:$0xff]
    %v259 = vld [vmem:[%s1 + $0x768] sm:$0xff]
    %v260 = vld [vmem:[%s1 + $0x770] sm:$0xff]
    %v261 = vld [vmem:[%s1 + $0x778] sm:$0xff]
    %v262 = vld [vmem:[%s1 + $0x780] sm:$0xff]
    %v263 = vld [vmem:[%s1 + $0x788] sm:$0xff]
    %v264 = vld [vmem:[%s1 + $0x790] sm:$0xff]
    %v265 = vld [vmem:[%s1 + $0x798] sm:$0xff]
    %v266 = vld [vmem:[%s1 + $0x7a0] sm:$0xff]
    %v267 = vld [vmem:[%s1 + $0x7a8] sm:$0xff]
    %v268 = vld [vmem:[%s1 + $0x7b0] sm:$0xff]
    %v269 = vld [vmem:[%s1 + $0x7b8] sm:$0xff]
    %v270 = vld [vmem:[%s1 + $0x7c0] sm:$0xff]
    %v271 = vld [vmem:[%s1 + $0x7c8] sm:$0xff]
    %v272 = vld [vmem:[%s1 + $0x7d0] sm:$0xff]
    %v273 = vld [vmem:[%s1 + $0x7d8] sm:$0xff]
    %v274 = vld [vmem:[%s1 + $0x7e0] sm:$0xff]
    %v275 = vld [vmem:[%s1 + $0x7e8] sm:$0xff]
    %v276 = vld [vmem:[%s1 + $0x7f0] sm:$0xff]
    %v277 = vld [vmem:[%s1 + $0x7f8] sm:$0xff]
    %v278 = vld [vmem:[%s1 + $0x800] sm:$0xff]
    %v279 = vld [vmem:[%s1 + $0x808] sm:$0xff]
    %v280 = vld [vmem:[%s1 + $0x810] sm:$0xff]
    %v281 = vld [vmem:[%s1 + $0x818] sm:$0xff]
    %v282 = vld [vmem:[%s1 + $0x820] sm:$0xff]
    %v283 = vld [vmem:[%s1 + $0x828] sm:$0xff]
    %v284 = vld [vmem:[%s1 + $0x830] sm:$0xff]
    %v285 = vld [vmem:[%s1 + $0x838] sm:$0xff]
    %v286 = vld [vmem:[%s1 + $0x840] sm:$0xff]
    %v287 = vld [vmem:[%s1 + $0x848] sm:$0xff]
    %v288 = vld [vmem:[%s1 + $0x850] sm:$0xff]
    %v289 = vld [vmem:[%s1 + $0x858] sm:$0xff]
    %v290 = vld [vmem:[%s1 + $0x860] sm:$0xff]
    %v291 = vld [vmem:[%s1 + $0x868] sm:$0xff]
    %v292 = vld [vmem:[%s1 + $0x870] sm:$0xff]
    %v293 = vld [vmem:[%s1 + $0x878] sm:$0xff]
    %v294 = vld [vmem:[%s1 + $0x880] sm:$0xff]
    %v295 = vld [vmem:[%s1 + $0x888] sm:$0xff]
    %v296 = vld [vmem:[%s1 + $0x890] sm:$0xff]
    %v297 = vld [vmem:[%s1 + $0x898] sm:$0xff]
    %v298 = vld [vmem:[%s1 + $0x8a0] sm:$0xff]
    %v299 = vld [vmem:[%s1 + $0x8a8] sm:$0xff]
    %v300 = vld [vmem:[%s1 + $0x8b0] sm:$0xff]
    %v301 = vld [vmem:[%s1 + $0x8b8] sm:$0xff]
    %v302 = vld [vmem:[%s1 + $0x8c0] sm:$0xff]
    %v303 = vld [vmem:[%s1 + $0x8c8] sm:$0xff]
    %v304 = vld [vmem:[%s1 + $0x8d0] sm:$0xff]
    %v305 = vld [vmem:[%s1 + $0x8d8] sm:$0xff]
    %v306 = vld [vmem:[%s1 + $0x8e0] sm:$0xff]
    %v307 = vld [vmem:[%s1 + $0x8e8] sm:$0xff]
    %v308 = vld [vmem:[%s1 + $0x8f0] sm:$0xff]
    %v309 = vld [vmem:[%s1 + $0x8f8] sm:$0xff]
    %v310 = vld [vmem:[%s1 + $0x900] sm:$0xff]
    %v311 = vld [vmem:[%s1 + $0x908] sm:$0xff]
    %v312 = vld [vmem:[%s1 + $0x910] sm:$0xff]
    %v313 = vld [vmem:[%s1 + $0x918] sm:$0xff]
    %v314 = vld [vmem:[%s1 + $0x920] sm:$0xff]
    %v315 = vld [vmem:[%s1 + $0x928] sm:$0xff]
    %v316 = vld [vmem:[%s1 + $0x930] sm:$0xff]
    %v317 = vld [vmem:[%s1 + $0x938] sm:$0xff]
    %v318 = vld [vmem:[%s1 + $0x940] sm:$0xff]
    %v319 = vld [vmem:[%s1 + $0x948] sm:$0xff]
    %v320 = vld [vmem:[%s1 + $0x950] sm:$0xff]
    %v321 = vld [vmem:[%s1 + $0x958] sm:$0xff]
    %v322 = vld [vmem:[%s1 + $0x960] sm:$0xff]
    %v323 = vld [vmem:[%s1 + $0x968] sm:$0xff]
    %v324 = vld [vmem:[%s1 + $0x970] sm:$0xff]
    %v325 = vld [vmem:[%s1 + $0x978] sm:$0xff]
    %v326 = vld [vmem:[%s1 + $0x980] sm:$0xff]
    %v327 = vld [vmem:[%s1 + $0x988] sm:$0xff]
    %v328 = vld [vmem:[%s1 + $0x990] sm:$0xff]
    %v329 = vld [vmem:[%s1 + $0x998] sm:$0xff]
    %v330 = vld [vmem:[%s1 + $0x9a0] sm:$0xff]
    %v331 = vld [vmem:[%s1 + $0x9a8] sm:$0xff]
    %v332 = vld [vmem:[%s1 + $0x9b0] sm:$0xff]
    %v333 = vld [vmem:[%s1 + $0x9b8] sm:$0xff]
    %v334 = vld [vmem:[%s1 + $0x9c0] sm:$0xff]
    %v335 = vld [vmem:[%s1 + $0x9c8] sm:$0xff]
    %v336 = vld [vmem:[%s1 + $0x9d0] sm:$0xff]
    %v337 = vld [vmem:[%s1 + $0x9d8] sm:$0xff]
    %v338 = vld [vmem:[%s1 + $0x9e0] sm:$0xff]
    %v339 = vld [vmem:[%s1 + $0x9e8] sm:$0xff]
    %v340 = vld [vmem:[%s1 + $0x9f0] sm:$0xff]
    %v341 = vld [vmem:[%s1 + $0x9f8] sm:$0xff]
    %v342 = vld [vmem:[%s1 + $0xa00] sm:$0xff]
    %v343 = vld [vmem:[%s1 + $0xa08] sm:$0xff]
    %v344 = vld [vmem:[%s1 + $0xa10] sm:$0xff]
    %v345 = vld [vmem:[%s1 + $0xa18] sm:$0xff]
    %v346 = vld [vmem:[%s1 + $0xa20] sm:$0xff]
    %v347 = vld [vmem:[%s1 + $0xa28] sm:$0xff]
    %v348 = vld [vmem:[%s1 + $0xa30] sm:$0xff]
    %v349 = vld [vmem:[%s1 + $0xa38] sm:$0xff]
    %v350 = vld [vmem:[%s1 + $0xa40] sm:$0xff]
    %v351 = vld [vmem:[%s1 + $0xa48] sm:$0xff]
    %v352 = vld [vmem:[%s1 + $0xa50] sm:$0xff]
    %v353 = vld [vmem:[%s1 + $0xa58] sm:$0xff]
    %v354 = vld [vmem:[%s1 + $0xa60] sm:$0xff]
    %v355 = vld [vmem:[%s1 + $0xa68] sm:$0xff]
    %v356 = vld [vmem:[%s1 + $0xa70] sm:$0xff]
    %v357 = vld [vmem:[%s1 + $0xa78] sm:$0xff]
    %v358 = vld [vmem:[%s1 + $0xa80] sm:$0xff]
    %v359 = vld [vmem:[%s1 + $0xa88] sm:$0xff]
    %v360 = vld [vmem:[%s1 + $0xa90] sm:$0xff]
    %v361 = vld [vmem:[%s1 + $0xa98] sm:$0xff]
    %v362 = vld [vmem:[%s1 + $0xaa0] sm:$0xff]
    %v363 = vld [vmem:[%s1 + $0xaa8] sm:$0xff]
    %v364 = vld [vmem:[%s1 + $0xab0] sm:$0xff]
    %v365 = vld [vmem:[%s1 + $0xab8] sm:$0xff]
    %v366 = vld [vmem:[%s1 + $0xac0] sm:$0xff]
    %v367 = vld [vmem:[%s1 + $0xac8] sm:$0xff]
    %v368 = vld [vmem:[%s1 + $0xad0] sm:$0xff]
    %v369 = vld [vmem:[%s1 + $0xad8] sm:$0xff]
    %v370 = vld [vmem:[%s1 + $0xae0] sm:$0xff]
    %v371 = vld [vmem:[%s1 + $0xae8] sm:$0xff]
    %v372 = vld [vmem:[%s1 + $0xaf0] sm:$0xff]
    %v373 = vld [vmem:[%s1 + $0xaf8] sm:$0xff]
    %v374 = vld [vmem:[%s1 + $0xb00] sm:$0xff]
    %v375 = vld [vmem:[%s1 + $0xb08] sm:$0xff]
    %v376 = vld [vmem:[%s1 + $0xb10] sm:$0xff]
    %v377 = vld [vmem:[%s1 + $0xb18] sm:$0xff]
    %v378 = vld [vmem:[%s1 + $0xb20] sm:$0xff]
    %v379 = vld [vmem:[%s1 + $0xb28] sm:$0xff]
    %v380 = vld [vmem:[%s1 + $0xb30] sm:$0xff]
    %v381 = vld [vmem:[%s1 + $0xb38] sm:$0xff]
    %v382 = vld [vmem:[%s1 + $0xb40] sm:$0xff]
    %v383 = vld [vmem:[%s1 + $0xb48] sm:$0xff]
    %v384 = vld [vmem:[%s1 + $0xb50] sm:$0xff]
    %v385 = vld [vmem:[%s1 + $0xb58] sm:$0xff]
    %v386 = vld [vmem:[%s1 + $0xb60] sm:$0xff]
    %v387 = vld [vmem:[%s1 + $0xb68] sm:$0xff]
    %v388 = vld [vmem:[%s1 + $0xb70] sm:$0xff]
    %v389 = vld [vmem:[%s1 + $0xb78] sm:$0xff]
    %v390 = vld [vmem:[%s1 + $0xb80] sm:$0xff]
    %v391 = vld [vmem:[%s1 + $0xb88] sm:$0xff]
    %v392 = vld [vmem:[%s1 + $0xb90] sm:$0xff]
    %v393 = vld [vmem:[%s1 + $0xb98] sm:$0xff]
    %v394 = vld [vmem:[%s1 + $0xba0] sm:$0xff]
    %v395 = vld [vmem:[%s1 + $0xba8] sm:$0xff]
    %v396 = vld [vmem:[%s1 + $0xbb0] sm:$0xff]
    %v397 = vld [vmem:[%s1 + $0xbb8] sm:$0xff]
    %v398 = vld [vmem:[%s1 + $0xbc0] sm:$0xff]
    %v399 = vld [vmem:[%s1 + $0xbc8] sm:$0xff]
    %v400 = vld [vmem:[%s1 + $0xbd0] sm:$0xff]
    %v401 = vld [vmem:[%s1 + $0xbd8] sm:$0xff]
    %v402 = vld [vmem:[%s1 + $0xbe0] sm:$0xff]
    %v403 = vld [vmem:[%s1 + $0xbe8] sm:$0xff]
    %v404 = vld [vmem:[%s1 + $0xbf0] sm:$0xff]
    %v405 = vld [vmem:[%s1 + $0xbf8] sm:$0xff]
    %v406 = vld [vmem:[%s1 + $0xc00] sm:$0xff]
    %v407 = vld [vmem:[%s1 + $0xc08] sm:$0xff]
    %v408 = vld [vmem:[%s1 + $0xc10] sm:$0xff]
    %v409 = vld [vmem:[%s1 + $0xc18] sm:$0xff]
    %v410 = vld [vmem:[%s1 + $0xc20] sm:$0xff]
    %v411 = vld [vmem:[%s1 + $0xc28] sm:$0xff]
    %v412 = vld [vmem:[%s1 + $0xc30] sm:$0xff]
    %v413 = vld [vmem:[%s1 + $0xc38] sm:$0xff]
    %v414 = vld [vmem:[%s2] sm:$0x1]
    %v416 = vlaneseq
    %v417 = vshrl.u32 %v416, 7
    %v418 = vsub.s32 0, %v417
    %v419 = vrot.slane %v414, %v418
    %v428 = vcombine.high %v15, %v15
    %v430 = vunpack.c.l.s4 1983009808
    %v431 = vunpack.c.0.s8 %v430
    %v432 = vlaneseq
    %v433 = vshrl.u32 %v432, 7
    %v434 = vsub.s32 %v431, %v433
    %v435 = vrot.slane %v15, %v434
    %v437 = vunpack.c.l.s4 1983009808
    %v438 = vunpack.c.0.s8 %v437
    %v439 = vlaneseq
    %v440 = vshrl.u32 %v439, 7
    %v441 = vsub.s32 %v438, %v440
    %v442 = vrot.slane %v428, %v441
    %v443 = vcombine.high %v435, %v435
    %v444 = vcombine.high %v442, %v442
    %v445 = vcombine.high %v16, %v16
    %v447 = vunpack.c.l.s4 1983009808
    %v448 = vunpack.c.0.s8 %v447
    %v449 = vlaneseq
    %v450 = vshrl.u32 %v449, 7
    %v451 = vsub.s32 %v448, %v450
    %v452 = vrot.slane %v16, %v451
    %v454 = vunpack.c.l.s4 1983009808
    %v455 = vunpack.c.0.s8 %v454
    %v456 = vlaneseq
    %v457 = vshrl.u32 %v456, 7
    %v458 = vsub.s32 %v455, %v457
    %v459 = vrot.slane %v445, %v458
    %v460 = vcombine.high %v452, %v452
    %v461 = vcombine.high %v459, %v459
    %v462 = vcombine.high %v17, %v17
    %v464 = vunpack.c.l.s4 1983009808
    %v465 = vunpack.c.0.s8 %v464
    %v466 = vlaneseq
    %v467 = vshrl.u32 %v466, 7
    %v468 = vsub.s32 %v465, %v467
    %v469 = vrot.slane %v17, %v468
    %v471 = vunpack.c.l.s4 1983009808
    %v472 = vunpack.c.0.s8 %v471
    %v473 = vlaneseq
    %v474 = vshrl.u32 %v473, 7
    %v475 = vsub.s32 %v472, %v474
    %v476 = vrot.slane %v462, %v475
    %v477 = vcombine.high %v469, %v469
    %v478 = vcombine.high %v476, %v476
    %v479 = vcombine.high %v18, %v18
    %v481 = vunpack.c.l.s4 1983009808
    %v482 = vunpack.c.0.s8 %v481
    %v483 = vlaneseq
    %v484 = vshrl.u32 %v483, 7
    %v485 = vsub.s32 %v482, %v484
    %v486 = vrot.slane %v18, %v485
    %v488 = vunpack.c.l.s4 1983009808
    %v489 = vunpack.c.0.s8 %v488
    %v490 = vlaneseq
    %v491 = vshrl.u32 %v490, 7
    %v492 = vsub.s32 %v489, %v491
    %v493 = vrot.slane %v479, %v492
    %v494 = vcombine.high %v486, %v486
    %v495 = vcombine.high %v493, %v493
    %v496 = vcombine.high %v19, %v19
    %v498 = vunpack.c.l.s4 1983009808
    %v499 = vunpack.c.0.s8 %v498
    %v500 = vlaneseq
    %v501 = vshrl.u32 %v500, 7
    %v502 = vsub.s32 %v499, %v501
    %v503 = vrot.slane %v19, %v502
    %v505 = vunpack.c.l.s4 1983009808
    %v506 = vunpack.c.0.s8 %v505
    %v507 = vlaneseq
    %v508 = vshrl.u32 %v507, 7
    %v509 = vsub.s32 %v506, %v508
    %v510 = vrot.slane %v496, %v509
    %v511 = vcombine.high %v503, %v503
    %v512 = vcombine.high %v510, %v510
    %v513 = vcombine.high %v20, %v20
    %v515 = vunpack.c.l.s4 1983009808
    %v516 = vunpack.c.0.s8 %v515
    %v517 = vlaneseq
    %v518 = vshrl.u32 %v517, 7
    %v519 = vsub.s32 %v516, %v518
    %v520 = vrot.slane %v20, %v519
    %v522 = vunpack.c.l.s4 1983009808
    %v523 = vunpack.c.0.s8 %v522
    %v524 = vlaneseq
    %v525 = vshrl.u32 %v524, 7
    %v526 = vsub.s32 %v523, %v525
    %v527 = vrot.slane %v513, %v526
    %v528 = vcombine.high %v520, %v520
    %v529 = vcombine.high %v527, %v527
    %v531 = vunpack.c.l.s4 1983009808
    %v532 = vunpack.c.0.s8 %v531
    %v533 = vlaneseq
    %v534 = vshrl.u32 %v533, 7
    %v535 = vsub.s32 %v532, %v534
    %v536 = vrot.slane %v21, %v535
    %vm561 = vcmask 523264
    %v562 = vsel %vm561, %v536, 0
    %564 = vmatprep.subr.mxu0 0.0
    %565 = vmatpush1.msra.mxu0 %v22
    %566 = vmatprep.subr.mxu0 0.0
    %567 = vmatpush1.msra.mxu0 %v23
    %568 = vmatprep.subr.mxu0 0.0
    %569 = vmatpush1.msra.mxu0 %v24
    %570 = vmatprep.subr.mxu0 0.0
    %571 = vmatpush1.msra.mxu0 %v25
    %572 = vmatprep.subr.mxu0 0.0
    %573 = vmatpush1.msra.mxu0 %v26
    %574 = vmatprep.subr.mxu0 0.0
    %575 = vmatpush1.msra.mxu0 %v27
    %576 = vmatprep.subr.mxu0 0.0
    %577 = vmatpush1.msra.mxu0 %v28
    %578 = vmatprep.subr.mxu0 0.0
    %579 = vmatpush1.msra.mxu0 %v29
    %580 = vmatprep.subr.mxu0 0.0
    %581 = vmatpush1.msra.mxu0 %v30
    %582 = vmatprep.subr.mxu0 0.0
    %583 = vmatpush1.msra.mxu0 %v31
    %584 = vmatprep.subr.mxu0 0.0
    %585 = vmatpush1.msra.mxu0 %v32
    %586 = vmatprep.subr.mxu0 0.0
    %587 = vmatpush1.msra.mxu0 %v33
    %588 = vmatprep.subr.mxu0 0.0
    %589 = vmatpush1.msra.mxu0 %v34
    %590 = vmatprep.subr.mxu0 0.0
    %591 = vmatpush1.msra.mxu0 %v35
    %592 = vmatprep.subr.mxu0 0.0
    %593 = vmatpush1.msra.mxu0 %v36
    %594 = vmatprep.subr.mxu0 0.0
    %595 = vmatpush1.msra.mxu0 %v37
    %596 = vmatprep.subr.mxu0 0.0
    %597 = vmatpush1.msra.mxu0 %v38
    %598 = vmatprep.subr.mxu0 0.0
    %599 = vmatpush1.msra.mxu0 %v39
    %600 = vmatprep.subr.mxu0 0.0
    %601 = vmatpush1.msra.mxu0 %v40
    %602 = vmatprep.subr.mxu0 0.0
    %603 = vmatpush1.msra.mxu0 %v41
    %604 = vmatprep.subr.mxu0 0.0
    %605 = vmatpush1.msra.mxu0 %v42
    %606 = vmatprep.subr.mxu0 0.0
    %607 = vmatpush1.msra.mxu0 %v43
    %608 = vmatprep.subr.mxu0 0.0
    %609 = vmatpush1.msra.mxu0 %v44
    %610 = vmatprep.subr.mxu0 0.0
    %611 = vmatpush1.msra.mxu0 %v45
    %612 = vmatprep.subr.mxu0 0.0
    %613 = vmatpush1.msra.mxu0 %v46
    %614 = vmatprep.subr.mxu0 0.0
    %615 = vmatpush1.msra.mxu0 %v47
    %616 = vmatprep.subr.mxu0 0.0
    %617 = vmatpush1.msra.mxu0 %v48
    %618 = vmatprep.subr.mxu0 0.0
    %619 = vmatpush1.msra.mxu0 %v49
    %620 = vmatprep.subr.mxu0 0.0
    %621 = vmatpush1.msra.mxu0 %v50
    %622 = vmatprep.subr.mxu0 0.0
    %623 = vmatpush1.msra.mxu0 %v51
    %624 = vmatprep.subr.mxu0 0.0
    %625 = vmatpush1.msra.mxu0 %v52
    %626 = vmatprep.subr.mxu0 0.0
    %627 = vmatpush1.msra.mxu0 %v53
    %628 = vmatprep.mubr.f32.mxu0 %v443
    %629 = vmatmul.mubr.f32.gmra.mrb[0].mxu0 %v435
    %v630 = vpop.f32.mrb[0].mxu0
    %v631 = vadd.f32 %v419, %v630
    %v632 = vpop.f32.mrb[0].mxu0
    %633 = vdwg.mxu0
    %634 = vmatprep.subr.mxu0 0.0
    %635 = vmatpush1.msra.mxu0 %v54
    %636 = vmatprep.subr.mxu0 0.0
    %637 = vmatpush1.msra.mxu0 %v55
    %638 = vmatprep.subr.mxu0 0.0
    %639 = vmatpush1.msra.mxu0 %v56
    %640 = vmatprep.subr.mxu0 0.0
    %641 = vmatpush1.msra.mxu0 %v57
    %642 = vmatprep.subr.mxu0 0.0
    %643 = vmatpush1.msra.mxu0 %v58
    %644 = vmatprep.subr.mxu0 0.0
    %645 = vmatpush1.msra.mxu0 %v59
    %646 = vmatprep.subr.mxu0 0.0
    %647 = vmatpush1.msra.mxu0 %v60
    %648 = vmatprep.subr.mxu0 0.0
    %649 = vmatpush1.msra.mxu0 %v61
    %650 = vmatprep.subr.mxu0 0.0
    %651 = vmatpush1.msra.mxu0 %v62
    %652 = vmatprep.subr.mxu0 0.0
    %653 = vmatpush1.msra.mxu0 %v63
    %654 = vmatprep.subr.mxu0 0.0
    %655 = vmatpush1.msra.mxu0 %v64
    %656 = vmatprep.subr.mxu0 0.0
    %657 = vmatpush1.msra.mxu0 %v65
    %658 = vmatprep.subr.mxu0 0.0
    %659 = vmatpush1.msra.mxu0 %v66
    %660 = vmatprep.subr.mxu0 0.0
    %661 = vmatpush1.msra.mxu0 %v67
    %662 = vmatprep.subr.mxu0 0.0
    %663 = vmatpush1.msra.mxu0 %v68
    %664 = vmatprep.subr.mxu0 0.0
    %665 = vmatpush1.msra.mxu0 %v69
    %666 = vmatprep.subr.mxu0 0.0
    %667 = vmatpush1.msra.mxu0 %v70
    %668 = vmatprep.subr.mxu0 0.0
    %669 = vmatpush1.msra.mxu0 %v71
    %670 = vmatprep.subr.mxu0 0.0
    %671 = vmatpush1.msra.mxu0 %v72
    %672 = vmatprep.subr.mxu0 0.0
    %673 = vmatpush1.msra.mxu0 %v73
    %674 = vmatprep.subr.mxu0 0.0
    %675 = vmatpush1.msra.mxu0 %v74
    %676 = vmatprep.subr.mxu0 0.0
    %677 = vmatpush1.msra.mxu0 %v75
    %678 = vmatprep.subr.mxu0 0.0
    %679 = vmatpush1.msra.mxu0 %v76
    %680 = vmatprep.subr.mxu0 0.0
    %681 = vmatpush1.msra.mxu0 %v77
    %682 = vmatprep.subr.mxu0 0.0
    %683 = vmatpush1.msra.mxu0 %v78
    %684 = vmatprep.subr.mxu0 0.0
    %685 = vmatpush1.msra.mxu0 %v79
    %686 = vmatprep.subr.mxu0 0.0
    %687 = vmatpush1.msra.mxu0 %v80
    %688 = vmatprep.subr.mxu0 0.0
    %689 = vmatpush1.msra.mxu0 %v81
    %690 = vmatprep.subr.mxu0 0.0
    %691 = vmatpush1.msra.mxu0 %v82
    %692 = vmatprep.subr.mxu0 0.0
    %693 = vmatpush1.msra.mxu0 %v83
    %694 = vmatprep.subr.mxu0 0.0
    %695 = vmatpush1.msra.mxu0 %v84
    %696 = vmatprep.subr.mxu0 0.0
    %697 = vmatpush1.msra.mxu0 %v85
    %698 = vmatprep.mubr.f32.mxu0 %v444
    %699 = vmatmul.mubr.f32.gmra.mrb[0].mxu0 %v442
    %v700 = vpop.f32.mrb[0].mxu0
    %v701 = vadd.f32 %v631, %v700
    %v702 = vpop.f32.mrb[0].mxu0
    %703 = vdwg.mxu0
    %704 = vmatprep.subr.mxu0 0.0
    %705 = vmatpush1.msra.mxu0 %v86
    %706 = vmatprep.subr.mxu0 0.0
    %707 = vmatpush1.msra.mxu0 %v87
    %708 = vmatprep.subr.mxu0 0.0
    %709 = vmatpush1.msra.mxu0 %v88
    %710 = vmatprep.subr.mxu0 0.0
    %711 = vmatpush1.msra.mxu0 %v89
    %712 = vmatprep.subr.mxu0 0.0
    %713 = vmatpush1.msra.mxu0 %v90
    %714 = vmatprep.subr.mxu0 0.0
    %715 = vmatpush1.msra.mxu0 %v91
    %716 = vmatprep.subr.mxu0 0.0
    %717 = vmatpush1.msra.mxu0 %v92
    %718 = vmatprep.subr.mxu0 0.0
    %719 = vmatpush1.msra.mxu0 %v93
    %720 = vmatprep.subr.mxu0 0.0
    %721 = vmatpush1.msra.mxu0 %v94
    %722 = vmatprep.subr.mxu0 0.0
    %723 = vmatpush1.msra.mxu0 %v95
    %724 = vmatprep.subr.mxu0 0.0
    %725 = vmatpush1.msra.mxu0 %v96
    %726 = vmatprep.subr.mxu0 0.0
    %727 = vmatpush1.msra.mxu0 %v97
    %728 = vmatprep.subr.mxu0 0.0
    %729 = vmatpush1.msra.mxu0 %v98
    %730 = vmatprep.subr.mxu0 0.0
    %731 = vmatpush1.msra.mxu0 %v99
    %732 = vmatprep.subr.mxu0 0.0
    %733 = vmatpush1.msra.mxu0 %v100
    %734 = vmatprep.subr.mxu0 0.0
    %735 = vmatpush1.msra.mxu0 %v101
    %736 = vmatprep.subr.mxu0 0.0
    %737 = vmatpush1.msra.mxu0 %v102
    %738 = vmatprep.subr.mxu0 0.0
    %739 = vmatpush1.msra.mxu0 %v103
    %740 = vmatprep.subr.mxu0 0.0
    %741 = vmatpush1.msra.mxu0 %v104
    %742 = vmatprep.subr.mxu0 0.0
    %743 = vmatpush1.msra.mxu0 %v105
    %744 = vmatprep.subr.mxu0 0.0
    %745 = vmatpush1.msra.mxu0 %v106
    %746 = vmatprep.subr.mxu0 0.0
    %747 = vmatpush1.msra.mxu0 %v107
    %748 = vmatprep.subr.mxu0 0.0
    %749 = vmatpush1.msra.mxu0 %v108
    %750 = vmatprep.subr.mxu0 0.0
    %751 = vmatpush1.msra.mxu0 %v109
    %752 = vmatprep.subr.mxu0 0.0
    %753 = vmatpush1.msra.mxu0 %v110
    %754 = vmatprep.subr.mxu0 0.0
    %755 = vmatpush1.msra.mxu0 %v111
    %756 = vmatprep.subr.mxu0 0.0
    %757 = vmatpush1.msra.mxu0 %v112
    %758 = vmatprep.subr.mxu0 0.0
    %759 = vmatpush1.msra.mxu0 %v113
    %760 = vmatprep.subr.mxu0 0.0
    %761 = vmatpush1.msra.mxu0 %v114
    %762 = vmatprep.subr.mxu0 0.0
    %763 = vmatpush1.msra.mxu0 %v115
    %764 = vmatprep.subr.mxu0 0.0
    %765 = vmatpush1.msra.mxu0 %v116
    %766 = vmatprep.subr.mxu0 0.0
    %767 = vmatpush1.msra.mxu0 %v117
    %768 = vmatprep.mubr.f32.mxu0 %v460
    %769 = vmatmul.mubr.f32.gmra.mrb[0].mxu0 %v452
    %v770 = vpop.f32.mrb[0].mxu0
    %v771 = vadd.f32 %v701, %v770
    %v772 = vpop.f32.mrb[0].mxu0
    %773 = vdwg.mxu0
    %774 = vmatprep.subr.mxu0 0.0
    %775 = vmatpush1.msra.mxu0 %v118
    %776 = vmatprep.subr.mxu0 0.0
    %777 = vmatpush1.msra.mxu0 %v119
    %778 = vmatprep.subr.mxu0 0.0
    %779 = vmatpush1.msra.mxu0 %v120
    %780 = vmatprep.subr.mxu0 0.0
    %781 = vmatpush1.msra.mxu0 %v121
    %782 = vmatprep.subr.mxu0 0.0
    %783 = vmatpush1.msra.mxu0 %v122
    %784 = vmatprep.subr.mxu0 0.0
    %785 = vmatpush1.msra.mxu0 %v123
    %786 = vmatprep.subr.mxu0 0.0
    %787 = vmatpush1.msra.mxu0 %v124
    %788 = vmatprep.subr.mxu0 0.0
    %789 = vmatpush1.msra.mxu0 %v125
    %790 = vmatprep.subr.mxu0 0.0
    %791 = vmatpush1.msra.mxu0 %v126
    %792 = vmatprep.subr.mxu0 0.0
    %793 = vmatpush1.msra.mxu0 %v127
    %794 = vmatprep.subr.mxu0 0.0
    %795 = vmatpush1.msra.mxu0 %v128
    %796 = vmatprep.subr.mxu0 0.0
    %797 = vmatpush1.msra.mxu0 %v129
    %798 = vmatprep.subr.mxu0 0.0
    %799 = vmatpush1.msra.mxu0 %v130
    %800 = vmatprep.subr.mxu0 0.0
    %801 = vmatpush1.msra.mxu0 %v131
    %802 = vmatprep.subr.mxu0 0.0
    %803 = vmatpush1.msra.mxu0 %v132
    %804 = vmatprep.subr.mxu0 0.0
    %805 = vmatpush1.msra.mxu0 %v133
    %806 = vmatprep.subr.mxu0 0.0
    %807 = vmatpush1.msra.mxu0 %v134
    %808 = vmatprep.subr.mxu0 0.0
    %809 = vmatpush1.msra.mxu0 %v135
    %810 = vmatprep.subr.mxu0 0.0
    %811 = vmatpush1.msra.mxu0 %v136
    %812 = vmatprep.subr.mxu0 0.0
    %813 = vmatpush1.msra.mxu0 %v137
    %814 = vmatprep.subr.mxu0 0.0
    %815 = vmatpush1.msra.mxu0 %v138
    %816 = vmatprep.subr.mxu0 0.0
    %817 = vmatpush1.msra.mxu0 %v139
    %818 = vmatprep.subr.mxu0 0.0
    %819 = vmatpush1.msra.mxu0 %v140
    %820 = vmatprep.subr.mxu0 0.0
    %821 = vmatpush1.msra.mxu0 %v141
    %822 = vmatprep.subr.mxu0 0.0
    %823 = vmatpush1.msra.mxu0 %v142
    %824 = vmatprep.subr.mxu0 0.0
    %825 = vmatpush1.msra.mxu0 %v143
    %826 = vmatprep.subr.mxu0 0.0
    %827 = vmatpush1.msra.mxu0 %v144
    %828 = vmatprep.subr.mxu0 0.0
    %829 = vmatpush1.msra.mxu0 %v145
    %830 = vmatprep.subr.mxu0 0.0
    %831 = vmatpush1.msra.mxu0 %v146
    %832 = vmatprep.subr.mxu0 0.0
    %833 = vmatpush1.msra.mxu0 %v147
    %834 = vmatprep.subr.mxu0 0.0
    %835 = vmatpush1.msra.mxu0 %v148
    %836 = vmatprep.subr.mxu0 0.0
    %837 = vmatpush1.msra.mxu0 %v149
    %838 = vmatprep.mubr.f32.mxu0 %v461
    %839 = vmatmul.mubr.f32.gmra.mrb[0].mxu0 %v459
    %v840 = vpop.f32.mrb[0].mxu0
    %v841 = vadd.f32 %v771, %v840
    %v842 = vpop.f32.mrb[0].mxu0
    %843 = vdwg.mxu0
    %844 = vmatprep.subr.mxu0 0.0
    %845 = vmatpush1.msra.mxu0 %v150
    %846 = vmatprep.subr.mxu0 0.0
    %847 = vmatpush1.msra.mxu0 %v151
    %848 = vmatprep.subr.mxu0 0.0
    %849 = vmatpush1.msra.mxu0 %v152
    %850 = vmatprep.subr.mxu0 0.0
    %851 = vmatpush1.msra.mxu0 %v153
    %852 = vmatprep.subr.mxu0 0.0
    %853 = vmatpush1.msra.mxu0 %v154
    %854 = vmatprep.subr.mxu0 0.0
    %855 = vmatpush1.msra.mxu0 %v155
    %856 = vmatprep.subr.mxu0 0.0
    %857 = vmatpush1.msra.mxu0 %v156
    %858 = vmatprep.subr.mxu0 0.0
    %859 = vmatpush1.msra.mxu0 %v157
    %860 = vmatprep.subr.mxu0 0.0
    %861 = vmatpush1.msra.mxu0 %v158
    %862 = vmatprep.subr.mxu0 0.0
    %863 = vmatpush1.msra.mxu0 %v159
    %864 = vmatprep.subr.mxu0 0.0
    %865 = vmatpush1.msra.mxu0 %v160
    %866 = vmatprep.subr.mxu0 0.0
    %867 = vmatpush1.msra.mxu0 %v161
    %868 = vmatprep.subr.mxu0 0.0
    %869 = vmatpush1.msra.mxu0 %v162
    %870 = vmatprep.subr.mxu0 0.0
    %871 = vmatpush1.msra.mxu0 %v163
    %872 = vmatprep.subr.mxu0 0.0
    %873 = vmatpush1.msra.mxu0 %v164
    %874 = vmatprep.subr.mxu0 0.0
    %875 = vmatpush1.msra.mxu0 %v165
    %876 = vmatprep.subr.mxu0 0.0
    %877 = vmatpush1.msra.mxu0 %v166
    %878 = vmatprep.subr.mxu0 0.0
    %879 = vmatpush1.msra.mxu0 %v167
    %880 = vmatprep.subr.mxu0 0.0
    %881 = vmatpush1.msra.mxu0 %v168
    %882 = vmatprep.subr.mxu0 0.0
    %883 = vmatpush1.msra.mxu0 %v169
    %884 = vmatprep.subr.mxu0 0.0
    %885 = vmatpush1.msra.mxu0 %v170
    %886 = vmatprep.subr.mxu0 0.0
    %887 = vmatpush1.msra.mxu0 %v171
    %888 = vmatprep.subr.mxu0 0.0
    %889 = vmatpush1.msra.mxu0 %v172
    %890 = vmatprep.subr.mxu0 0.0
    %891 = vmatpush1.msra.mxu0 %v173
    %892 = vmatprep.subr.mxu0 0.0
    %893 = vmatpush1.msra.mxu0 %v174
    %894 = vmatprep.subr.mxu0 0.0
    %895 = vmatpush1.msra.mxu0 %v175
    %896 = vmatprep.subr.mxu0 0.0
    %897 = vmatpush1.msra.mxu0 %v176
    %898 = vmatprep.subr.mxu0 0.0
    %899 = vmatpush1.msra.mxu0 %v177
    %900 = vmatprep.subr.mxu0 0.0
    %901 = vmatpush1.msra.mxu0 %v178
    %902 = vmatprep.subr.mxu0 0.0
    %903 = vmatpush1.msra.mxu0 %v179
    %904 = vmatprep.subr.mxu0 0.0
    %905 = vmatpush1.msra.mxu0 %v180
    %906 = vmatprep.subr.mxu0 0.0
    %907 = vmatpush1.msra.mxu0 %v181
    %908 = vmatprep.mubr.f32.mxu0 %v477
    %909 = vmatmul.mubr.f32.gmra.mrb[0].mxu0 %v469
    %v910 = vpop.f32.mrb[0].mxu0
    %v911 = vadd.f32 %v841, %v910
    %v912 = vpop.f32.mrb[0].mxu0
    %913 = vdwg.mxu0
    %914 = vmatprep.subr.mxu0 0.0
    %915 = vmatpush1.msra.mxu0 %v182
    %916 = vmatprep.subr.mxu0 0.0
    %917 = vmatpush1.msra.mxu0 %v183
    %918 = vmatprep.subr.mxu0 0.0
    %919 = vmatpush1.msra.mxu0 %v184
    %920 = vmatprep.subr.mxu0 0.0
    %921 = vmatpush1.msra.mxu0 %v185
    %922 = vmatprep.subr.mxu0 0.0
    %923 = vmatpush1.msra.mxu0 %v186
    %924 = vmatprep.subr.mxu0 0.0
    %925 = vmatpush1.msra.mxu0 %v187
    %926 = vmatprep.subr.mxu0 0.0
    %927 = vmatpush1.msra.mxu0 %v188
    %928 = vmatprep.subr.mxu0 0.0
    %929 = vmatpush1.msra.mxu0 %v189
    %930 = vmatprep.subr.mxu0 0.0
    %931 = vmatpush1.msra.mxu0 %v190
    %932 = vmatprep.subr.mxu0 0.0
    %933 = vmatpush1.msra.mxu0 %v191
    %934 = vmatprep.subr.mxu0 0.0
    %935 = vmatpush1.msra.mxu0 %v192
    %936 = vmatprep.subr.mxu0 0.0
    %937 = vmatpush1.msra.mxu0 %v193
    %938 = vmatprep.subr.mxu0 0.0
    %939 = vmatpush1.msra.mxu0 %v194
    %940 = vmatprep.subr.mxu0 0.0
    %941 = vmatpush1.msra.mxu0 %v195
    %942 = vmatprep.subr.mxu0 0.0
    %943 = vmatpush1.msra.mxu0 %v196
    %944 = vmatprep.subr.mxu0 0.0
    %945 = vmatpush1.msra.mxu0 %v197
    %946 = vmatprep.subr.mxu0 0.0
    %947 = vmatpush1.msra.mxu0 %v198
    %948 = vmatprep.subr.mxu0 0.0
    %949 = vmatpush1.msra.mxu0 %v199
    %950 = vmatprep.subr.mxu0 0.0
    %951 = vmatpush1.msra.mxu0 %v200
    %952 = vmatprep.subr.mxu0 0.0
    %953 = vmatpush1.msra.mxu0 %v201
    %954 = vmatprep.subr.mxu0 0.0
    %955 = vmatpush1.msra.mxu0 %v202
    %956 = vmatprep.subr.mxu0 0.0
    %957 = vmatpush1.msra.mxu0 %v203
    %958 = vmatprep.subr.mxu0 0.0
    %959 = vmatpush1.msra.mxu0 %v204
    %960 = vmatprep.subr.mxu0 0.0
    %961 = vmatpush1.msra.mxu0 %v205
    %962 = vmatprep.subr.mxu0 0.0
    %963 = vmatpush1.msra.mxu0 %v206
    %964 = vmatprep.subr.mxu0 0.0
    %965 = vmatpush1.msra.mxu0 %v207
    %966 = vmatprep.subr.mxu0 0.0
    %967 = vmatpush1.msra.mxu0 %v208
    %968 = vmatprep.subr.mxu0 0.0
    %969 = vmatpush1.msra.mxu0 %v209
    %970 = vmatprep.subr.mxu0 0.0
    %971 = vmatpush1.msra.mxu0 %v210
    %972 = vmatprep.subr.mxu0 0.0
    %973 = vmatpush1.msra.mxu0 %v211
    %974 = vmatprep.subr.mxu0 0.0
    %975 = vmatpush1.msra.mxu0 %v212
    %976 = vmatprep.subr.mxu0 0.0
    %977 = vmatpush1.msra.mxu0 %v213
    %978 = vmatprep.mubr.f32.mxu0 %v478
    %979 = vmatmul.mubr.f32.gmra.mrb[0].mxu0 %v476
    %v980 = vpop.f32.mrb[0].mxu0
    %v981 = vadd.f32 %v911, %v980
    %v982 = vpop.f32.mrb[0].mxu0
    %983 = vdwg.mxu0
    %984 = vmatprep.subr.mxu0 0.0
    %985 = vmatpush1.msra.mxu0 %v214
    %986 = vmatprep.subr.mxu0 0.0
    %987 = vmatpush1.msra.mxu0 %v215
    %988 = vmatprep.subr.mxu0 0.0
    %989 = vmatpush1.msra.mxu0 %v216
    %990 = vmatprep.subr.mxu0 0.0
    %991 = vmatpush1.msra.mxu0 %v217
    %992 = vmatprep.subr.mxu0 0.0
    %993 = vmatpush1.msra.mxu0 %v218
    %994 = vmatprep.subr.mxu0 0.0
    %995 = vmatpush1.msra.mxu0 %v219
    %996 = vmatprep.subr.mxu0 0.0
    %997 = vmatpush1.msra.mxu0 %v220
    %998 = vmatprep.subr.mxu0 0.0
    %999 = vmatpush1.msra.mxu0 %v221
    %1000 = vmatprep.subr.mxu0 0.0
    %1001 = vmatpush1.msra.mxu0 %v222
    %1002 = vmatprep.subr.mxu0 0.0
    %1003 = vmatpush1.msra.mxu0 %v223
    %1004 = vmatprep.subr.mxu0 0.0
    %1005 = vmatpush1.msra.mxu0 %v224
    %1006 = vmatprep.subr.mxu0 0.0
    %1007 = vmatpush1.msra.mxu0 %v225
    %1008 = vmatprep.subr.mxu0 0.0
    %1009 = vmatpush1.msra.mxu0 %v226
    %1010 = vmatprep.subr.mxu0 0.0
    %1011 = vmatpush1.msra.mxu0 %v227
    %1012 = vmatprep.subr.mxu0 0.0
    %1013 = vmatpush1.msra.mxu0 %v228
    %1014 = vmatprep.subr.mxu0 0.0
    %1015 = vmatpush1.msra.mxu0 %v229
    %1016 = vmatprep.subr.mxu0 0.0
    %1017 = vmatpush1.msra.mxu0 %v230
    %1018 = vmatprep.subr.mxu0 0.0
    %1019 = vmatpush1.msra.mxu0 %v231
    %1020 = vmatprep.subr.mxu0 0.0
    %1021 = vmatpush1.msra.mxu0 %v232
    %1022 = vmatprep.subr.mxu0 0.0
    %1023 = vmatpush1.msra.mxu0 %v233
    %1024 = vmatprep.subr.mxu0 0.0
    %1025 = vmatpush1.msra.mxu0 %v234
    %1026 = vmatprep.subr.mxu0 0.0
    %1027 = vmatpush1.msra.mxu0 %v235
    %1028 = vmatprep.subr.mxu0 0.0
    %1029 = vmatpush1.msra.mxu0 %v236
    %1030 = vmatprep.subr.mxu0 0.0
    %1031 = vmatpush1.msra.mxu0 %v237
    %1032 = vmatprep.subr.mxu0 0.0
    %1033 = vmatpush1.msra.mxu0 %v238
    %1034 = vmatprep.subr.mxu0 0.0
    %1035 = vmatpush1.msra.mxu0 %v239
    %1036 = vmatprep.subr.mxu0 0.0
    %1037 = vmatpush1.msra.mxu0 %v240
    %1038 = vmatprep.subr.mxu0 0.0
    %1039 = vmatpush1.msra.mxu0 %v241
    %1040 = vmatprep.subr.mxu0 0.0
    %1041 = vmatpush1.msra.mxu0 %v242
    %1042 = vmatprep.subr.mxu0 0.0
    %1043 = vmatpush1.msra.mxu0 %v243
    %1044 = vmatprep.subr.mxu0 0.0
    %1045 = vmatpush1.msra.mxu0 %v244
    %1046 = vmatprep.subr.mxu0 0.0
    %1047 = vmatpush1.msra.mxu0 %v245
    %1048 = vmatprep.mubr.f32.mxu0 %v494
    %1049 = vmatmul.mubr.f32.gmra.mrb[0].mxu0 %v486
    %v1050 = vpop.f32.mrb[0].mxu0
    %v1051 = vadd.f32 %v981, %v1050
    %v1052 = vpop.f32.mrb[0].mxu0
    %1053 = vdwg.mxu0
    %1054 = vmatprep.subr.mxu0 0.0
    %1055 = vmatpush1.msra.mxu0 %v246
    %1056 = vmatprep.subr.mxu0 0.0
    %1057 = vmatpush1.msra.mxu0 %v247
    %1058 = vmatprep.subr.mxu0 0.0
    %1059 = vmatpush1.msra.mxu0 %v248
    %1060 = vmatprep.subr.mxu0 0.0
    %1061 = vmatpush1.msra.mxu0 %v249
    %1062 = vmatprep.subr.mxu0 0.0
    %1063 = vmatpush1.msra.mxu0 %v250
    %1064 = vmatprep.subr.mxu0 0.0
    %1065 = vmatpush1.msra.mxu0 %v251
    %1066 = vmatprep.subr.mxu0 0.0
    %1067 = vmatpush1.msra.mxu0 %v252
    %1068 = vmatprep.subr.mxu0 0.0
    %1069 = vmatpush1.msra.mxu0 %v253
    %1070 = vmatprep.subr.mxu0 0.0
    %1071 = vmatpush1.msra.mxu0 %v254
    %1072 = vmatprep.subr.mxu0 0.0
    %1073 = vmatpush1.msra.mxu0 %v255
    %1074 = vmatprep.subr.mxu0 0.0
    %1075 = vmatpush1.msra.mxu0 %v256
    %1076 = vmatprep.subr.mxu0 0.0
    %1077 = vmatpush1.msra.mxu0 %v257
    %1078 = vmatprep.subr.mxu0 0.0
    %1079 = vmatpush1.msra.mxu0 %v258
    %1080 = vmatprep.subr.mxu0 0.0
    %1081 = vmatpush1.msra.mxu0 %v259
    %1082 = vmatprep.subr.mxu0 0.0
    %1083 = vmatpush1.msra.mxu0 %v260
    %1084 = vmatprep.subr.mxu0 0.0
    %1085 = vmatpush1.msra.mxu0 %v261
    %1086 = vmatprep.subr.mxu0 0.0
    %1087 = vmatpush1.msra.mxu0 %v262
    %1088 = vmatprep.subr.mxu0 0.0
    %1089 = vmatpush1.msra.mxu0 %v263
    %1090 = vmatprep.subr.mxu0 0.0
    %1091 = vmatpush1.msra.mxu0 %v264
    %1092 = vmatprep.subr.mxu0 0.0
    %1093 = vmatpush1.msra.mxu0 %v265
    %1094 = vmatprep.subr.mxu0 0.0
    %1095 = vmatpush1.msra.mxu0 %v266
    %1096 = vmatprep.subr.mxu0 0.0
    %1097 = vmatpush1.msra.mxu0 %v267
    %1098 = vmatprep.subr.mxu0 0.0
    %1099 = vmatpush1.msra.mxu0 %v268
    %1100 = vmatprep.subr.mxu0 0.0
    %1101 = vmatpush1.msra.mxu0 %v269
    %1102 = vmatprep.subr.mxu0 0.0
    %1103 = vmatpush1.msra.mxu0 %v270
    %1104 = vmatprep.subr.mxu0 0.0
    %1105 = vmatpush1.msra.mxu0 %v271
    %1106 = vmatprep.subr.mxu0 0.0
    %1107 = vmatpush1.msra.mxu0 %v272
    %1108 = vmatprep.subr.mxu0 0.0
    %1109 = vmatpush1.msra.mxu0 %v273
    %1110 = vmatprep.subr.mxu0 0.0
    %1111 = vmatpush1.msra.mxu0 %v274
    %1112 = vmatprep.subr.mxu0 0.0
    %1113 = vmatpush1.msra.mxu0 %v275
    %1114 = vmatprep.subr.mxu0 0.0
    %1115 = vmatpush1.msra.mxu0 %v276
    %1116 = vmatprep.subr.mxu0 0.0
    %1117 = vmatpush1.msra.mxu0 %v277
    %1118 = vmatprep.mubr.f32.mxu0 %v495
    %1119 = vmatmul.mubr.f32.gmra.mrb[0].mxu0 %v493
    %v1120 = vpop.f32.mrb[0].mxu0
    %v1121 = vadd.f32 %v1051, %v1120
    %v1122 = vpop.f32.mrb[0].mxu0
    %1123 = vdwg.mxu0
    %1124 = vmatprep.subr.mxu0 0.0
    %1125 = vmatpush1.msra.mxu0 %v278
    %1126 = vmatprep.subr.mxu0 0.0
    %1127 = vmatpush1.msra.mxu0 %v279
    %1128 = vmatprep.subr.mxu0 0.0
    %1129 = vmatpush1.msra.mxu0 %v280
    %1130 = vmatprep.subr.mxu0 0.0
    %1131 = vmatpush1.msra.mxu0 %v281
    %1132 = vmatprep.subr.mxu0 0.0
    %1133 = vmatpush1.msra.mxu0 %v282
    %1134 = vmatprep.subr.mxu0 0.0
    %1135 = vmatpush1.msra.mxu0 %v283
    %1136 = vmatprep.subr.mxu0 0.0
    %1137 = vmatpush1.msra.mxu0 %v284
    %1138 = vmatprep.subr.mxu0 0.0
    %1139 = vmatpush1.msra.mxu0 %v285
    %1140 = vmatprep.subr.mxu0 0.0
    %1141 = vmatpush1.msra.mxu0 %v286
    %1142 = vmatprep.subr.mxu0 0.0
    %1143 = vmatpush1.msra.mxu0 %v287
    %1144 = vmatprep.subr.mxu0 0.0
    %1145 = vmatpush1.msra.mxu0 %v288
    %1146 = vmatprep.subr.mxu0 0.0
    %1147 = vmatpush1.msra.mxu0 %v289
    %1148 = vmatprep.subr.mxu0 0.0
    %1149 = vmatpush1.msra.mxu0 %v290
    %1150 = vmatprep.subr.mxu0 0.0
    %1151 = vmatpush1.msra.mxu0 %v291
    %1152 = vmatprep.subr.mxu0 0.0
    %1153 = vmatpush1.msra.mxu0 %v292
    %1154 = vmatprep.subr.mxu0 0.0
    %1155 = vmatpush1.msra.mxu0 %v293
    %1156 = vmatprep.subr.mxu0 0.0
    %1157 = vmatpush1.msra.mxu0 %v294
    %1158 = vmatprep.subr.mxu0 0.0
    %1159 = vmatpush1.msra.mxu0 %v295
    %1160 = vmatprep.subr.mxu0 0.0
    %1161 = vmatpush1.msra.mxu0 %v296
    %1162 = vmatprep.subr.mxu0 0.0
    %1163 = vmatpush1.msra.mxu0 %v297
    %1164 = vmatprep.subr.mxu0 0.0
    %1165 = vmatpush1.msra.mxu0 %v298
    %1166 = vmatprep.subr.mxu0 0.0
    %1167 = vmatpush1.msra.mxu0 %v299
    %1168 = vmatprep.subr.mxu0 0.0
    %1169 = vmatpush1.msra.mxu0 %v300
    %1170 = vmatprep.subr.mxu0 0.0
    %1171 = vmatpush1.msra.mxu0 %v301
    %1172 = vmatprep.subr.mxu0 0.0
    %1173 = vmatpush1.msra.mxu0 %v302
    %1174 = vmatprep.subr.mxu0 0.0
    %1175 = vmatpush1.msra.mxu0 %v303
    %1176 = vmatprep.subr.mxu0 0.0
    %1177 = vmatpush1.msra.mxu0 %v304
    %1178 = vmatprep.subr.mxu0 0.0
    %1179 = vmatpush1.msra.mxu0 %v305
    %1180 = vmatprep.subr.mxu0 0.0
    %1181 = vmatpush1.msra.mxu0 %v306
    %1182 = vmatprep.subr.mxu0 0.0
    %1183 = vmatpush1.msra.mxu0 %v307
    %1184 = vmatprep.subr.mxu0 0.0
    %1185 = vmatpush1.msra.mxu0 %v308
    %1186 = vmatprep.subr.mxu0 0.0
    %1187 = vmatpush1.msra.mxu0 %v309
    %1188 = vmatprep.mubr.f32.mxu0 %v511
    %1189 = vmatmul.mubr.f32.gmra.mrb[0].mxu0 %v503
    %v1190 = vpop.f32.mrb[0].mxu0
    %v1191 = vadd.f32 %v1121, %v1190
    %v1192 = vpop.f32.mrb[0].mxu0
    %1193 = vdwg.mxu0
    %1194 = vmatprep.subr.mxu0 0.0
    %1195 = vmatpush1.msra.mxu0 %v310
    %1196 = vmatprep.subr.mxu0 0.0
    %1197 = vmatpush1.msra.mxu0 %v311
    %1198 = vmatprep.subr.mxu0 0.0
    %1199 = vmatpush1.msra.mxu0 %v312
    %1200 = vmatprep.subr.mxu0 0.0
    %1201 = vmatpush1.msra.mxu0 %v313
    %1202 = vmatprep.subr.mxu0 0.0
    %1203 = vmatpush1.msra.mxu0 %v314
    %1204 = vmatprep.subr.mxu0 0.0
    %1205 = vmatpush1.msra.mxu0 %v315
    %1206 = vmatprep.subr.mxu0 0.0
    %1207 = vmatpush1.msra.mxu0 %v316
    %1208 = vmatprep.subr.mxu0 0.0
    %1209 = vmatpush1.msra.mxu0 %v317
    %1210 = vmatprep.subr.mxu0 0.0
    %1211 = vmatpush1.msra.mxu0 %v318
    %1212 = vmatprep.subr.mxu0 0.0
    %1213 = vmatpush1.msra.mxu0 %v319
    %1214 = vmatprep.subr.mxu0 0.0
    %1215 = vmatpush1.msra.mxu0 %v320
    %1216 = vmatprep.subr.mxu0 0.0
    %1217 = vmatpush1.msra.mxu0 %v321
    %1218 = vmatprep.subr.mxu0 0.0
    %1219 = vmatpush1.msra.mxu0 %v322
    %1220 = vmatprep.subr.mxu0 0.0
    %1221 = vmatpush1.msra.mxu0 %v323
    %1222 = vmatprep.subr.mxu0 0.0
    %1223 = vmatpush1.msra.mxu0 %v324
    %1224 = vmatprep.subr.mxu0 0.0
    %1225 = vmatpush1.msra.mxu0 %v325
    %1226 = vmatprep.subr.mxu0 0.0
    %1227 = vmatpush1.msra.mxu0 %v326
    %1228 = vmatprep.subr.mxu0 0.0
    %1229 = vmatpush1.msra.mxu0 %v327
    %1230 = vmatprep.subr.mxu0 0.0
    %1231 = vmatpush1.msra.mxu0 %v328
    %1232 = vmatprep.subr.mxu0 0.0
    %1233 = vmatpush1.msra.mxu0 %v329
    %1234 = vmatprep.subr.mxu0 0.0
    %1235 = vmatpush1.msra.mxu0 %v330
    %1236 = vmatprep.subr.mxu0 0.0
    %1237 = vmatpush1.msra.mxu0 %v331
    %1238 = vmatprep.subr.mxu0 0.0
    %1239 = vmatpush1.msra.mxu0 %v332
    %1240 = vmatprep.subr.mxu0 0.0
    %1241 = vmatpush1.msra.mxu0 %v333
    %1242 = vmatprep.subr.mxu0 0.0
    %1243 = vmatpush1.msra.mxu0 %v334
    %1244 = vmatprep.subr.mxu0 0.0
    %1245 = vmatpush1.msra.mxu0 %v335
    %1246 = vmatprep.subr.mxu0 0.0
    %1247 = vmatpush1.msra.mxu0 %v336
    %1248 = vmatprep.subr.mxu0 0.0
    %1249 = vmatpush1.msra.mxu0 %v337
    %1250 = vmatprep.subr.mxu0 0.0
    %1251 = vmatpush1.msra.mxu0 %v338
    %1252 = vmatprep.subr.mxu0 0.0
    %1253 = vmatpush1.msra.mxu0 %v339
    %1254 = vmatprep.subr.mxu0 0.0
    %1255 = vmatpush1.msra.mxu0 %v340
    %1256 = vmatprep.subr.mxu0 0.0
    %1257 = vmatpush1.msra.mxu0 %v341
    %1258 = vmatprep.mubr.f32.mxu0 %v512
    %1259 = vmatmul.mubr.f32.gmra.mrb[0].mxu0 %v510
    %v1260 = vpop.f32.mrb[0].mxu0
    %v1261 = vadd.f32 %v1191, %v1260
    %v1262 = vpop.f32.mrb[0].mxu0
    %1263 = vdwg.mxu0
    %1264 = vmatprep.subr.mxu0 0.0
    %1265 = vmatpush1.msra.mxu0 %v342
    %1266 = vmatprep.subr.mxu0 0.0
    %1267 = vmatpush1.msra.mxu0 %v343
    %1268 = vmatprep.subr.mxu0 0.0
    %1269 = vmatpush1.msra.mxu0 %v344
    %1270 = vmatprep.subr.mxu0 0.0
    %1271 = vmatpush1.msra.mxu0 %v345
    %1272 = vmatprep.subr.mxu0 0.0
    %1273 = vmatpush1.msra.mxu0 %v346
    %1274 = vmatprep.subr.mxu0 0.0
    %1275 = vmatpush1.msra.mxu0 %v347
    %1276 = vmatprep.subr.mxu0 0.0
    %1277 = vmatpush1.msra.mxu0 %v348
    %1278 = vmatprep.subr.mxu0 0.0
    %1279 = vmatpush1.msra.mxu0 %v349
    %1280 = vmatprep.subr.mxu0 0.0
    %1281 = vmatpush1.msra.mxu0 %v350
    %1282 = vmatprep.subr.mxu0 0.0
    %1283 = vmatpush1.msra.mxu0 %v351
    %1284 = vmatprep.subr.mxu0 0.0
    %1285 = vmatpush1.msra.mxu0 %v352
    %1286 = vmatprep.subr.mxu0 0.0
    %1287 = vmatpush1.msra.mxu0 %v353
    %1288 = vmatprep.subr.mxu0 0.0
    %1289 = vmatpush1.msra.mxu0 %v354
    %1290 = vmatprep.subr.mxu0 0.0
    %1291 = vmatpush1.msra.mxu0 %v355
    %1292 = vmatprep.subr.mxu0 0.0
    %1293 = vmatpush1.msra.mxu0 %v356
    %1294 = vmatprep.subr.mxu0 0.0
    %1295 = vmatpush1.msra.mxu0 %v357
    %1296 = vmatprep.subr.mxu0 0.0
    %1297 = vmatpush1.msra.mxu0 %v358
    %1298 = vmatprep.subr.mxu0 0.0
    %1299 = vmatpush1.msra.mxu0 %v359
    %1300 = vmatprep.subr.mxu0 0.0
    %1301 = vmatpush1.msra.mxu0 %v360
    %1302 = vmatprep.subr.mxu0 0.0
    %1303 = vmatpush1.msra.mxu0 %v361
    %1304 = vmatprep.subr.mxu0 0.0
    %1305 = vmatpush1.msra.mxu0 %v362
    %1306 = vmatprep.subr.mxu0 0.0
    %1307 = vmatpush1.msra.mxu0 %v363
    %1308 = vmatprep.subr.mxu0 0.0
    %1309 = vmatpush1.msra.mxu0 %v364
    %1310 = vmatprep.subr.mxu0 0.0
    %1311 = vmatpush1.msra.mxu0 %v365
    %1312 = vmatprep.subr.mxu0 0.0
    %1313 = vmatpush1.msra.mxu0 %v366
    %1314 = vmatprep.subr.mxu0 0.0
    %1315 = vmatpush1.msra.mxu0 %v367
    %1316 = vmatprep.subr.mxu0 0.0
    %1317 = vmatpush1.msra.mxu0 %v368
    %1318 = vmatprep.subr.mxu0 0.0
    %1319 = vmatpush1.msra.mxu0 %v369
    %1320 = vmatprep.subr.mxu0 0.0
    %1321 = vmatpush1.msra.mxu0 %v370
    %1322 = vmatprep.subr.mxu0 0.0
    %1323 = vmatpush1.msra.mxu0 %v371
    %1324 = vmatprep.subr.mxu0 0.0
    %1325 = vmatpush1.msra.mxu0 %v372
    %1326 = vmatprep.subr.mxu0 0.0
    %1327 = vmatpush1.msra.mxu0 %v373
    %1328 = vmatprep.mubr.f32.mxu0 %v528
    %1329 = vmatmul.mubr.f32.gmra.mrb[0].mxu0 %v520
    %v1330 = vpop.f32.mrb[0].mxu0
    %v1331 = vadd.f32 %v1261, %v1330
    %v1332 = vpop.f32.mrb[0].mxu0
    %1333 = vdwg.mxu0
    %1334 = vmatprep.subr.mxu0 0.0
    %1335 = vmatpush1.msra.mxu0 %v374
    %1336 = vmatprep.subr.mxu0 0.0
    %1337 = vmatpush1.msra.mxu0 %v375
    %1338 = vmatprep.subr.mxu0 0.0
    %1339 = vmatpush1.msra.mxu0 %v376
    %1340 = vmatprep.subr.mxu0 0.0
    %1341 = vmatpush1.msra.mxu0 %v377
    %1342 = vmatprep.subr.mxu0 0.0
    %1343 = vmatpush1.msra.mxu0 %v378
    %1344 = vmatprep.subr.mxu0 0.0
    %1345 = vmatpush1.msra.mxu0 %v379
    %1346 = vmatprep.subr.mxu0 0.0
    %1347 = vmatpush1.msra.mxu0 %v380
    %1348 = vmatprep.subr.mxu0 0.0
    %1349 = vmatpush1.msra.mxu0 %v381
    %1350 = vmatprep.subr.mxu0 0.0
    %1351 = vmatpush1.msra.mxu0 %v382
    %1352 = vmatprep.subr.mxu0 0.0
    %1353 = vmatpush1.msra.mxu0 %v383
    %1354 = vmatprep.subr.mxu0 0.0
    %1355 = vmatpush1.msra.mxu0 %v384
    %1356 = vmatprep.subr.mxu0 0.0
    %1357 = vmatpush1.msra.mxu0 %v385
    %1358 = vmatprep.subr.mxu0 0.0
    %1359 = vmatpush1.msra.mxu0 %v386
    %1360 = vmatprep.subr.mxu0 0.0
    %1361 = vmatpush1.msra.mxu0 %v387
    %1362 = vmatprep.subr.mxu0 0.0
    %1363 = vmatpush1.msra.mxu0 %v388
    %1364 = vmatprep.subr.mxu0 0.0
    %1365 = vmatpush1.msra.mxu0 %v389
    %1366 = vmatprep.subr.mxu0 0.0
    %1367 = vmatpush1.msra.mxu0 %v390
    %1368 = vmatprep.subr.mxu0 0.0
    %1369 = vmatpush1.msra.mxu0 %v391
    %1370 = vmatprep.subr.mxu0 0.0
    %1371 = vmatpush1.msra.mxu0 %v392
    %1372 = vmatprep.subr.mxu0 0.0
    %1373 = vmatpush1.msra.mxu0 %v393
    %1374 = vmatprep.subr.mxu0 0.0
    %1375 = vmatpush1.msra.mxu0 %v394
    %1376 = vmatprep.subr.mxu0 0.0
    %1377 = vmatpush1.msra.mxu0 %v395
    %1378 = vmatprep.subr.mxu0 0.0
    %1379 = vmatpush1.msra.mxu0 %v396
    %1380 = vmatprep.subr.mxu0 0.0
    %1381 = vmatpush1.msra.mxu0 %v397
    %1382 = vmatprep.subr.mxu0 0.0
    %1383 = vmatpush1.msra.mxu0 %v398
    %1384 = vmatprep.subr.mxu0 0.0
    %1385 = vmatpush1.msra.mxu0 %v399
    %1386 = vmatprep.subr.mxu0 0.0
    %1387 = vmatpush1.msra.mxu0 %v400
    %1388 = vmatprep.subr.mxu0 0.0
    %1389 = vmatpush1.msra.mxu0 %v401
    %1390 = vmatprep.subr.mxu0 0.0
    %1391 = vmatpush1.msra.mxu0 %v402
    %1392 = vmatprep.subr.mxu0 0.0
    %1393 = vmatpush1.msra.mxu0 %v403
    %1394 = vmatprep.subr.mxu0 0.0
    %1395 = vmatpush1.msra.mxu0 %v404
    %1396 = vmatprep.subr.mxu0 0.0
    %1397 = vmatpush1.msra.mxu0 %v405
    %1398 = vmatprep.mubr.f32.mxu0 %v529
    %1399 = vmatmul.mubr.f32.gmra.mrb[0].mxu0 %v527
    %v1400 = vpop.f32.mrb[0].mxu0
    %v1401 = vadd.f32 %v1331, %v1400
    %v1402 = vpop.f32.mrb[0].mxu0
    %1403 = vdwg.mxu0
    %1404 = vmatprep.subr.mxu0 0.0
    %1405 = vmatpush1.msra.mxu0 %v406
    %1406 = vmatprep.subr.mxu0 0.0
    %1407 = vmatpush1.msra.mxu0 %v407
    %1408 = vmatprep.subr.mxu0 0.0
    %1409 = vmatpush1.msra.mxu0 %v408
    %1410 = vmatprep.subr.mxu0 0.0
    %1411 = vmatpush1.msra.mxu0 %v409
    %1412 = vmatprep.subr.mxu0 0.0
    %1413 = vmatpush1.msra.mxu0 %v410
    %1414 = vmatprep.subr.mxu0 0.0
    %1415 = vmatpush1.msra.mxu0 %v411
    %1416 = vmatprep.subr.mxu0 0.0
    %1417 = vmatpush1.msra.mxu0 %v412
    %1418 = vmatprep.subr.mxu0 0.0
    %1419 = vmatpush1.msra.mxu0 %v413
    %1420 = vmatprep.subr.mxu0 0.0
    %1421 = vmatpush1.msra.mxu0 0.0
    %1422 = vmatprep.subr.mxu0 0.0
    %1423 = vmatpush1.msra.mxu0 0.0
    %1424 = vmatprep.subr.mxu0 0.0
    %1425 = vmatpush1.msra.mxu0 0.0
    %1426 = vmatprep.subr.mxu0 0.0
    %1427 = vmatpush1.msra.mxu0 0.0
    %1428 = vmatprep.subr.mxu0 0.0
    %1429 = vmatpush1.msra.mxu0 0.0
    %1430 = vmatprep.subr.mxu0 0.0
    %1431 = vmatpush1.msra.mxu0 0.0
    %1432 = vmatprep.subr.mxu0 0.0
    %1433 = vmatpush1.msra.mxu0 0.0
    %1434 = vmatprep.subr.mxu0 0.0
    %1435 = vmatpush1.msra.mxu0 0.0
    %1436 = vmatprep.subr.mxu0 0.0
    %1437 = vmatpush1.msra.mxu0 0.0
    %1438 = vmatprep.subr.mxu0 0.0
    %1439 = vmatpush1.msra.mxu0 0.0
    %1440 = vmatprep.subr.mxu0 0.0
    %1441 = vmatpush1.msra.mxu0 0.0
    %1442 = vmatprep.subr.mxu0 0.0
    %1443 = vmatpush1.msra.mxu0 0.0
    %1444 = vmatprep.subr.mxu0 0.0
    %1445 = vmatpush1.msra.mxu0 0.0
    %1446 = vmatprep.subr.mxu0 0.0
    %1447 = vmatpush1.msra.mxu0 0.0
    %1448 = vmatprep.subr.mxu0 0.0
    %1449 = vmatpush1.msra.mxu0 0.0
    %1450 = vmatprep.subr.mxu0 0.0
    %1451 = vmatpush1.msra.mxu0 0.0
    %1452 = vmatprep.subr.mxu0 0.0
    %1453 = vmatpush1.msra.mxu0 0.0
    %1454 = vmatprep.subr.mxu0 0.0
    %1455 = vmatpush1.msra.mxu0 0.0
    %1456 = vmatprep.subr.mxu0 0.0
    %1457 = vmatpush1.msra.mxu0 0.0
    %1458 = vmatprep.subr.mxu0 0.0
    %1459 = vmatpush1.msra.mxu0 0.0
    %1460 = vmatprep.subr.mxu0 0.0
    %1461 = vmatpush1.msra.mxu0 0.0
    %1462 = vmatprep.subr.mxu0 0.0
    %1463 = vmatpush1.msra.mxu0 0.0
    %1464 = vmatprep.subr.mxu0 0.0
    %1465 = vmatpush1.msra.mxu0 0.0
    %1466 = vmatprep.subr.mxu0 0.0
    %1467 = vmatpush1.msra.mxu0 0.0
    %1468 = vmatprep.mubr.f32.mxu0 0.0
    %1469 = vmatmul.mubr.f32.gmra.mrb[0].mxu0 %v562
    %v1470 = vpop.f32.mrb[0].mxu0
    %v1471 = vadd.f32 %v1401, %v1470
    %v1472 = vpop.f32.mrb[0].mxu0
    %1473 = vdwg.mxu0
    %vm1474 = vcmask 500736
    %1475 = vst.msk [vmem:[#allocation2] sm:$0x3] %vm1474, %v1471
    // Predicated region
    $region14: #{cnn_femnist_forward.5} parent=1 // pred_check
      _
    $region15: #{cnn_femnist_forward.5} parent=1 // pred_check_branch
      %1477 = sbr.rel (0) target = $region17
    $region16: #{cnn_femnist_forward.5} parent=1 // pred_region
      %s1479 = ssub.s32 32, 32
      %1480 = vsyncadd [#allocation3], %s1479
      %s1482 = sshll.u32 [#allocation2], 4
      %s1483 = int_to_ptr.vmem [resolvable:$true] %s1482
      %1485 = dma.vmem_to_hbm [thread:$0]  %s1483, 32, %s3, [#allocation3]
    $region17: #{cnn_femnist_forward.5} parent=1 // pred_fallthru
      _
    // Predicated region
    $region18: #{cnn_femnist_forward.5} parent=1 // pred_check
      _
    $region19: #{cnn_femnist_forward.5} parent=1 // pred_check_branch
      %1487 = sbr.rel (0) target = $region21
    $region20: #{cnn_femnist_forward.5} parent=1 // pred_region
      %1488 = dma.done [#allocation3], 32
    $region21: #{cnn_femnist_forward.5} parent=1 // pred_fallthru
      _
    %1489 = vsyncpa [#allocation3], 1

</llo_original>
